<compile_context>
chip_gen: v6e
topology: v6e:2x2x1
jax: 0.10.0
libtpu: 0.0.40
codegen_flags: <defaults>
</compile_context>

<pallas_src>
import functools

import jax
import jax.numpy as jnp
import numpy as np
from jax.experimental import pallas as pl
from jax.experimental.pallas import tpu as pltpu


def gnn_kernel(a_in_ref, a_out_ref, h_ref,
               w_edge_ref, b_edge_ref,
               w_gin_ref, w_gout_ref, w_gh_ref, b_gate_ref,
               out_ref, *, n_nodes, hidden_size, num_steps):
    N, H = n_nodes, hidden_size
    BB = h_ref.shape[0]
    M = BB * N

    # Block-resident operands: loaded once, reused across all propagation steps.
    a_in = a_in_ref[...]                                    # (BB, N, N)
    a_out = a_out_ref[...]                                  # (BB, N, N)
    w_ein, w_eout = w_edge_ref[0], w_edge_ref[1]            # (H, H)
    b_ein, b_eout = b_edge_ref[0], b_edge_ref[1]            # (1, H)
    w_in_r, w_in_i, w_in_n = w_gin_ref[0], w_gin_ref[1], w_gin_ref[2]     # (H, H)
    w_out_r, w_out_i, w_out_n = w_gout_ref[0], w_gout_ref[1], w_gout_ref[2]
    w_h_r, w_h_i, w_h_n = w_gh_ref[0], w_gh_ref[1], w_gh_ref[2]
    b_r, b_i, b_n_in, b_n_h = (b_gate_ref[0], b_gate_ref[1],
                               b_gate_ref[2], b_gate_ref[3])              # (1, H)

    def mm(a, b):
        return jnp.dot(a, b, preferred_element_type=jnp.float32)

    # Flatten (batch, node) into the matmul M dimension (layout-preserving collapse).
    h2 = h_ref[...].reshape(M, H)

    for _ in range(num_steps):   # static unroll; steps share A / weights already in VMEM
        # Edge linears on the flattened node axis.
        eh_in = mm(h2, w_ein) + b_ein                       # (M, H)
        eh_out = mm(h2, w_eout) + b_eout                    # (M, H)

        # Per-graph adjacency aggregation (batched matmul on the MXU).
        in_in = jnp.einsum('bij,bjh->bih', a_in, eh_in.reshape(BB, N, H),
                           preferred_element_type=jnp.float32).reshape(M, H)
        in_out = jnp.einsum('bij,bjh->bih', a_out, eh_out.reshape(BB, N, H),
                            preferred_element_type=jnp.float32).reshape(M, H)

        # GRU gates: per-gate accumulating matmuls (no concat, no lane-offset slices).
        # b_iah / b_oah / b_ih / b_hh were folded into b_r / b_i / b_n_in / b_n_h.
        pre_r = mm(in_in, w_in_r) + mm(in_out, w_out_r) + mm(h2, w_h_r) + b_r
        pre_i = mm(in_in, w_in_i) + mm(in_out, w_out_i) + mm(h2, w_h_i) + b_i
        i_n = mm(in_in, w_in_n) + mm(in_out, w_out_n) + b_n_in
        h_n = mm(h2, w_h_n) + b_n_h

        resetgate = jax.nn.sigmoid(pre_r)
        inputgate = jax.nn.sigmoid(pre_i)
        newgate = jnp.tanh(i_n + resetgate * h_n)
        h2 = newgate + inputgate * (h2 - newgate)

    out_ref[...] = h2.reshape(BB, N, H).astype(out_ref.dtype)


def _prep_weights(params, H):
    """Pre-split / pre-fold all weights so the kernel never slices or concatenates."""
    w_ih_t = params["w_ih"].T                    # (2H, 3H)
    w_hh_t = params["w_hh"].T                    # (H, 3H)
    w_in_gates = w_ih_t[:H]                      # rows for the input_in half
    w_out_gates = w_ih_t[H:2 * H]                # rows for the input_out half

    def split3(w):
        return w[:, :H], w[:, H:2 * H], w[:, 2 * H:3 * H]

    w_in_r, w_in_i, w_in_n = split3(w_in_gates)
    w_out_r, w_out_i, w_out_n = split3(w_out_gates)
    w_h_r, w_h_i, w_h_n = split3(w_hh_t)

    w_edge = jnp.stack([params["w_edge_in"].T, params["w_edge_out"].T])       # (2,H,H)
    b_edge = jnp.stack([params["b_edge_in"], params["b_edge_out"]]).reshape(2, 1, H)

    w_gin = jnp.stack([w_in_r, w_in_i, w_in_n])                               # (3,H,H)
    w_gout = jnp.stack([w_out_r, w_out_i, w_out_n])                           # (3,H,H)
    w_gh = jnp.stack([w_h_r, w_h_i, w_h_n])                                   # (3,H,H)

    b_ih, b_hh = params["b_ih"], params["b_hh"]
    b_ih_r, b_ih_i, b_ih_n = b_ih[:H], b_ih[H:2 * H], b_ih[2 * H:]
    b_hh_r, b_hh_i, b_hh_n = b_hh[:H], b_hh[H:2 * H], b_hh[2 * H:]
    b_iah, b_oah = params["b_iah"], params["b_oah"]

    # Fold the constant adjacency biases through the gate weights:
    # (A@eh + b_iah) @ W == A@eh@W + b_iah@W   (exact algebraically).
    b_r = b_iah @ w_in_r + b_oah @ w_out_r + b_ih_r + b_hh_r
    b_i = b_iah @ w_in_i + b_oah @ w_out_i + b_ih_i + b_hh_i
    b_n_in = b_iah @ w_in_n + b_oah @ w_out_n + b_ih_n
    b_n_h = b_hh_n
    b_gate = jnp.stack([b_r, b_i, b_n_in, b_n_h]).reshape(4, 1, H)

    return w_edge, b_edge, w_gin, w_gout, w_gh, b_gate


def _pick_batch_block(B, N, H, target_rows=512, vmem_budget_bytes=8 * 1024 * 1024):
    """Pick #graphs per grid step: aim for ~512 flattened rows, capped by a VMEM budget."""
    bb = max(1, target_rows // max(N, 1))
    per_graph_bytes = (2 * N * N + 2 * N * H) * 4          # A_in + A_out + hidden + out
    bb = min(bb, max(1, vmem_budget_bytes // (2 * per_graph_bytes)))  # ~double-buffered
    return max(1, min(bb, B))


def gnn_forward(A, hidden, params, step=1, batch_block=None):
    B, N, H = hidden.shape
    assert A.shape == (B, N, 2 * N)
    A = A.astype(jnp.float32)
    hidden = hidden.astype(jnp.float32)

    # Split A on a leading dim in the wrapper -> no non-lane-aligned slicing in-kernel.
    a_in = A[:, :, :N]
    a_out = A[:, :, N:2 * N]

    if batch_block is None:
        batch_block = _pick_batch_block(B, N, H)
    BB = max(1, min(batch_block, B))
    n_blocks = pl.cdiv(B, BB)
    Bp = n_blocks * BB
    if Bp != B:                      # pad batch so every block is full (padded rows dropped)
        pad = Bp - B
        a_in = jnp.pad(a_in, ((0, pad), (0, 0), (0, 0)))
        a_out = jnp.pad(a_out, ((0, pad), (0, 0), (0, 0)))
        hidden = jnp.pad(hidden, ((0, pad), (0, 0), (0, 0)))

    w_edge, b_edge, w_gin, w_gout, w_gh, b_gate = _prep_weights(params, H)

    full = lambda arr: pl.BlockSpec(arr.shape, lambda b: (0,) * arr.ndim)

    kernel = functools.partial(gnn_kernel, n_nodes=N, hidden_size=H, num_steps=step)

    out = pl.pallas_call(
        kernel,
        out_shape=jax.ShapeDtypeStruct((Bp, N, H), jnp.float32),
        grid_spec=pltpu.PrefetchScalarGridSpec(
            num_scalar_prefetch=0,
            grid=(n_blocks,),
            in_specs=[
                pl.BlockSpec((BB, N, N), lambda b: (b, 0, 0)),   # A_in
                pl.BlockSpec((BB, N, N), lambda b: (b, 0, 0)),   # A_out
                pl.BlockSpec((BB, N, H), lambda b: (b, 0, 0)),   # hidden
                full(w_edge), full(b_edge),
                full(w_gin), full(w_gout), full(w_gh), full(b_gate),
            ],
            out_specs=pl.BlockSpec((BB, N, H), lambda b: (b, 0, 0)),
        ),
        compiler_params=pltpu.CompilerParams(
            dimension_semantics=("parallel",),
            vmem_limit_bytes=32 * 1024 * 1024,
        ),
    )(a_in, a_out, hidden, w_edge, b_edge, w_gin, w_gout, w_gh, b_gate)

    return out[:B]


# ---- pure-JAX reference (mirrors the PyTorch GNNCell exactly) ----
def gnn_cell_ref(A, hidden, p):
    N = A.shape[1]
    eh_in = hidden @ p["w_edge_in"].T + p["b_edge_in"]
    eh_out = hidden @ p["w_edge_out"].T + p["b_edge_out"]
    input_in = jnp.matmul(A[:, :, :N], eh_in) + p["b_iah"]
    input_out = jnp.matmul(A[:, :, N:2 * N], eh_out) + p["b_oah"]
    inputs = jnp.concatenate([input_in, input_out], axis=2)
    gi = inputs @ p["w_ih"].T + p["b_ih"]
    gh = hidden @ p["w_hh"].T + p["b_hh"]
    i_r, i_i, i_n = jnp.split(gi, 3, axis=2)
    h_r, h_i, h_n = jnp.split(gh, 3, axis=2)
    resetgate = jax.nn.sigmoid(i_r + h_r)
    inputgate = jax.nn.sigmoid(i_i + h_i)
    newgate = jnp.tanh(i_n + resetgate * h_n)
    return newgate + inputgate * (hidden - newgate)


def make_params(key, hidden_size):
    H = hidden_size
    stdv = 1.0 / np.sqrt(H)
    ks = jax.random.split(key, 10)
    u = lambda k, shape: jax.random.uniform(k, shape, jnp.float32, -stdv, stdv)
    return {
        "w_ih": u(ks[0], (3 * H, 2 * H)),
        "w_hh": u(ks[1], (3 * H, H)),
        "b_ih": u(ks[2], (3 * H,)),
        "b_hh": u(ks[3], (3 * H,)),
        "b_iah": u(ks[4], (H,)),
        "b_oah": u(ks[5], (H,)),
        "w_edge_in": u(ks[6], (H, H)),
        "b_edge_in": u(ks[7], (H,)),
        "w_edge_out": u(ks[8], (H, H)),
        "b_edge_out": u(ks[9], (H,)),
        # TODO(synk): linear_edge_f is declared in __init__ but unused in forward; omitted.
    }


if __name__ == "__main__":
    B, N, H = 6, 8, 16
    step = 2

    key = jax.random.PRNGKey(0)
    k_a, k_h, k_p = jax.random.split(key, 3)

    A = jax.random.uniform(k_a, (B, N, 2 * N), jnp.float32)
    hidden = jax.random.normal(k_h, (B, N, H), jnp.float32)
    params = make_params(k_p, H)

    # batch_block=4 exercises the multi-block grid + batch padding path.
    out = gnn_forward(A, hidden, params, step=step, batch_block=4)
    out = jax.block_until_ready(out)

    ref = hidden
    for _ in range(step):
        ref = gnn_cell_ref(A, ref, params)

    np.testing.assert_allclose(np.asarray(out), np.asarray(ref), rtol=1e-5, atol=1e-5)
    print("KERNEL_OK")
</pallas_src>

<mosaic_0001>
module attributes {stable_mosaic.version = 11 : i64} {
  func.func @gnn_kernel(%arg0: i32, %arg1: memref<4x8x8xf32, #tpu.memory_space<vmem>>, %arg2: memref<4x8x8xf32, #tpu.memory_space<vmem>>, %arg3: memref<4x8x16xf32, #tpu.memory_space<vmem>>, %arg4: memref<2x16x16xf32, #tpu.memory_space<vmem>>, %arg5: memref<2x1x16xf32, #tpu.memory_space<vmem>>, %arg6: memref<3x16x16xf32, #tpu.memory_space<vmem>>, %arg7: memref<3x16x16xf32, #tpu.memory_space<vmem>>, %arg8: memref<3x16x16xf32, #tpu.memory_space<vmem>>, %arg9: memref<4x1x16xf32, #tpu.memory_space<vmem>>, %arg10: memref<4x8x16xf32, #tpu.memory_space<vmem>>) attributes {dimension_semantics = [#tpu.dimension_semantics<parallel>], iteration_bounds = array<i64: 2>, scalar_prefetch = 0 : i64, scratch_operands = 0 : i64, tpu.core_type = #tpu.core_type<tc>, window_params = [{transform_indices = @transform_0, window_bounds = array<i64: 4, 8, 8>}, {transform_indices = @transform_1, window_bounds = array<i64: 4, 8, 8>}, {transform_indices = @transform_2, window_bounds = array<i64: 4, 8, 16>}, {pipeline_mode = #tpu.pipeline_mode<synchronous>, transform_indices = @transform_3, window_bounds = array<i64: 2, 16, 16>}, {pipeline_mode = #tpu.pipeline_mode<synchronous>, transform_indices = @transform_4, window_bounds = array<i64: 2, 1, 16>}, {pipeline_mode = #tpu.pipeline_mode<synchronous>, transform_indices = @transform_5, window_bounds = array<i64: 3, 16, 16>}, {pipeline_mode = #tpu.pipeline_mode<synchronous>, transform_indices = @transform_6, window_bounds = array<i64: 3, 16, 16>}, {pipeline_mode = #tpu.pipeline_mode<synchronous>, transform_indices = @transform_7, window_bounds = array<i64: 3, 16, 16>}, {pipeline_mode = #tpu.pipeline_mode<synchronous>, transform_indices = @transform_8, window_bounds = array<i64: 4, 1, 16>}, {transform_indices = @transform_9, window_bounds = array<i64: 4, 8, 16>}]} {
    %c0 = arith.constant 0 : index
    %c0_0 = arith.constant 0 : index
    %c0_1 = arith.constant 0 : index
    %0 = vector.load %arg1[%c0, %c0_0, %c0_1] : memref<4x8x8xf32, #tpu.memory_space<vmem>>, vector<4x8x8xf32>
    %c0_2 = arith.constant 0 : index
    %c0_3 = arith.constant 0 : index
    %c0_4 = arith.constant 0 : index
    %1 = vector.load %arg2[%c0_2, %c0_3, %c0_4] : memref<4x8x8xf32, #tpu.memory_space<vmem>>, vector<4x8x8xf32>
    %c0_5 = arith.constant 0 : index
    %c0_6 = arith.constant 0 : index
    %c0_7 = arith.constant 0 : index
    %2 = vector.load %arg4[%c0_5, %c0_6, %c0_7] : memref<2x16x16xf32, #tpu.memory_space<vmem>>, vector<1x16x16xf32>
    %3 = vector.shape_cast %2 : vector<1x16x16xf32> to vector<16x16xf32>
    %c1 = arith.constant 1 : index
    %c0_8 = arith.constant 0 : index
    %c0_9 = arith.constant 0 : index
    %4 = vector.load %arg4[%c1, %c0_8, %c0_9] : memref<2x16x16xf32, #tpu.memory_space<vmem>>, vector<1x16x16xf32>
    %5 = vector.shape_cast %4 : vector<1x16x16xf32> to vector<16x16xf32>
    %c0_10 = arith.constant 0 : index
    %c0_11 = arith.constant 0 : index
    %c0_12 = arith.constant 0 : index
    %6 = vector.load %arg5[%c0_10, %c0_11, %c0_12] : memref<2x1x16xf32, #tpu.memory_space<vmem>>, vector<1x1x16xf32>
    %7 = vector.shape_cast %6 : vector<1x1x16xf32> to vector<1x16xf32>
    %c1_13 = arith.constant 1 : index
    %c0_14 = arith.constant 0 : index
    %c0_15 = arith.constant 0 : index
    %8 = vector.load %arg5[%c1_13, %c0_14, %c0_15] : memref<2x1x16xf32, #tpu.memory_space<vmem>>, vector<1x1x16xf32>
    %9 = vector.shape_cast %8 : vector<1x1x16xf32> to vector<1x16xf32>
    %c0_16 = arith.constant 0 : index
    %c0_17 = arith.constant 0 : index
    %c0_18 = arith.constant 0 : index
    %10 = vector.load %arg6[%c0_16, %c0_17, %c0_18] : memref<3x16x16xf32, #tpu.memory_space<vmem>>, vector<1x16x16xf32>
    %11 = vector.shape_cast %10 : vector<1x16x16xf32> to vector<16x16xf32>
    %c1_19 = arith.constant 1 : index
    %c0_20 = arith.constant 0 : index
    %c0_21 = arith.constant 0 : index
    %12 = vector.load %arg6[%c1_19, %c0_20, %c0_21] : memref<3x16x16xf32, #tpu.memory_space<vmem>>, vector<1x16x16xf32>
    %13 = vector.shape_cast %12 : vector<1x16x16xf32> to vector<16x16xf32>
    %c2 = arith.constant 2 : index
    %c0_22 = arith.constant 0 : index
    %c0_23 = arith.constant 0 : index
    %14 = vector.load %arg6[%c2, %c0_22, %c0_23] : memref<3x16x16xf32, #tpu.memory_space<vmem>>, vector<1x16x16xf32>
    %15 = vector.shape_cast %14 : vector<1x16x16xf32> to vector<16x16xf32>
    %c0_24 = arith.constant 0 : index
    %c0_25 = arith.constant 0 : index
    %c0_26 = arith.constant 0 : index
    %16 = vector.load %arg7[%c0_24, %c0_25, %c0_26] : memref<3x16x16xf32, #tpu.memory_space<vmem>>, vector<1x16x16xf32>
    %17 = vector.shape_cast %16 : vector<1x16x16xf32> to vector<16x16xf32>
    %c1_27 = arith.constant 1 : index
    %c0_28 = arith.constant 0 : index
    %c0_29 = arith.constant 0 : index
    %18 = vector.load %arg7[%c1_27, %c0_28, %c0_29] : memref<3x16x16xf32, #tpu.memory_space<vmem>>, vector<1x16x16xf32>
    %19 = vector.shape_cast %18 : vector<1x16x16xf32> to vector<16x16xf32>
    %c2_30 = arith.constant 2 : index
    %c0_31 = arith.constant 0 : index
    %c0_32 = arith.constant 0 : index
    %20 = vector.load %arg7[%c2_30, %c0_31, %c0_32] : memref<3x16x16xf32, #tpu.memory_space<vmem>>, vector<1x16x16xf32>
    %21 = vector.shape_cast %20 : vector<1x16x16xf32> to vector<16x16xf32>
    %c0_33 = arith.constant 0 : index
    %c0_34 = arith.constant 0 : index
    %c0_35 = arith.constant 0 : index
    %22 = vector.load %arg8[%c0_33, %c0_34, %c0_35] : memref<3x16x16xf32, #tpu.memory_space<vmem>>, vector<1x16x16xf32>
    %23 = vector.shape_cast %22 : vector<1x16x16xf32> to vector<16x16xf32>
    %c1_36 = arith.constant 1 : index
    %c0_37 = arith.constant 0 : index
    %c0_38 = arith.constant 0 : index
    %24 = vector.load %arg8[%c1_36, %c0_37, %c0_38] : memref<3x16x16xf32, #tpu.memory_space<vmem>>, vector<1x16x16xf32>
    %25 = vector.shape_cast %24 : vector<1x16x16xf32> to vector<16x16xf32>
    %c2_39 = arith.constant 2 : index
    %c0_40 = arith.constant 0 : index
    %c0_41 = arith.constant 0 : index
    %26 = vector.load %arg8[%c2_39, %c0_40, %c0_41] : memref<3x16x16xf32, #tpu.memory_space<vmem>>, vector<1x16x16xf32>
    %27 = vector.shape_cast %26 : vector<1x16x16xf32> to vector<16x16xf32>
    %c0_42 = arith.constant 0 : index
    %c0_43 = arith.constant 0 : index
    %c0_44 = arith.constant 0 : index
    %28 = vector.load %arg9[%c0_42, %c0_43, %c0_44] : memref<4x1x16xf32, #tpu.memory_space<vmem>>, vector<1x1x16xf32>
    %29 = vector.shape_cast %28 : vector<1x1x16xf32> to vector<1x16xf32>
    %c1_45 = arith.constant 1 : index
    %c0_46 = arith.constant 0 : index
    %c0_47 = arith.constant 0 : index
    %30 = vector.load %arg9[%c1_45, %c0_46, %c0_47] : memref<4x1x16xf32, #tpu.memory_space<vmem>>, vector<1x1x16xf32>
    %31 = vector.shape_cast %30 : vector<1x1x16xf32> to vector<1x16xf32>
    %c2_48 = arith.constant 2 : index
    %c0_49 = arith.constant 0 : index
    %c0_50 = arith.constant 0 : index
    %32 = vector.load %arg9[%c2_48, %c0_49, %c0_50] : memref<4x1x16xf32, #tpu.memory_space<vmem>>, vector<1x1x16xf32>
    %33 = vector.shape_cast %32 : vector<1x1x16xf32> to vector<1x16xf32>
    %c3 = arith.constant 3 : index
    %c0_51 = arith.constant 0 : index
    %c0_52 = arith.constant 0 : index
    %34 = vector.load %arg9[%c3, %c0_51, %c0_52] : memref<4x1x16xf32, #tpu.memory_space<vmem>>, vector<1x1x16xf32>
    %35 = vector.shape_cast %34 : vector<1x1x16xf32> to vector<1x16xf32>
    %c0_53 = arith.constant 0 : index
    %c0_54 = arith.constant 0 : index
    %c0_55 = arith.constant 0 : index
    %36 = vector.load %arg3[%c0_53, %c0_54, %c0_55] : memref<4x8x16xf32, #tpu.memory_space<vmem>>, vector<4x8x16xf32>
    %37 = vector.shape_cast %36 : vector<4x8x16xf32> to vector<32x16xf32>
    %cst = arith.constant dense<0.000000e+00> : vector<32x16xf32>
    %38 = tpu.matmul %37, %3, %cst {dimension_numbers = #tpu.dot_dimension_numbers<[1], [0], [0], [1], [0, 0, 1, 1], [], []>} : vector<32x16xf32>, vector<16x16xf32>, vector<32x16xf32> -> vector<32x16xf32>
    %39 = vector.broadcast %7 : vector<1x16xf32> to vector<32x16xf32>
    %40 = arith.addf %38, %39 : vector<32x16xf32>
    %cst_56 = arith.constant dense<0.000000e+00> : vector<32x16xf32>
    %41 = tpu.matmul %37, %5, %cst_56 {dimension_numbers = #tpu.dot_dimension_numbers<[1], [0], [0], [1], [0, 0, 1, 1], [], []>} : vector<32x16xf32>, vector<16x16xf32>, vector<32x16xf32> -> vector<32x16xf32>
    %42 = vector.broadcast %9 : vector<1x16xf32> to vector<32x16xf32>
    %43 = arith.addf %41, %42 : vector<32x16xf32>
    %44 = vector.shape_cast %40 : vector<32x16xf32> to vector<4x8x16xf32>
    "tpu.trace_start"() <{level = 10 : i32, message = "bij,bjh->bih"}> : () -> ()
    %cst_57 = arith.constant dense<0.000000e+00> : vector<4x8x16xf32>
    %45 = tpu.matmul %0, %44, %cst_57 {dimension_numbers = #tpu.dot_dimension_numbers<[2], [1], [1], [2], [0, 0, 0, 1, 1, 2], [0], [0]>} : vector<4x8x8xf32>, vector<4x8x16xf32>, vector<4x8x16xf32> -> vector<4x8x16xf32>
    "tpu.trace_stop"() : () -> ()
    %46 = vector.shape_cast %45 : vector<4x8x16xf32> to vector<32x16xf32>
    %47 = vector.shape_cast %43 : vector<32x16xf32> to vector<4x8x16xf32>
    "tpu.trace_start"() <{level = 10 : i32, message = "bij,bjh->bih"}> : () -> ()
    %cst_58 = arith.constant dense<0.000000e+00> : vector<4x8x16xf32>
    %48 = tpu.matmul %1, %47, %cst_58 {dimension_numbers = #tpu.dot_dimension_numbers<[2], [1], [1], [2], [0, 0, 0, 1, 1, 2], [0], [0]>} : vector<4x8x8xf32>, vector<4x8x16xf32>, vector<4x8x16xf32> -> vector<4x8x16xf32>
    "tpu.trace_stop"() : () -> ()
    %49 = vector.shape_cast %48 : vector<4x8x16xf32> to vector<32x16xf32>
    %cst_59 = arith.constant dense<0.000000e+00> : vector<32x16xf32>
    %50 = tpu.matmul %46, %11, %cst_59 {dimension_numbers = #tpu.dot_dimension_numbers<[1], [0], [0], [1], [0, 0, 1, 1], [], []>} : vector<32x16xf32>, vector<16x16xf32>, vector<32x16xf32> -> vector<32x16xf32>
    %cst_60 = arith.constant dense<0.000000e+00> : vector<32x16xf32>
    %51 = tpu.matmul %49, %17, %cst_60 {dimension_numbers = #tpu.dot_dimension_numbers<[1], [0], [0], [1], [0, 0, 1, 1], [], []>} : vector<32x16xf32>, vector<16x16xf32>, vector<32x16xf32> -> vector<32x16xf32>
    %52 = arith.addf %50, %51 : vector<32x16xf32>
    %cst_61 = arith.constant dense<0.000000e+00> : vector<32x16xf32>
    %53 = tpu.matmul %37, %23, %cst_61 {dimension_numbers = #tpu.dot_dimension_numbers<[1], [0], [0], [1], [0, 0, 1, 1], [], []>} : vector<32x16xf32>, vector<16x16xf32>, vector<32x16xf32> -> vector<32x16xf32>
    %54 = arith.addf %52, %53 : vector<32x16xf32>
    %55 = vector.broadcast %29 : vector<1x16xf32> to vector<32x16xf32>
    %56 = arith.addf %54, %55 : vector<32x16xf32>
    %cst_62 = arith.constant dense<0.000000e+00> : vector<32x16xf32>
    %57 = tpu.matmul %46, %13, %cst_62 {dimension_numbers = #tpu.dot_dimension_numbers<[1], [0], [0], [1], [0, 0, 1, 1], [], []>} : vector<32x16xf32>, vector<16x16xf32>, vector<32x16xf32> -> vector<32x16xf32>
    %cst_63 = arith.constant dense<0.000000e+00> : vector<32x16xf32>
    %58 = tpu.matmul %49, %19, %cst_63 {dimension_numbers = #tpu.dot_dimension_numbers<[1], [0], [0], [1], [0, 0, 1, 1], [], []>} : vector<32x16xf32>, vector<16x16xf32>, vector<32x16xf32> -> vector<32x16xf32>
    %59 = arith.addf %57, %58 : vector<32x16xf32>
    %cst_64 = arith.constant dense<0.000000e+00> : vector<32x16xf32>
    %60 = tpu.matmul %37, %25, %cst_64 {dimension_numbers = #tpu.dot_dimension_numbers<[1], [0], [0], [1], [0, 0, 1, 1], [], []>} : vector<32x16xf32>, vector<16x16xf32>, vector<32x16xf32> -> vector<32x16xf32>
    %61 = arith.addf %59, %60 : vector<32x16xf32>
    %62 = vector.broadcast %31 : vector<1x16xf32> to vector<32x16xf32>
    %63 = arith.addf %61, %62 : vector<32x16xf32>
    %cst_65 = arith.constant dense<0.000000e+00> : vector<32x16xf32>
    %64 = tpu.matmul %46, %15, %cst_65 {dimension_numbers = #tpu.dot_dimension_numbers<[1], [0], [0], [1], [0, 0, 1, 1], [], []>} : vector<32x16xf32>, vector<16x16xf32>, vector<32x16xf32> -> vector<32x16xf32>
    %cst_66 = arith.constant dense<0.000000e+00> : vector<32x16xf32>
    %65 = tpu.matmul %49, %21, %cst_66 {dimension_numbers = #tpu.dot_dimension_numbers<[1], [0], [0], [1], [0, 0, 1, 1], [], []>} : vector<32x16xf32>, vector<16x16xf32>, vector<32x16xf32> -> vector<32x16xf32>
    %66 = arith.addf %64, %65 : vector<32x16xf32>
    %67 = vector.broadcast %33 : vector<1x16xf32> to vector<32x16xf32>
    %68 = arith.addf %66, %67 : vector<32x16xf32>
    %cst_67 = arith.constant dense<0.000000e+00> : vector<32x16xf32>
    %69 = tpu.matmul %37, %27, %cst_67 {dimension_numbers = #tpu.dot_dimension_numbers<[1], [0], [0], [1], [0, 0, 1, 1], [], []>} : vector<32x16xf32>, vector<16x16xf32>, vector<32x16xf32> -> vector<32x16xf32>
    %70 = vector.broadcast %35 : vector<1x16xf32> to vector<32x16xf32>
    %71 = arith.addf %69, %70 : vector<32x16xf32>
    %72 = arith.negf %56 : vector<32x16xf32>
    %73 = math.exp %72 : vector<32x16xf32>
    %cst_68 = arith.constant 1.000000e+00 : f32
    %74 = vector.broadcast %cst_68 : f32 to vector<32x16xf32>
    %75 = arith.addf %74, %73 : vector<32x16xf32>
    %76 = arith.divf %74, %75 : vector<32x16xf32>
    %77 = arith.negf %63 : vector<32x16xf32>
    %78 = math.exp %77 : vector<32x16xf32>
    %cst_69 = arith.constant 1.000000e+00 : f32
    %79 = vector.broadcast %cst_69 : f32 to vector<32x16xf32>
    %80 = arith.addf %79, %78 : vector<32x16xf32>
    %81 = arith.divf %79, %80 : vector<32x16xf32>
    %82 = arith.mulf %76, %71 : vector<32x16xf32>
    %83 = arith.addf %68, %82 : vector<32x16xf32>
    %84 = math.tanh %83 : vector<32x16xf32>
    %85 = arith.subf %37, %84 : vector<32x16xf32>
    %86 = arith.mulf %81, %85 : vector<32x16xf32>
    %87 = arith.addf %84, %86 : vector<32x16xf32>
    %cst_70 = arith.constant dense<0.000000e+00> : vector<32x16xf32>
    %88 = tpu.matmul %87, %3, %cst_70 {dimension_numbers = #tpu.dot_dimension_numbers<[1], [0], [0], [1], [0, 0, 1, 1], [], []>} : vector<32x16xf32>, vector<16x16xf32>, vector<32x16xf32> -> vector<32x16xf32>
    %89 = vector.broadcast %7 : vector<1x16xf32> to vector<32x16xf32>
    %90 = arith.addf %88, %89 : vector<32x16xf32>
    %cst_71 = arith.constant dense<0.000000e+00> : vector<32x16xf32>
    %91 = tpu.matmul %87, %5, %cst_71 {dimension_numbers = #tpu.dot_dimension_numbers<[1], [0], [0], [1], [0, 0, 1, 1], [], []>} : vector<32x16xf32>, vector<16x16xf32>, vector<32x16xf32> -> vector<32x16xf32>
    %92 = vector.broadcast %9 : vector<1x16xf32> to vector<32x16xf32>
    %93 = arith.addf %91, %92 : vector<32x16xf32>
    %94 = vector.shape_cast %90 : vector<32x16xf32> to vector<4x8x16xf32>
    "tpu.trace_start"() <{level = 10 : i32, message = "bij,bjh->bih"}> : () -> ()
    %cst_72 = arith.constant dense<0.000000e+00> : vector<4x8x16xf32>
    %95 = tpu.matmul %0, %94, %cst_72 {dimension_numbers = #tpu.dot_dimension_numbers<[2], [1], [1], [2], [0, 0, 0, 1, 1, 2], [0], [0]>} : vector<4x8x8xf32>, vector<4x8x16xf32>, vector<4x8x16xf32> -> vector<4x8x16xf32>
    "tpu.trace_stop"() : () -> ()
    %96 = vector.shape_cast %95 : vector<4x8x16xf32> to vector<32x16xf32>
    %97 = vector.shape_cast %93 : vector<32x16xf32> to vector<4x8x16xf32>
    "tpu.trace_start"() <{level = 10 : i32, message = "bij,bjh->bih"}> : () -> ()
    %cst_73 = arith.constant dense<0.000000e+00> : vector<4x8x16xf32>
    %98 = tpu.matmul %1, %97, %cst_73 {dimension_numbers = #tpu.dot_dimension_numbers<[2], [1], [1], [2], [0, 0, 0, 1, 1, 2], [0], [0]>} : vector<4x8x8xf32>, vector<4x8x16xf32>, vector<4x8x16xf32> -> vector<4x8x16xf32>
    "tpu.trace_stop"() : () -> ()
    %99 = vector.shape_cast %98 : vector<4x8x16xf32> to vector<32x16xf32>
    %cst_74 = arith.constant dense<0.000000e+00> : vector<32x16xf32>
    %100 = tpu.matmul %96, %11, %cst_74 {dimension_numbers = #tpu.dot_dimension_numbers<[1], [0], [0], [1], [0, 0, 1, 1], [], []>} : vector<32x16xf32>, vector<16x16xf32>, vector<32x16xf32> -> vector<32x16xf32>
    %cst_75 = arith.constant dense<0.000000e+00> : vector<32x16xf32>
    %101 = tpu.matmul %99, %17, %cst_75 {dimension_numbers = #tpu.dot_dimension_numbers<[1], [0], [0], [1], [0, 0, 1, 1], [], []>} : vector<32x16xf32>, vector<16x16xf32>, vector<32x16xf32> -> vector<32x16xf32>
    %102 = arith.addf %100, %101 : vector<32x16xf32>
    %cst_76 = arith.constant dense<0.000000e+00> : vector<32x16xf32>
    %103 = tpu.matmul %87, %23, %cst_76 {dimension_numbers = #tpu.dot_dimension_numbers<[1], [0], [0], [1], [0, 0, 1, 1], [], []>} : vector<32x16xf32>, vector<16x16xf32>, vector<32x16xf32> -> vector<32x16xf32>
    %104 = arith.addf %102, %103 : vector<32x16xf32>
    %105 = vector.broadcast %29 : vector<1x16xf32> to vector<32x16xf32>
    %106 = arith.addf %104, %105 : vector<32x16xf32>
    %cst_77 = arith.constant dense<0.000000e+00> : vector<32x16xf32>
    %107 = tpu.matmul %96, %13, %cst_77 {dimension_numbers = #tpu.dot_dimension_numbers<[1], [0], [0], [1], [0, 0, 1, 1], [], []>} : vector<32x16xf32>, vector<16x16xf32>, vector<32x16xf32> -> vector<32x16xf32>
    %cst_78 = arith.constant dense<0.000000e+00> : vector<32x16xf32>
    %108 = tpu.matmul %99, %19, %cst_78 {dimension_numbers = #tpu.dot_dimension_numbers<[1], [0], [0], [1], [0, 0, 1, 1], [], []>} : vector<32x16xf32>, vector<16x16xf32>, vector<32x16xf32> -> vector<32x16xf32>
    %109 = arith.addf %107, %108 : vector<32x16xf32>
    %cst_79 = arith.constant dense<0.000000e+00> : vector<32x16xf32>
    %110 = tpu.matmul %87, %25, %cst_79 {dimension_numbers = #tpu.dot_dimension_numbers<[1], [0], [0], [1], [0, 0, 1, 1], [], []>} : vector<32x16xf32>, vector<16x16xf32>, vector<32x16xf32> -> vector<32x16xf32>
    %111 = arith.addf %109, %110 : vector<32x16xf32>
    %112 = vector.broadcast %31 : vector<1x16xf32> to vector<32x16xf32>
    %113 = arith.addf %111, %112 : vector<32x16xf32>
    %cst_80 = arith.constant dense<0.000000e+00> : vector<32x16xf32>
    %114 = tpu.matmul %96, %15, %cst_80 {dimension_numbers = #tpu.dot_dimension_numbers<[1], [0], [0], [1], [0, 0, 1, 1], [], []>} : vector<32x16xf32>, vector<16x16xf32>, vector<32x16xf32> -> vector<32x16xf32>
    %cst_81 = arith.constant dense<0.000000e+00> : vector<32x16xf32>
    %115 = tpu.matmul %99, %21, %cst_81 {dimension_numbers = #tpu.dot_dimension_numbers<[1], [0], [0], [1], [0, 0, 1, 1], [], []>} : vector<32x16xf32>, vector<16x16xf32>, vector<32x16xf32> -> vector<32x16xf32>
    %116 = arith.addf %114, %115 : vector<32x16xf32>
    %117 = vector.broadcast %33 : vector<1x16xf32> to vector<32x16xf32>
    %118 = arith.addf %116, %117 : vector<32x16xf32>
    %cst_82 = arith.constant dense<0.000000e+00> : vector<32x16xf32>
    %119 = tpu.matmul %87, %27, %cst_82 {dimension_numbers = #tpu.dot_dimension_numbers<[1], [0], [0], [1], [0, 0, 1, 1], [], []>} : vector<32x16xf32>, vector<16x16xf32>, vector<32x16xf32> -> vector<32x16xf32>
    %120 = vector.broadcast %35 : vector<1x16xf32> to vector<32x16xf32>
    %121 = arith.addf %119, %120 : vector<32x16xf32>
    %122 = arith.negf %106 : vector<32x16xf32>
    %123 = math.exp %122 : vector<32x16xf32>
    %cst_83 = arith.constant 1.000000e+00 : f32
    %124 = vector.broadcast %cst_83 : f32 to vector<32x16xf32>
    %125 = arith.addf %124, %123 : vector<32x16xf32>
    %126 = arith.divf %124, %125 : vector<32x16xf32>
    %127 = arith.negf %113 : vector<32x16xf32>
    %128 = math.exp %127 : vector<32x16xf32>
    %cst_84 = arith.constant 1.000000e+00 : f32
    %129 = vector.broadcast %cst_84 : f32 to vector<32x16xf32>
    %130 = arith.addf %129, %128 : vector<32x16xf32>
    %131 = arith.divf %129, %130 : vector<32x16xf32>
    %132 = arith.mulf %126, %121 : vector<32x16xf32>
    %133 = arith.addf %118, %132 : vector<32x16xf32>
    %134 = math.tanh %133 : vector<32x16xf32>
    %135 = arith.subf %87, %134 : vector<32x16xf32>
    %136 = arith.mulf %131, %135 : vector<32x16xf32>
    %137 = arith.addf %134, %136 : vector<32x16xf32>
    %138 = vector.shape_cast %137 : vector<32x16xf32> to vector<4x8x16xf32>
    %c0_85 = arith.constant 0 : index
    %c0_86 = arith.constant 0 : index
    %c0_87 = arith.constant 0 : index
    %139 = vector.load %arg10[%c0_85, %c0_86, %c0_87] : memref<4x8x16xf32, #tpu.memory_space<vmem>>, vector<4x8x16xf32>
    tpu.vector_store %arg10[%c0_85, %c0_86, %c0_87], %138 {strides = array<i32>} : memref<4x8x16xf32, #tpu.memory_space<vmem>>, vector<4x8x16xf32>,
    return
  }
  func.func @transform_0(%arg0: i32) -> (i32, i32, i32) {
    %c0_i32 = arith.constant 0 : i32
    %c0_i32_0 = arith.constant 0 : i32
    %c0_i32_1 = arith.constant 0 : i32
    return %arg0, %c0_i32, %c0_i32_0 : i32, i32, i32
  }
  func.func @transform_1(%arg0: i32) -> (i32, i32, i32) {
    %c0_i32 = arith.constant 0 : i32
    %c0_i32_0 = arith.constant 0 : i32
    %c0_i32_1 = arith.constant 0 : i32
    return %arg0, %c0_i32, %c0_i32_0 : i32, i32, i32
  }
  func.func @transform_2(%arg0: i32) -> (i32, i32, i32) {
    %c0_i32 = arith.constant 0 : i32
    %c0_i32_0 = arith.constant 0 : i32
    %c0_i32_1 = arith.constant 0 : i32
    return %arg0, %c0_i32, %c0_i32_0 : i32, i32, i32
  }
  func.func @transform_3(%arg0: i32) -> (i32, i32, i32) {
    %c0_i32 = arith.constant 0 : i32
    %c0_i32_0 = arith.constant 0 : i32
    %c0_i32_1 = arith.constant 0 : i32
    %c0_i32_2 = arith.constant 0 : i32
    return %c0_i32, %c0_i32_0, %c0_i32_1 : i32, i32, i32
  }
  func.func @transform_4(%arg0: i32) -> (i32, i32, i32) {
    %c0_i32 = arith.constant 0 : i32
    %c0_i32_0 = arith.constant 0 : i32
    %c0_i32_1 = arith.constant 0 : i32
    %c0_i32_2 = arith.constant 0 : i32
    return %c0_i32, %c0_i32_0, %c0_i32_1 : i32, i32, i32
  }
  func.func @transform_5(%arg0: i32) -> (i32, i32, i32) {
    %c0_i32 = arith.constant 0 : i32
    %c0_i32_0 = arith.constant 0 : i32
    %c0_i32_1 = arith.constant 0 : i32
    %c0_i32_2 = arith.constant 0 : i32
    return %c0_i32, %c0_i32_0, %c0_i32_1 : i32, i32, i32
  }
  func.func @transform_6(%arg0: i32) -> (i32, i32, i32) {
    %c0_i32 = arith.constant 0 : i32
    %c0_i32_0 = arith.constant 0 : i32
    %c0_i32_1 = arith.constant 0 : i32
    %c0_i32_2 = arith.constant 0 : i32
    return %c0_i32, %c0_i32_0, %c0_i32_1 : i32, i32, i32
  }
  func.func @transform_7(%arg0: i32) -> (i32, i32, i32) {
    %c0_i32 = arith.constant 0 : i32
    %c0_i32_0 = arith.constant 0 : i32
    %c0_i32_1 = arith.constant 0 : i32
    %c0_i32_2 = arith.constant 0 : i32
    return %c0_i32, %c0_i32_0, %c0_i32_1 : i32, i32, i32
  }
  func.func @transform_8(%arg0: i32) -> (i32, i32, i32) {
    %c0_i32 = arith.constant 0 : i32
    %c0_i32_0 = arith.constant 0 : i32
    %c0_i32_1 = arith.constant 0 : i32
    %c0_i32_2 = arith.constant 0 : i32
    return %c0_i32, %c0_i32_0, %c0_i32_1 : i32, i32, i32
  }
  func.func @transform_9(%arg0: i32) -> (i32, i32, i32) {
    %c0_i32 = arith.constant 0 : i32
    %c0_i32_0 = arith.constant 0 : i32
    %c0_i32_1 = arith.constant 0 : i32
    return %arg0, %c0_i32, %c0_i32_0 : i32, i32, i32
  }
}

</mosaic_0001>

<llo_original>
// kernel: tpu_custom_call.1
$region0: #{tpu_custom_call.1}
  #allocation0 [shape = 'u32[]', space=smem, size = 0x4, offset = 0x4, fixed_abs, tag = 'smem constant byte address 0x4 - core index']
  #allocation1 [shape = 'u32[144,128]{1,0:T(1,128)}', space=vmem, size = 0x12000, scoped, tag = 'internal scratch']
  %s0 = inlined_call_operand.hbm [shape: f32[8,8,8], index: 0, kind: input, shape index: {}]
  %s1 = inlined_call_operand.hbm [shape: f32[8,8,8], index: 1, kind: input, shape index: {}]
  %s2 = inlined_call_operand.hbm [shape: f32[8,8,16], index: 2, kind: input, shape index: {}]
  %s3 = inlined_call_operand.hbm [shape: f32[2,16,16], index: 3, kind: input, shape index: {}]
  %s4 = inlined_call_operand.vmem [shape: f32[2,1,16], index: 4, kind: input, shape index: {}]
  %s5 = inlined_call_operand.hbm [shape: f32[3,16,16], index: 5, kind: input, shape index: {}]
  %s6 = inlined_call_operand.hbm [shape: f32[3,16,16], index: 6, kind: input, shape index: {}]
  %s7 = inlined_call_operand.hbm [shape: f32[3,16,16], index: 7, kind: input, shape index: {}]
  %s8 = inlined_call_operand.vmem [shape: f32[4,1,16], index: 8, kind: input, shape index: {}]
  %s9 = inlined_call_operand.hbm [shape: f32[8,8,16], index: 9, kind: output, shape index: {}]
  %s10 = sld [smem:[#allocation0]]
  $region97: #{tpu_custom_call.1} parent=0
    _
  %s12 = ssub.s32 1, %s10
  %s13 = scalar_select 0, %s12, %s10
  $region1: #{tpu_custom_call.1} parent=0
    #allocation2 [shape = 'u8[32768]{0}', space=vmem, size = 0x8000, scoped, tag = 'input window, operand 0']
    #allocation3 [shape = 's32[2]{0}', space=sflag, size = 0x8, scoped, tag = 'scoped memory for tpu_custom_call.1']
    #allocation4 [shape = 's32[2]{0}', space=sflag, size = 0x8, scoped, tag = 'scoped memory for tpu_custom_call.1']
    #allocation5 [shape = 'u8[32768]{0}', space=vmem, size = 0x8000, scoped, tag = 'input window, operand 1']
    #allocation6 [shape = 's32[2]{0}', space=sflag, size = 0x8, scoped, tag = 'scoped memory for tpu_custom_call.1']
    #allocation7 [shape = 'u8[32768]{0}', space=vmem, size = 0x8000, scoped, tag = 'input window, operand 2']
    #allocation8 [shape = 'u8[16384]{0}', space=vmem, size = 0x4000, scoped, tag = 'input window, operand 3, single buffered']
    #allocation9 [shape = 's32[1]{0}', space=sflag, size = 0x4, scoped, tag = 'scoped memory for tpu_custom_call.1']
    #allocation10 [shape = 'u8[24576]{0}', space=vmem, size = 0x6000, scoped, tag = 'input window, operand 5, single buffered']
    #allocation11 [shape = 'u8[24576]{0}', space=vmem, size = 0x6000, scoped, tag = 'input window, operand 6, single buffered']
    #allocation12 [shape = 's32[1]{0}', space=sflag, size = 0x4, scoped, tag = 'scoped memory for tpu_custom_call.1']
    #allocation13 [shape = 'u8[24576]{0}', space=vmem, size = 0x6000, scoped, tag = 'input window, operand 7, single buffered']
    #allocation14 [shape = 'u8[32768]{0}', space=vmem, size = 0x8000, scoped, tag = 'output window, operand 0']
    %14 = vsyncpa [#allocation3], 0
    %s15 = scalar_lea.sflag [#allocation3], 1
    %16 = vsyncpa %s15, 0
    %17 = vsyncpa [#allocation6], 0
    %s18 = scalar_lea.sflag [#allocation6], 1
    %19 = vsyncpa %s18, 0
    %20 = vsyncpa [#allocation9], 0
    %21 = vsyncpa [#allocation12], 0
    %22 = vsyncpa [#allocation4], 0
    %s23 = scalar_lea.sflag [#allocation4], 1
    %24 = vsyncpa %s23, 0
    loop: start=0, step=1, limit=4
    $region2: #{tpu_custom_call.1} parent=1 // loop_pre_header
      _
    $region3: #{tpu_custom_call.1} parent=1 // loop_header
      %s26 = sphi 0, %s30
      %p27 = scmp.ge.s32.totalorder %s26, 4
      %s36 = sphi 0, %s38
      %s39 = sphi 0, %s36
      %s40 = sphi 0, %s39
      %s56 = sphi 0, %s40
      %s62 = sphi 0, %s64
      %s65 = sphi 0, %s62
      %s66 = sphi 0, %s65
      %s82 = sphi 0, %s66
      %s88 = sphi 0, %s90
      %s91 = sphi 0, %s88
      %s92 = sphi 0, %s91
      %s108 = sphi 0, %s92
      %s112 = sphi 0, %s112
      %s114 = sphi 0, %s112
      %s115 = sphi 0, %s114
      %s129 = sphi 0, %s115
      %s133 = sphi 0, %s133
      %s135 = sphi 0, %s133
      %s136 = sphi 0, %s135
      %s150 = sphi 0, %s136
      %s154 = sphi 0, %s154
      %s156 = sphi 0, %s154
      %s157 = sphi 0, %s156
      %s171 = sphi 0, %s157
      %s175 = sphi 0, %s175
      %s177 = sphi 0, %s175
      %s178 = sphi 0, %s177
      %s192 = sphi 0, %s178
      %s196 = sphi 0, %s196
      %s198 = sphi 0, %s196
      %s199 = sphi 0, %s198
      %s213 = sphi 0, %s199
      %s217 = sphi 0, %s217
      %s219 = sphi 0, %s217
      %s220 = sphi 0, %s219
      %s234 = sphi 0, %s220
      %s240 = sphi 0, %s242
      %s243 = sphi 0, %s240
      %s244 = sphi 0, %s243
      %s260 = sphi 0, %s244
    $region4: #{tpu_custom_call.1} parent=1 // loop_header_branch
      %29 = sbr.rel (%p27) target = $region8
    $region5: #{tpu_custom_call.1} parent=1 // loop_body
      %s31 = ssub.s32 %s26, 1
      %s32 = ssub.s32 %s26, 2
      %s33 = sadd.s32 %s26, 1
      %s34 = ssub.s32 %s26, %s33
      %p35 = scmp.eq.s32.totalorder %s34, 0
      %s37 = sadd.s32 %s36, 1
      %s38 = scalar_select %p35, %s36, %s37
      %p41 = pneg %p35
      %p42 = scmp.eq.s32.totalorder %s26, 1
      %p43 = por %p41, %p42
      %p44 = scmp.ne.s32.totalorder %s36, %s39
      %p45 = scmp.eq.s32.totalorder %s26, 0
      %p46 = por %p44, %p45
      %p47 = scmp.ne.s32.totalorder %s36, %s39
      %p48 = scmp.eq.s32.totalorder %s31, 1
      %p49 = por %p47, %p48
      %p50 = scmp.ne.s32.totalorder %s39, %s40
      %p51 = scmp.eq.s32.totalorder %s31, 0
      %p52 = por %p50, %p51
      %p53 = scmp.ne.s32.totalorder %s39, %s40
      %p54 = scmp.eq.s32.totalorder %s32, 1
      %p55 = por %p53, %p54
      %p57 = scmp.ne.s32.totalorder %s40, %s56
      %p58 = scmp.eq.s32.totalorder %s32, 0
      %p59 = por %p57, %p58
      %s60 = ssub.s32 %s26, %s33
      %p61 = scmp.eq.s32.totalorder %s60, 0
      %s63 = sadd.s32 %s62, 1
      %s64 = scalar_select %p61, %s62, %s63
      %p67 = pneg %p61
      %p68 = scmp.eq.s32.totalorder %s26, 1
      %p69 = por %p67, %p68
      %p70 = scmp.ne.s32.totalorder %s62, %s65
      %p71 = scmp.eq.s32.totalorder %s26, 0
      %p72 = por %p70, %p71
      %p73 = scmp.ne.s32.totalorder %s62, %s65
      %p74 = scmp.eq.s32.totalorder %s31, 1
      %p75 = por %p73, %p74
      %p76 = scmp.ne.s32.totalorder %s65, %s66
      %p77 = scmp.eq.s32.totalorder %s31, 0
      %p78 = por %p76, %p77
      %p79 = scmp.ne.s32.totalorder %s65, %s66
      %p80 = scmp.eq.s32.totalorder %s32, 1
      %p81 = por %p79, %p80
      %p83 = scmp.ne.s32.totalorder %s66, %s82
      %p84 = scmp.eq.s32.totalorder %s32, 0
      %p85 = por %p83, %p84
      %s86 = ssub.s32 %s26, %s33
      %p87 = scmp.eq.s32.totalorder %s86, 0
      %s89 = sadd.s32 %s88, 1
      %s90 = scalar_select %p87, %s88, %s89
      %p93 = pneg %p87
      %p94 = scmp.eq.s32.totalorder %s26, 1
      %p95 = por %p93, %p94
      %p96 = scmp.ne.s32.totalorder %s88, %s91
      %p97 = scmp.eq.s32.totalorder %s26, 0
      %p98 = por %p96, %p97
      %p99 = scmp.ne.s32.totalorder %s88, %s91
      %p100 = scmp.eq.s32.totalorder %s31, 1
      %p101 = por %p99, %p100
      %p102 = scmp.ne.s32.totalorder %s91, %s92
      %p103 = scmp.eq.s32.totalorder %s31, 0
      %p104 = por %p102, %p103
      %p105 = scmp.ne.s32.totalorder %s91, %s92
      %p106 = scmp.eq.s32.totalorder %s32, 1
      %p107 = por %p105, %p106
      %p109 = scmp.ne.s32.totalorder %s92, %s108
      %p110 = scmp.eq.s32.totalorder %s32, 0
      %p111 = por %p109, %p110
      %s113 = sadd.s32 %s112, 1
      %p116 = scmp.eq.s32.totalorder %s26, 1
      %p117 = scmp.ne.s32.totalorder %s112, %s114
      %p118 = scmp.eq.s32.totalorder %s26, 0
      %p119 = por %p117, %p118
      %p120 = scmp.ne.s32.totalorder %s112, %s114
      %p121 = scmp.eq.s32.totalorder %s31, 1
      %p122 = por %p120, %p121
      %p123 = scmp.ne.s32.totalorder %s114, %s115
      %p124 = scmp.eq.s32.totalorder %s31, 0
      %p125 = por %p123, %p124
      %p126 = scmp.ne.s32.totalorder %s114, %s115
      %p127 = scmp.eq.s32.totalorder %s32, 1
      %p128 = por %p126, %p127
      %p130 = scmp.ne.s32.totalorder %s115, %s129
      %p131 = scmp.eq.s32.totalorder %s32, 0
      %p132 = por %p130, %p131
      %s134 = sadd.s32 %s133, 1
      %p137 = scmp.eq.s32.totalorder %s26, 1
      %p138 = scmp.ne.s32.totalorder %s133, %s135
      %p139 = scmp.eq.s32.totalorder %s26, 0
      %p140 = por %p138, %p139
      %p141 = scmp.ne.s32.totalorder %s133, %s135
      %p142 = scmp.eq.s32.totalorder %s31, 1
      %p143 = por %p141, %p142
      %p144 = scmp.ne.s32.totalorder %s135, %s136
      %p145 = scmp.eq.s32.totalorder %s31, 0
      %p146 = por %p144, %p145
      %p147 = scmp.ne.s32.totalorder %s135, %s136
      %p148 = scmp.eq.s32.totalorder %s32, 1
      %p149 = por %p147, %p148
      %p151 = scmp.ne.s32.totalorder %s136, %s150
      %p152 = scmp.eq.s32.totalorder %s32, 0
      %p153 = por %p151, %p152
      %s155 = sadd.s32 %s154, 1
      %p158 = scmp.eq.s32.totalorder %s26, 1
      %p159 = scmp.ne.s32.totalorder %s154, %s156
      %p160 = scmp.eq.s32.totalorder %s26, 0
      %p161 = por %p159, %p160
      %p162 = scmp.ne.s32.totalorder %s154, %s156
      %p163 = scmp.eq.s32.totalorder %s31, 1
      %p164 = por %p162, %p163
      %p165 = scmp.ne.s32.totalorder %s156, %s157
      %p166 = scmp.eq.s32.totalorder %s31, 0
      %p167 = por %p165, %p166
      %p168 = scmp.ne.s32.totalorder %s156, %s157
      %p169 = scmp.eq.s32.totalorder %s32, 1
      %p170 = por %p168, %p169
      %p172 = scmp.ne.s32.totalorder %s157, %s171
      %p173 = scmp.eq.s32.totalorder %s32, 0
      %p174 = por %p172, %p173
      %s176 = sadd.s32 %s175, 1
      %p179 = scmp.eq.s32.totalorder %s26, 1
      %p180 = scmp.ne.s32.totalorder %s175, %s177
      %p181 = scmp.eq.s32.totalorder %s26, 0
      %p182 = por %p180, %p181
      %p183 = scmp.ne.s32.totalorder %s175, %s177
      %p184 = scmp.eq.s32.totalorder %s31, 1
      %p185 = por %p183, %p184
      %p186 = scmp.ne.s32.totalorder %s177, %s178
      %p187 = scmp.eq.s32.totalorder %s31, 0
      %p188 = por %p186, %p187
      %p189 = scmp.ne.s32.totalorder %s177, %s178
      %p190 = scmp.eq.s32.totalorder %s32, 1
      %p191 = por %p189, %p190
      %p193 = scmp.ne.s32.totalorder %s178, %s192
      %p194 = scmp.eq.s32.totalorder %s32, 0
      %p195 = por %p193, %p194
      %s197 = sadd.s32 %s196, 1
      %p200 = scmp.eq.s32.totalorder %s26, 1
      %p201 = scmp.ne.s32.totalorder %s196, %s198
      %p202 = scmp.eq.s32.totalorder %s26, 0
      %p203 = por %p201, %p202
      %p204 = scmp.ne.s32.totalorder %s196, %s198
      %p205 = scmp.eq.s32.totalorder %s31, 1
      %p206 = por %p204, %p205
      %p207 = scmp.ne.s32.totalorder %s198, %s199
      %p208 = scmp.eq.s32.totalorder %s31, 0
      %p209 = por %p207, %p208
      %p210 = scmp.ne.s32.totalorder %s198, %s199
      %p211 = scmp.eq.s32.totalorder %s32, 1
      %p212 = por %p210, %p211
      %p214 = scmp.ne.s32.totalorder %s199, %s213
      %p215 = scmp.eq.s32.totalorder %s32, 0
      %p216 = por %p214, %p215
      %s218 = sadd.s32 %s217, 1
      %p221 = scmp.eq.s32.totalorder %s26, 1
      %p222 = scmp.ne.s32.totalorder %s217, %s219
      %p223 = scmp.eq.s32.totalorder %s26, 0
      %p224 = por %p222, %p223
      %p225 = scmp.ne.s32.totalorder %s217, %s219
      %p226 = scmp.eq.s32.totalorder %s31, 1
      %p227 = por %p225, %p226
      %p228 = scmp.ne.s32.totalorder %s219, %s220
      %p229 = scmp.eq.s32.totalorder %s31, 0
      %p230 = por %p228, %p229
      %p231 = scmp.ne.s32.totalorder %s219, %s220
      %p232 = scmp.eq.s32.totalorder %s32, 1
      %p233 = por %p231, %p232
      %p235 = scmp.ne.s32.totalorder %s220, %s234
      %p236 = scmp.eq.s32.totalorder %s32, 0
      %p237 = por %p235, %p236
      %s238 = ssub.s32 %s26, %s33
      %p239 = scmp.eq.s32.totalorder %s238, 0
      %s241 = sadd.s32 %s240, 1
      %s242 = scalar_select %p239, %s240, %s241
      %p245 = pneg %p239
      %p246 = scmp.eq.s32.totalorder %s26, 1
      %p247 = por %p245, %p246
      %p248 = scmp.ne.s32.totalorder %s240, %s243
      %p249 = scmp.eq.s32.totalorder %s26, 0
      %p250 = por %p248, %p249
      %p251 = scmp.ne.s32.totalorder %s240, %s243
      %p252 = scmp.eq.s32.totalorder %s31, 1
      %p253 = por %p251, %p252
      %p254 = scmp.ne.s32.totalorder %s243, %s244
      %p255 = scmp.eq.s32.totalorder %s31, 0
      %p256 = por %p254, %p255
      %p257 = scmp.ne.s32.totalorder %s243, %s244
      %p258 = scmp.eq.s32.totalorder %s32, 1
      %p259 = por %p257, %p258
      %p261 = scmp.ne.s32.totalorder %s244, %s260
      %p262 = scmp.eq.s32.totalorder %s32, 0
      %p263 = por %p261, %p262
      %p264 = scmp.le.s32.totalorder 1, %s26
      %p265 = scmp.lt.s32.totalorder %s26, 3
      %p266 = pnand %p264, %p265
      %p267 = pneg %p266
      // Predicated region
      $region9: #{tpu_custom_call.1} parent=5 // pred_check
        _
      $region10: #{tpu_custom_call.1} parent=5 // pred_check_branch
        %269 = sbr.rel (%p266) target = $region12
      $region11: #{tpu_custom_call.1} parent=5 // pred_region
        %s270 = ssub.s32 %s26, 1
        // Predicated region
        $region13: #{tpu_custom_call.1} parent=11 // pred_check
          %p271 = pneg %p125
        $region14: #{tpu_custom_call.1} parent=11 // pred_check_branch
          %273 = sbr.rel (%p271) target = $region16
        $region15: #{tpu_custom_call.1} parent=11 // pred_region
          %s275 = ssub.s32 512, 512
          %276 = vsyncadd [#allocation9], %s275
          %s277 = sshll.u32 [#allocation8], 4
          %s278 = int_to_ptr.vmem [resolvable:$true] %s277
          %283 = dma.hbm_to_vmem [thread:$0]  %s3, 512, %s278, [#allocation9], 128, 128, 8
        $region16: #{tpu_custom_call.1} parent=11 // pred_fallthru
          _
        // Predicated region
        $region17: #{tpu_custom_call.1} parent=11 // pred_check
          %p284 = pneg %p146
        $region18: #{tpu_custom_call.1} parent=11 // pred_check_branch
          %286 = sbr.rel (%p284) target = $region20
        $region19: #{tpu_custom_call.1} parent=11 // pred_region
          _
        $region20: #{tpu_custom_call.1} parent=11 // pred_fallthru
          _
        // Predicated region
        $region21: #{tpu_custom_call.1} parent=11 // pred_check
          %p287 = pneg %p167
        $region22: #{tpu_custom_call.1} parent=11 // pred_check_branch
          %289 = sbr.rel (%p287) target = $region24
        $region23: #{tpu_custom_call.1} parent=11 // pred_region
          %s291 = ssub.s32 768, 768
          %292 = vsyncadd [#allocation9], %s291
          %s293 = sshll.u32 [#allocation10], 4
          %s294 = int_to_ptr.vmem [resolvable:$true] %s293
          %299 = dma.hbm_to_vmem [thread:$0]  %s5, 768, %s294, [#allocation9], 128, 128, 8
        $region24: #{tpu_custom_call.1} parent=11 // pred_fallthru
          _
        // Predicated region
        $region25: #{tpu_custom_call.1} parent=11 // pred_check
          %p300 = pneg %p188
        $region26: #{tpu_custom_call.1} parent=11 // pred_check_branch
          %302 = sbr.rel (%p300) target = $region28
        $region27: #{tpu_custom_call.1} parent=11 // pred_region
          %s304 = ssub.s32 768, 768
          %305 = vsyncadd [#allocation12], %s304
          %s306 = sshll.u32 [#allocation11], 4
          %s307 = int_to_ptr.vmem [resolvable:$true] %s306
          %312 = dma.hbm_to_vmem [thread:$0]  %s6, 768, %s307, [#allocation12], 128, 128, 8
        $region28: #{tpu_custom_call.1} parent=11 // pred_fallthru
          _
        // Predicated region
        $region29: #{tpu_custom_call.1} parent=11 // pred_check
          %p313 = pneg %p209
        $region30: #{tpu_custom_call.1} parent=11 // pred_check_branch
          %315 = sbr.rel (%p313) target = $region32
        $region31: #{tpu_custom_call.1} parent=11 // pred_region
          %s317 = ssub.s32 768, 768
          %318 = vsyncadd [#allocation12], %s317
          %s319 = sshll.u32 [#allocation13], 4
          %s320 = int_to_ptr.vmem [resolvable:$true] %s319
          %325 = dma.hbm_to_vmem [thread:$0]  %s7, 768, %s320, [#allocation12], 128, 128, 8
        $region32: #{tpu_custom_call.1} parent=11 // pred_fallthru
          _
        // Predicated region
        $region33: #{tpu_custom_call.1} parent=11 // pred_check
          %p326 = pneg %p230
        $region34: #{tpu_custom_call.1} parent=11 // pred_check_branch
          %328 = sbr.rel (%p326) target = $region36
        $region35: #{tpu_custom_call.1} parent=11 // pred_region
          _
        $region36: #{tpu_custom_call.1} parent=11 // pred_fallthru
          _
      $region12: #{tpu_custom_call.1} parent=5 // pred_fallthru
        _
      %p329 = scmp.lt.s32.totalorder %s26, 2
      // Predicated region
      $region37: #{tpu_custom_call.1} parent=5 // pred_check
        %p330 = pneg %p329
      $region38: #{tpu_custom_call.1} parent=5 // pred_check_branch
        %332 = sbr.rel (%p330) target = $region40
      $region39: #{tpu_custom_call.1} parent=5 // pred_region
        // Predicated region
        $region41: #{tpu_custom_call.1} parent=39 // pred_check
          %p333 = pneg %p46
        $region42: #{tpu_custom_call.1} parent=39 // pred_check_branch
          %335 = sbr.rel (%p333) target = $region44
        $region43: #{tpu_custom_call.1} parent=39 // pred_region
          %s336 = sand.u32 %s36, 1
          %s337 = scalar_lea.sflag [#allocation3], %s336
          %s338 = sand.u32 %s36, 1
          %s339 = smul.addr %s338, 32
          %s340 = scalar_lea.vmem [#allocation2], %s339
          %s341 = smul.u32 4, %s26
          %s343 = ssub.s32 512, 512
          %344 = vsyncadd %s337, %s343
          %s345 = smul.addr %s341, 128
          %s346 = scalar_lea.hbm %s0, %s345
          %s347 = sshll.u32 %s340, 4
          %s348 = int_to_ptr.vmem [resolvable:$true] %s347
          %353 = dma.hbm_to_vmem [thread:$0]  %s346, 512, %s348, %s337, 128, 128, 8
        $region44: #{tpu_custom_call.1} parent=39 // pred_fallthru
          _
        // Predicated region
        $region45: #{tpu_custom_call.1} parent=39 // pred_check
          %p354 = pneg %p72
        $region46: #{tpu_custom_call.1} parent=39 // pred_check_branch
          %356 = sbr.rel (%p354) target = $region48
        $region47: #{tpu_custom_call.1} parent=39 // pred_region
          %s357 = sand.u32 %s26, 1
          %s358 = scalar_lea.sflag [#allocation6], %s357
          %s359 = sand.u32 %s62, 1
          %s360 = smul.addr %s359, 32
          %s361 = scalar_lea.vmem [#allocation5], %s360
          %s362 = smul.u32 4, %s26
          %s364 = ssub.s32 512, 512
          %365 = vsyncadd %s358, %s364
          %s366 = smul.addr %s362, 128
          %s367 = scalar_lea.hbm %s1, %s366
          %s368 = sshll.u32 %s361, 4
          %s369 = int_to_ptr.vmem [resolvable:$true] %s368
          %374 = dma.hbm_to_vmem [thread:$0]  %s367, 512, %s369, %s358, 128, 128, 8
        $region48: #{tpu_custom_call.1} parent=39 // pred_fallthru
          _
        // Predicated region
        $region49: #{tpu_custom_call.1} parent=39 // pred_check
          %p375 = pneg %p98
        $region50: #{tpu_custom_call.1} parent=39 // pred_check_branch
          %377 = sbr.rel (%p375) target = $region52
        $region51: #{tpu_custom_call.1} parent=39 // pred_region
          %s378 = sand.u32 %s26, 1
          %s379 = scalar_lea.sflag [#allocation6], %s378
          %s380 = sand.u32 %s88, 1
          %s381 = smul.addr %s380, 32
          %s382 = scalar_lea.vmem [#allocation7], %s381
          %s383 = smul.u32 4, %s26
          %s385 = ssub.s32 512, 512
          %386 = vsyncadd %s379, %s385
          %s387 = smul.addr %s383, 128
          %s388 = scalar_lea.hbm %s2, %s387
          %s389 = sshll.u32 %s382, 4
          %s390 = int_to_ptr.vmem [resolvable:$true] %s389
          %395 = dma.hbm_to_vmem [thread:$0]  %s388, 512, %s390, %s379, 128, 128, 8
        $region52: #{tpu_custom_call.1} parent=39 // pred_fallthru
          _
      $region40: #{tpu_custom_call.1} parent=5 // pred_fallthru
        _
      %p396 = scmp.le.s32.totalorder 1, %s26
      %p397 = scmp.lt.s32.totalorder %s26, 3
      %p398 = pnand %p396, %p397
      %p399 = pneg %p398
      // Predicated region
      $region53: #{tpu_custom_call.1} parent=5 // pred_check
        _
      $region54: #{tpu_custom_call.1} parent=5 // pred_check_branch
        %401 = sbr.rel (%p398) target = $region56
      $region55: #{tpu_custom_call.1} parent=5 // pred_region
        %s402 = ssub.s32 %s26, 1
        %s403 = sand.u32 %s39, 1
        %s404 = scalar_lea.sflag [#allocation3], %s403
        %s405 = sand.u32 %s39, 1
        %s406 = smul.addr %s405, 32
        %s407 = scalar_lea.vmem [#allocation2], %s406
        // Predicated region
        $region57: #{tpu_custom_call.1} parent=55 // pred_check
          %p408 = pneg %p52
        $region58: #{tpu_custom_call.1} parent=55 // pred_check_branch
          %410 = sbr.rel (%p408) target = $region60
        $region59: #{tpu_custom_call.1} parent=55 // pred_region
          %411 = dma.done %s404, 512
        $region60: #{tpu_custom_call.1} parent=55 // pred_fallthru
          _
        %s412 = sand.u32 %s31, 1
        %s413 = scalar_lea.sflag [#allocation6], %s412
        %s414 = sand.u32 %s65, 1
        %s415 = smul.addr %s414, 32
        %s416 = scalar_lea.vmem [#allocation5], %s415
        // Predicated region
        $region61: #{tpu_custom_call.1} parent=55 // pred_check
          %p417 = pneg %p78
        $region62: #{tpu_custom_call.1} parent=55 // pred_check_branch
          %419 = sbr.rel (%p417) target = $region64
        $region63: #{tpu_custom_call.1} parent=55 // pred_region
          %420 = dma.done %s413, 512
        $region64: #{tpu_custom_call.1} parent=55 // pred_fallthru
          _
        %s421 = sand.u32 %s31, 1
        %s422 = scalar_lea.sflag [#allocation6], %s421
        %s423 = sand.u32 %s91, 1
        %s424 = smul.addr %s423, 32
        %s425 = scalar_lea.vmem [#allocation7], %s424
        // Predicated region
        $region65: #{tpu_custom_call.1} parent=55 // pred_check
          %p426 = pneg %p104
        $region66: #{tpu_custom_call.1} parent=55 // pred_check_branch
          %428 = sbr.rel (%p426) target = $region68
        $region67: #{tpu_custom_call.1} parent=55 // pred_region
          %429 = dma.done %s422, 512
        $region68: #{tpu_custom_call.1} parent=55 // pred_fallthru
          _
        // Predicated region
        $region69: #{tpu_custom_call.1} parent=55 // pred_check
          %p430 = pneg %p125
        $region70: #{tpu_custom_call.1} parent=55 // pred_check_branch
          %432 = sbr.rel (%p430) target = $region72
        $region71: #{tpu_custom_call.1} parent=55 // pred_region
          %433 = dma.done [#allocation9], 512
        $region72: #{tpu_custom_call.1} parent=55 // pred_fallthru
          _
        // Predicated region
        $region73: #{tpu_custom_call.1} parent=55 // pred_check
          %p434 = pneg %p167
        $region74: #{tpu_custom_call.1} parent=55 // pred_check_branch
          %436 = sbr.rel (%p434) target = $region76
        $region75: #{tpu_custom_call.1} parent=55 // pred_region
          %437 = dma.done [#allocation9], 768
        $region76: #{tpu_custom_call.1} parent=55 // pred_fallthru
          _
        // Predicated region
        $region77: #{tpu_custom_call.1} parent=55 // pred_check
          %p438 = pneg %p188
        $region78: #{tpu_custom_call.1} parent=55 // pred_check_branch
          %440 = sbr.rel (%p438) target = $region80
        $region79: #{tpu_custom_call.1} parent=55 // pred_region
          %441 = dma.done [#allocation12], 768
        $region80: #{tpu_custom_call.1} parent=55 // pred_fallthru
          _
        // Predicated region
        $region81: #{tpu_custom_call.1} parent=55 // pred_check
          %p442 = pneg %p209
        $region82: #{tpu_custom_call.1} parent=55 // pred_check_branch
          %444 = sbr.rel (%p442) target = $region84
        $region83: #{tpu_custom_call.1} parent=55 // pred_region
          %445 = dma.done [#allocation12], 768
        $region84: #{tpu_custom_call.1} parent=55 // pred_fallthru
          _
        %s446 = sand.u32 %s39, 1
        %s447 = scalar_lea.sflag [#allocation3], %s446
        %s448 = sand.u32 %s39, 1
        %s449 = smul.addr %s448, 32
        %s450 = scalar_lea.vmem [#allocation2], %s449
        %p451 = pneg %p52
        %p452 = pneg %p49
        %s453 = sand.u32 %s31, 1
        %s454 = scalar_lea.sflag [#allocation6], %s453
        %s455 = sand.u32 %s65, 1
        %s456 = smul.addr %s455, 32
        %s457 = scalar_lea.vmem [#allocation5], %s456
        %p458 = pneg %p78
        %p459 = pneg %p75
        %s460 = sand.u32 %s31, 1
        %s461 = scalar_lea.sflag [#allocation6], %s460
        %s462 = sand.u32 %s91, 1
        %s463 = smul.addr %s462, 32
        %s464 = scalar_lea.vmem [#allocation7], %s463
        %p465 = pneg %p104
        %p466 = pneg %p101
        %p467 = pneg %p125
        %p468 = pneg %p122
        %p469 = pneg %p146
        %p470 = pneg %p143
        %p471 = pneg %p167
        %p472 = pneg %p164
        %p473 = pneg %p188
        %p474 = pneg %p185
        %p475 = pneg %p209
        %p476 = pneg %p206
        %p477 = pneg %p230
        %p478 = pneg %p227
        %p479 = pneg %p256
        %p480 = pneg %p253
        %s481 = sand.u32 %s243, 1
        %s482 = scalar_lea.sflag [#allocation4], %s481
        %s483 = sand.u32 %s243, 1
        %s484 = smul.addr %s483, 32
        %s485 = scalar_lea.vmem [#allocation14], %s484
        %s486 = smul.u32 4, %s31
        %s487 = smul.u32 4, %s31
        %s488 = smul.u32 4, %s31
        %s489 = smul.u32 4, %s31
        %v490 = vld [vmem:[%s407] sm:$0xff]
        %v491 = vld [vmem:[%s407 + $0x8] sm:$0xff]
        %v492 = vld [vmem:[%s407 + $0x10] sm:$0xff]
        %v493 = vld [vmem:[%s407 + $0x18] sm:$0xff]
        %v494 = vld [vmem:[%s416] sm:$0xff]
        %v495 = vld [vmem:[%s416 + $0x8] sm:$0xff]
        %v496 = vld [vmem:[%s416 + $0x10] sm:$0xff]
        %v497 = vld [vmem:[%s416 + $0x18] sm:$0xff]
        %v498 = vld [vmem:[#allocation8] sm:$0xff]
        %v499 = vld [vmem:[#allocation8 + $0x8] sm:$0xff]
        %s500 = scalar_lea.vmem [#allocation8], 16
        %v501 = vld [vmem:[%s500] sm:$0xff]
        %v502 = vld [vmem:[%s500 + $0x8] sm:$0xff]
        %v503 = vld [vmem:[%s4] sm:$0x1]
        %s504 = scalar_lea.vmem %s4, 1
        %v505 = vld [vmem:[%s504] sm:$0x1]
        %v506 = vld [vmem:[#allocation10] sm:$0xff]
        %v507 = vld [vmem:[#allocation10 + $0x8] sm:$0xff]
        %s508 = scalar_lea.vmem [#allocation10], 16
        %v509 = vld [vmem:[%s508] sm:$0xff]
        %v510 = vld [vmem:[%s508 + $0x8] sm:$0xff]
        %s511 = scalar_lea.vmem [#allocation10], 32
        %v512 = vld [vmem:[%s511] sm:$0xff]
        %v513 = vld [vmem:[%s511 + $0x8] sm:$0xff]
        %v514 = vld [vmem:[#allocation11] sm:$0xff]
        %v515 = vld [vmem:[#allocation11 + $0x8] sm:$0xff]
        %s516 = scalar_lea.vmem [#allocation11], 16
        %v517 = vld [vmem:[%s516] sm:$0xff]
        %v518 = vld [vmem:[%s516 + $0x8] sm:$0xff]
        %s519 = scalar_lea.vmem [#allocation11], 32
        %v520 = vld [vmem:[%s519] sm:$0xff]
        %v521 = vld [vmem:[%s519 + $0x8] sm:$0xff]
        %v522 = vld [vmem:[#allocation13] sm:$0xff]
        %v523 = vld [vmem:[#allocation13 + $0x8] sm:$0xff]
        %s524 = scalar_lea.vmem [#allocation13], 16
        %v525 = vld [vmem:[%s524] sm:$0xff]
        %v526 = vld [vmem:[%s524 + $0x8] sm:$0xff]
        %s527 = scalar_lea.vmem [#allocation13], 32
        %v528 = vld [vmem:[%s527] sm:$0xff]
        %v529 = vld [vmem:[%s527 + $0x8] sm:$0xff]
        %v530 = vld [vmem:[%s8] sm:$0x1]
        %s531 = scalar_lea.vmem %s8, 1
        %v532 = vld [vmem:[%s531] sm:$0x1]
        %s533 = scalar_lea.vmem %s8, 2
        %v534 = vld [vmem:[%s533] sm:$0x1]
        %s535 = scalar_lea.vmem %s8, 3
        %v536 = vld [vmem:[%s535] sm:$0x1]
        %v537 = vld [vmem:[%s425] sm:$0xff]
        %v538 = vld [vmem:[%s425 + $0x8] sm:$0xff]
        %v539 = vld [vmem:[%s425 + $0x10] sm:$0xff]
        %v540 = vld [vmem:[%s425 + $0x18] sm:$0xff]
        %v542 = vlaneseq
        %v543 = vshrl.u32 %v542, 7
        %v544 = vsub.s32 0, %v543
        %v545 = vrot.slane %v503, %v544
        %vm547 = vcmask 130048
        %v549 = vsel %vm547, %v537, 0
        %v552 = vsel %vm547, %v538, 0
        %v555 = vsel %vm547, %v539, 0
        %v558 = vsel %vm547, %v540, 0
        %560 = vmatprep.subr.mxu0 0.0
        %561 = vmatpush1.msra.mxu0 0.0
        %562 = vmatprep.subr.mxu0 0.0
        %563 = vmatpush1.msra.mxu0 0.0
        %564 = vmatprep.subr.mxu0 0.0
        %565 = vmatpush1.msra.mxu0 0.0
        %566 = vmatprep.subr.mxu0 0.0
        %567 = vmatpush1.msra.mxu0 0.0
        %568 = vmatprep.subr.mxu0 0.0
        %569 = vmatpush1.msra.mxu0 0.0
        %570 = vmatprep.subr.mxu0 0.0
        %571 = vmatpush1.msra.mxu0 0.0
        %572 = vmatprep.subr.mxu0 0.0
        %573 = vmatpush1.msra.mxu0 0.0
        %574 = vmatprep.subr.mxu0 0.0
        %575 = vmatpush1.msra.mxu0 0.0
        %576 = vmatprep.subr.mxu0 0.0
        %577 = vmatpush1.msra.mxu0 0.0
        %578 = vmatprep.subr.mxu0 0.0
        %579 = vmatpush1.msra.mxu0 0.0
        %580 = vmatprep.subr.mxu0 0.0
        %581 = vmatpush1.msra.mxu0 0.0
        %582 = vmatprep.subr.mxu0 0.0
        %583 = vmatpush1.msra.mxu0 0.0
        %584 = vmatprep.subr.mxu0 0.0
        %585 = vmatpush1.msra.mxu0 0.0
        %586 = vmatprep.subr.mxu0 0.0
        %587 = vmatpush1.msra.mxu0 0.0
        %588 = vmatprep.subr.mxu0 0.0
        %589 = vmatpush1.msra.mxu0 %v499
        %590 = vmatprep.subr.mxu0 0.0
        %591 = vmatpush1.msra.mxu0 %v498
        %592 = vmatprep.subr.mxu0 0.0
        %593 = vmatpush2.msra.mxu0 0.0
        %594 = vmatprep.subr.mxu0 0.0
        %595 = vmatpush2.msra.mxu0 0.0
        %596 = vmatprep.subr.mxu0 0.0
        %597 = vmatpush2.msra.mxu0 0.0
        %598 = vmatprep.subr.mxu0 0.0
        %599 = vmatpush2.msra.mxu0 0.0
        %600 = vmatprep.subr.mxu0 0.0
        %601 = vmatpush2.msra.mxu0 0.0
        %602 = vmatprep.subr.mxu0 0.0
        %603 = vmatpush2.msra.mxu0 0.0
        %604 = vmatprep.subr.mxu0 0.0
        %605 = vmatpush2.msra.mxu0 0.0
        %606 = vmatprep.subr.mxu0 0.0
        %607 = vmatpush2.msra.mxu0 0.0
        %608 = vmatprep.subr.mxu0 0.0
        %609 = vmatpush2.msra.mxu0 0.0
        %610 = vmatprep.subr.mxu0 0.0
        %611 = vmatpush2.msra.mxu0 0.0
        %612 = vmatprep.subr.mxu0 0.0
        %613 = vmatpush2.msra.mxu0 0.0
        %614 = vmatprep.subr.mxu0 0.0
        %615 = vmatpush2.msra.mxu0 0.0
        %616 = vmatprep.subr.mxu0 0.0
        %617 = vmatpush2.msra.mxu0 0.0
        %618 = vmatprep.subr.mxu0 0.0
        %619 = vmatpush2.msra.mxu0 0.0
        %620 = vmatprep.subr.mxu0 0.0
        %621 = vmatpush2.msra.mxu0 0.0
        %622 = vmatprep.subr.mxu0 0.0
        %623 = vmatpush2.msra.mxu0 0.0
        %624 = vmatprep.mubr.f32.mxu0 0.0
        %625 = vmatmul.mubr.f32.gmra.mxu0 %v549
        %v626 = vpop.f32.mrf.mxu0
        %v627 = vadd.f32 %v545, %v626
        %v628 = vpop.f32.mrf.mxu0
        %629 = vmatprep.mubr.f32.mxu0 0.0
        %630 = vmatmul.mubr.f32.gmra.mxu0 %v552
        %v631 = vpop.f32.mrf.mxu0
        %v632 = vadd.f32 %v545, %v631
        %v633 = vpop.f32.mrf.mxu0
        %634 = vmatprep.mubr.f32.mxu0 0.0
        %635 = vmatmul.mubr.f32.gmra.mxu0 %v555
        %v636 = vpop.f32.mrf.mxu0
        %v637 = vadd.f32 %v545, %v636
        %v638 = vpop.f32.mrf.mxu0
        %639 = vmatprep.mubr.f32.mxu0 0.0
        %640 = vmatmul.mubr.f32.gmra.mxu0 %v558
        %v641 = vpop.f32.mrf.mxu0
        %v642 = vadd.f32 %v545, %v641
        %v643 = vpop.f32.mrf.mxu0
        %644 = vdwg.mxu0
        %v646 = vlaneseq
        %v647 = vshrl.u32 %v646, 7
        %v648 = vsub.s32 0, %v647
        %v649 = vrot.slane %v505, %v648
        %651 = vmatprep.subr.mxu0 0.0
        %652 = vmatpush1.msra.mxu0 0.0
        %653 = vmatprep.subr.mxu0 0.0
        %654 = vmatpush1.msra.mxu0 0.0
        %655 = vmatprep.subr.mxu0 0.0
        %656 = vmatpush1.msra.mxu0 0.0
        %657 = vmatprep.subr.mxu0 0.0
        %658 = vmatpush1.msra.mxu0 0.0
        %659 = vmatprep.subr.mxu0 0.0
        %660 = vmatpush1.msra.mxu0 0.0
        %661 = vmatprep.subr.mxu0 0.0
        %662 = vmatpush1.msra.mxu0 0.0
        %663 = vmatprep.subr.mxu0 0.0
        %664 = vmatpush1.msra.mxu0 0.0
        %665 = vmatprep.subr.mxu0 0.0
        %666 = vmatpush1.msra.mxu0 0.0
        %667 = vmatprep.subr.mxu0 0.0
        %668 = vmatpush1.msra.mxu0 0.0
        %669 = vmatprep.subr.mxu0 0.0
        %670 = vmatpush1.msra.mxu0 0.0
        %671 = vmatprep.subr.mxu0 0.0
        %672 = vmatpush1.msra.mxu0 0.0
        %673 = vmatprep.subr.mxu0 0.0
        %674 = vmatpush1.msra.mxu0 0.0
        %675 = vmatprep.subr.mxu0 0.0
        %676 = vmatpush1.msra.mxu0 0.0
        %677 = vmatprep.subr.mxu0 0.0
        %678 = vmatpush1.msra.mxu0 0.0
        %679 = vmatprep.subr.mxu0 0.0
        %680 = vmatpush1.msra.mxu0 %v502
        %681 = vmatprep.subr.mxu0 0.0
        %682 = vmatpush1.msra.mxu0 %v501
        %683 = vmatprep.subr.mxu0 0.0
        %684 = vmatpush2.msra.mxu0 0.0
        %685 = vmatprep.subr.mxu0 0.0
        %686 = vmatpush2.msra.mxu0 0.0
        %687 = vmatprep.subr.mxu0 0.0
        %688 = vmatpush2.msra.mxu0 0.0
        %689 = vmatprep.subr.mxu0 0.0
        %690 = vmatpush2.msra.mxu0 0.0
        %691 = vmatprep.subr.mxu0 0.0
        %692 = vmatpush2.msra.mxu0 0.0
        %693 = vmatprep.subr.mxu0 0.0
        %694 = vmatpush2.msra.mxu0 0.0
        %695 = vmatprep.subr.mxu0 0.0
        %696 = vmatpush2.msra.mxu0 0.0
        %697 = vmatprep.subr.mxu0 0.0
        %698 = vmatpush2.msra.mxu0 0.0
        %699 = vmatprep.subr.mxu0 0.0
        %700 = vmatpush2.msra.mxu0 0.0
        %701 = vmatprep.subr.mxu0 0.0
        %702 = vmatpush2.msra.mxu0 0.0
        %703 = vmatprep.subr.mxu0 0.0
        %704 = vmatpush2.msra.mxu0 0.0
        %705 = vmatprep.subr.mxu0 0.0
        %706 = vmatpush2.msra.mxu0 0.0
        %707 = vmatprep.subr.mxu0 0.0
        %708 = vmatpush2.msra.mxu0 0.0
        %709 = vmatprep.subr.mxu0 0.0
        %710 = vmatpush2.msra.mxu0 0.0
        %711 = vmatprep.subr.mxu0 0.0
        %712 = vmatpush2.msra.mxu0 0.0
        %713 = vmatprep.subr.mxu0 0.0
        %714 = vmatpush2.msra.mxu0 0.0
        %715 = vmatprep.mubr.f32.mxu0 0.0
        %716 = vmatmul.mubr.f32.gmra.mxu0 %v549
        %v717 = vpop.f32.mrf.mxu0
        %v718 = vadd.f32 %v649, %v717
        %v719 = vpop.f32.mrf.mxu0
        %720 = vmatprep.mubr.f32.mxu0 0.0
        %721 = vmatmul.mubr.f32.gmra.mxu0 %v552
        %v722 = vpop.f32.mrf.mxu0
        %v723 = vadd.f32 %v649, %v722
        %v724 = vpop.f32.mrf.mxu0
        %725 = vmatprep.mubr.f32.mxu0 0.0
        %726 = vmatmul.mubr.f32.gmra.mxu0 %v555
        %v727 = vpop.f32.mrf.mxu0
        %v728 = vadd.f32 %v649, %v727
        %v729 = vpop.f32.mrf.mxu0
        %730 = vmatprep.mubr.f32.mxu0 0.0
        %731 = vmatmul.mubr.f32.gmra.mxu0 %v558
        %v732 = vpop.f32.mrf.mxu0
        %v733 = vadd.f32 %v649, %v732
        %v734 = vpop.f32.mrf.mxu0
        %735 = vdwg.mxu0
        %vm736 = vcmask 64512
        %v738 = vsel %vm736, %v490, 0
        %740 = vmatprep.subr.mxu0 0.0
        %741 = vmatpush1.msra.mxu0 0.0
        %742 = vmatprep.subr.mxu0 0.0
        %743 = vmatpush1.msra.mxu0 0.0
        %744 = vmatprep.subr.mxu0 0.0
        %745 = vmatpush1.msra.mxu0 0.0
        %746 = vmatprep.subr.mxu0 0.0
        %747 = vmatpush1.msra.mxu0 0.0
        %748 = vmatprep.subr.mxu0 0.0
        %749 = vmatpush1.msra.mxu0 0.0
        %750 = vmatprep.subr.mxu0 0.0
        %751 = vmatpush1.msra.mxu0 0.0
        %752 = vmatprep.subr.mxu0 0.0
        %753 = vmatpush1.msra.mxu0 0.0
        %754 = vmatprep.subr.mxu0 0.0
        %755 = vmatpush1.msra.mxu0 0.0
        %756 = vmatprep.subr.mxu0 0.0
        %757 = vmatpush1.msra.mxu0 0.0
        %758 = vmatprep.subr.mxu0 0.0
        %759 = vmatpush1.msra.mxu0 0.0
        %760 = vmatprep.subr.mxu0 0.0
        %761 = vmatpush1.msra.mxu0 0.0
        %762 = vmatprep.subr.mxu0 0.0
        %763 = vmatpush1.msra.mxu0 0.0
        %764 = vmatprep.subr.mxu0 0.0
        %765 = vmatpush1.msra.mxu0 0.0
        %766 = vmatprep.subr.mxu0 0.0
        %767 = vmatpush1.msra.mxu0 0.0
        %768 = vmatprep.subr.mxu0 0.0
        %769 = vmatpush1.msra.mxu0 0.0
        %770 = vmatprep.subr.mxu0 0.0
        %771 = vmatpush1.msra.mxu0 %v627
        %772 = vmatprep.subr.mxu0 0.0
        %773 = vmatpush2.msra.mxu0 0.0
        %774 = vmatprep.subr.mxu0 0.0
        %775 = vmatpush2.msra.mxu0 0.0
        %776 = vmatprep.subr.mxu0 0.0
        %777 = vmatpush2.msra.mxu0 0.0
        %778 = vmatprep.subr.mxu0 0.0
        %779 = vmatpush2.msra.mxu0 0.0
        %780 = vmatprep.subr.mxu0 0.0
        %781 = vmatpush2.msra.mxu0 0.0
        %782 = vmatprep.subr.mxu0 0.0
        %783 = vmatpush2.msra.mxu0 0.0
        %784 = vmatprep.subr.mxu0 0.0
        %785 = vmatpush2.msra.mxu0 0.0
        %786 = vmatprep.subr.mxu0 0.0
        %787 = vmatpush2.msra.mxu0 0.0
        %788 = vmatprep.subr.mxu0 0.0
        %789 = vmatpush2.msra.mxu0 0.0
        %790 = vmatprep.subr.mxu0 0.0
        %791 = vmatpush2.msra.mxu0 0.0
        %792 = vmatprep.subr.mxu0 0.0
        %793 = vmatpush2.msra.mxu0 0.0
        %794 = vmatprep.subr.mxu0 0.0
        %795 = vmatpush2.msra.mxu0 0.0
        %796 = vmatprep.subr.mxu0 0.0
        %797 = vmatpush2.msra.mxu0 0.0
        %798 = vmatprep.subr.mxu0 0.0
        %799 = vmatpush2.msra.mxu0 0.0
        %800 = vmatprep.subr.mxu0 0.0
        %801 = vmatpush2.msra.mxu0 0.0
        %802 = vmatprep.subr.mxu0 0.0
        %803 = vmatpush2.msra.mxu0 0.0
        %804 = vmatprep.mubr.f32.mxu0 0.0
        %805 = vmatmul.mubr.f32.gmra.mxu0 %v738
        %v806 = vpop.f32.mrf.mxu0
        %v807 = vadd.f32 0.0, %v806
        %v808 = vpop.f32.mrf.mxu0
        %809 = vdwg.mxu0
        %v811 = vsel %vm736, %v491, 0
        %813 = vmatprep.subr.mxu0 0.0
        %814 = vmatpush1.msra.mxu0 0.0
        %815 = vmatprep.subr.mxu0 0.0
        %816 = vmatpush1.msra.mxu0 0.0
        %817 = vmatprep.subr.mxu0 0.0
        %818 = vmatpush1.msra.mxu0 0.0
        %819 = vmatprep.subr.mxu0 0.0
        %820 = vmatpush1.msra.mxu0 0.0
        %821 = vmatprep.subr.mxu0 0.0
        %822 = vmatpush1.msra.mxu0 0.0
        %823 = vmatprep.subr.mxu0 0.0
        %824 = vmatpush1.msra.mxu0 0.0
        %825 = vmatprep.subr.mxu0 0.0
        %826 = vmatpush1.msra.mxu0 0.0
        %827 = vmatprep.subr.mxu0 0.0
        %828 = vmatpush1.msra.mxu0 0.0
        %829 = vmatprep.subr.mxu0 0.0
        %830 = vmatpush1.msra.mxu0 0.0
        %831 = vmatprep.subr.mxu0 0.0
        %832 = vmatpush1.msra.mxu0 0.0
        %833 = vmatprep.subr.mxu0 0.0
        %834 = vmatpush1.msra.mxu0 0.0
        %835 = vmatprep.subr.mxu0 0.0
        %836 = vmatpush1.msra.mxu0 0.0
        %837 = vmatprep.subr.mxu0 0.0
        %838 = vmatpush1.msra.mxu0 0.0
        %839 = vmatprep.subr.mxu0 0.0
        %840 = vmatpush1.msra.mxu0 0.0
        %841 = vmatprep.subr.mxu0 0.0
        %842 = vmatpush1.msra.mxu0 0.0
        %843 = vmatprep.subr.mxu0 0.0
        %844 = vmatpush1.msra.mxu0 %v632
        %845 = vmatprep.subr.mxu0 0.0
        %846 = vmatpush2.msra.mxu0 0.0
        %847 = vmatprep.subr.mxu0 0.0
        %848 = vmatpush2.msra.mxu0 0.0
        %849 = vmatprep.subr.mxu0 0.0
        %850 = vmatpush2.msra.mxu0 0.0
        %851 = vmatprep.subr.mxu0 0.0
        %852 = vmatpush2.msra.mxu0 0.0
        %853 = vmatprep.subr.mxu0 0.0
        %854 = vmatpush2.msra.mxu0 0.0
        %855 = vmatprep.subr.mxu0 0.0
        %856 = vmatpush2.msra.mxu0 0.0
        %857 = vmatprep.subr.mxu0 0.0
        %858 = vmatpush2.msra.mxu0 0.0
        %859 = vmatprep.subr.mxu0 0.0
        %860 = vmatpush2.msra.mxu0 0.0
        %861 = vmatprep.subr.mxu0 0.0
        %862 = vmatpush2.msra.mxu0 0.0
        %863 = vmatprep.subr.mxu0 0.0
        %864 = vmatpush2.msra.mxu0 0.0
        %865 = vmatprep.subr.mxu0 0.0
        %866 = vmatpush2.msra.mxu0 0.0
        %867 = vmatprep.subr.mxu0 0.0
        %868 = vmatpush2.msra.mxu0 0.0
        %869 = vmatprep.subr.mxu0 0.0
        %870 = vmatpush2.msra.mxu0 0.0
        %871 = vmatprep.subr.mxu0 0.0
        %872 = vmatpush2.msra.mxu0 0.0
        %873 = vmatprep.subr.mxu0 0.0
        %874 = vmatpush2.msra.mxu0 0.0
        %875 = vmatprep.subr.mxu0 0.0
        %876 = vmatpush2.msra.mxu0 0.0
        %877 = vmatprep.mubr.f32.mxu0 0.0
        %878 = vmatmul.mubr.f32.gmra.mxu0 %v811
        %v879 = vpop.f32.mrf.mxu0
        %v880 = vadd.f32 0.0, %v879
        %v881 = vpop.f32.mrf.mxu0
        %882 = vdwg.mxu0
        %v884 = vsel %vm736, %v492, 0
        %886 = vmatprep.subr.mxu0 0.0
        %887 = vmatpush1.msra.mxu0 0.0
        %888 = vmatprep.subr.mxu0 0.0
        %889 = vmatpush1.msra.mxu0 0.0
        %890 = vmatprep.subr.mxu0 0.0
        %891 = vmatpush1.msra.mxu0 0.0
        %892 = vmatprep.subr.mxu0 0.0
        %893 = vmatpush1.msra.mxu0 0.0
        %894 = vmatprep.subr.mxu0 0.0
        %895 = vmatpush1.msra.mxu0 0.0
        %896 = vmatprep.subr.mxu0 0.0
        %897 = vmatpush1.msra.mxu0 0.0
        %898 = vmatprep.subr.mxu0 0.0
        %899 = vmatpush1.msra.mxu0 0.0
        %900 = vmatprep.subr.mxu0 0.0
        %901 = vmatpush1.msra.mxu0 0.0
        %902 = vmatprep.subr.mxu0 0.0
        %903 = vmatpush1.msra.mxu0 0.0
        %904 = vmatprep.subr.mxu0 0.0
        %905 = vmatpush1.msra.mxu0 0.0
        %906 = vmatprep.subr.mxu0 0.0
        %907 = vmatpush1.msra.mxu0 0.0
        %908 = vmatprep.subr.mxu0 0.0
        %909 = vmatpush1.msra.mxu0 0.0
        %910 = vmatprep.subr.mxu0 0.0
        %911 = vmatpush1.msra.mxu0 0.0
        %912 = vmatprep.subr.mxu0 0.0
        %913 = vmatpush1.msra.mxu0 0.0
        %914 = vmatprep.subr.mxu0 0.0
        %915 = vmatpush1.msra.mxu0 0.0
        %916 = vmatprep.subr.mxu0 0.0
        %917 = vmatpush1.msra.mxu0 %v637
        %918 = vmatprep.subr.mxu0 0.0
        %919 = vmatpush2.msra.mxu0 0.0
        %920 = vmatprep.subr.mxu0 0.0
        %921 = vmatpush2.msra.mxu0 0.0
        %922 = vmatprep.subr.mxu0 0.0
        %923 = vmatpush2.msra.mxu0 0.0
        %924 = vmatprep.subr.mxu0 0.0
        %925 = vmatpush2.msra.mxu0 0.0
        %926 = vmatprep.subr.mxu0 0.0
        %927 = vmatpush2.msra.mxu0 0.0
        %928 = vmatprep.subr.mxu0 0.0
        %929 = vmatpush2.msra.mxu0 0.0
        %930 = vmatprep.subr.mxu0 0.0
        %931 = vmatpush2.msra.mxu0 0.0
        %932 = vmatprep.subr.mxu0 0.0
        %933 = vmatpush2.msra.mxu0 0.0
        %934 = vmatprep.subr.mxu0 0.0
        %935 = vmatpush2.msra.mxu0 0.0
        %936 = vmatprep.subr.mxu0 0.0
        %937 = vmatpush2.msra.mxu0 0.0
        %938 = vmatprep.subr.mxu0 0.0
        %939 = vmatpush2.msra.mxu0 0.0
        %940 = vmatprep.subr.mxu0 0.0
        %941 = vmatpush2.msra.mxu0 0.0
        %942 = vmatprep.subr.mxu0 0.0
        %943 = vmatpush2.msra.mxu0 0.0
        %944 = vmatprep.subr.mxu0 0.0
        %945 = vmatpush2.msra.mxu0 0.0
        %946 = vmatprep.subr.mxu0 0.0
        %947 = vmatpush2.msra.mxu0 0.0
        %948 = vmatprep.subr.mxu0 0.0
        %949 = vmatpush2.msra.mxu0 0.0
        %950 = vmatprep.mubr.f32.mxu0 0.0
        %951 = vmatmul.mubr.f32.gmra.mxu0 %v884
        %v952 = vpop.f32.mrf.mxu0
        %v953 = vadd.f32 0.0, %v952
        %v954 = vpop.f32.mrf.mxu0
        %955 = vdwg.mxu0
        %v957 = vsel %vm736, %v493, 0
        %959 = vmatprep.subr.mxu0 0.0
        %960 = vmatpush1.msra.mxu0 0.0
        %961 = vmatprep.subr.mxu0 0.0
        %962 = vmatpush1.msra.mxu0 0.0
        %963 = vmatprep.subr.mxu0 0.0
        %964 = vmatpush1.msra.mxu0 0.0
        %965 = vmatprep.subr.mxu0 0.0
        %966 = vmatpush1.msra.mxu0 0.0
        %967 = vmatprep.subr.mxu0 0.0
        %968 = vmatpush1.msra.mxu0 0.0
        %969 = vmatprep.subr.mxu0 0.0
        %970 = vmatpush1.msra.mxu0 0.0
        %971 = vmatprep.subr.mxu0 0.0
        %972 = vmatpush1.msra.mxu0 0.0
        %973 = vmatprep.subr.mxu0 0.0
        %974 = vmatpush1.msra.mxu0 0.0
        %975 = vmatprep.subr.mxu0 0.0
        %976 = vmatpush1.msra.mxu0 0.0
        %977 = vmatprep.subr.mxu0 0.0
        %978 = vmatpush1.msra.mxu0 0.0
        %979 = vmatprep.subr.mxu0 0.0
        %980 = vmatpush1.msra.mxu0 0.0
        %981 = vmatprep.subr.mxu0 0.0
        %982 = vmatpush1.msra.mxu0 0.0
        %983 = vmatprep.subr.mxu0 0.0
        %984 = vmatpush1.msra.mxu0 0.0
        %985 = vmatprep.subr.mxu0 0.0
        %986 = vmatpush1.msra.mxu0 0.0
        %987 = vmatprep.subr.mxu0 0.0
        %988 = vmatpush1.msra.mxu0 0.0
        %989 = vmatprep.subr.mxu0 0.0
        %990 = vmatpush1.msra.mxu0 %v642
        %991 = vmatprep.subr.mxu0 0.0
        %992 = vmatpush2.msra.mxu0 0.0
        %993 = vmatprep.subr.mxu0 0.0
        %994 = vmatpush2.msra.mxu0 0.0
        %995 = vmatprep.subr.mxu0 0.0
        %996 = vmatpush2.msra.mxu0 0.0
        %997 = vmatprep.subr.mxu0 0.0
        %998 = vmatpush2.msra.mxu0 0.0
        %999 = vmatprep.subr.mxu0 0.0
        %1000 = vmatpush2.msra.mxu0 0.0
        %1001 = vmatprep.subr.mxu0 0.0
        %1002 = vmatpush2.msra.mxu0 0.0
        %1003 = vmatprep.subr.mxu0 0.0
        %1004 = vmatpush2.msra.mxu0 0.0
        %1005 = vmatprep.subr.mxu0 0.0
        %1006 = vmatpush2.msra.mxu0 0.0
        %1007 = vmatprep.subr.mxu0 0.0
        %1008 = vmatpush2.msra.mxu0 0.0
        %1009 = vmatprep.subr.mxu0 0.0
        %1010 = vmatpush2.msra.mxu0 0.0
        %1011 = vmatprep.subr.mxu0 0.0
        %1012 = vmatpush2.msra.mxu0 0.0
        %1013 = vmatprep.subr.mxu0 0.0
        %1014 = vmatpush2.msra.mxu0 0.0
        %1015 = vmatprep.subr.mxu0 0.0
        %1016 = vmatpush2.msra.mxu0 0.0
        %1017 = vmatprep.subr.mxu0 0.0
        %1018 = vmatpush2.msra.mxu0 0.0
        %1019 = vmatprep.subr.mxu0 0.0
        %1020 = vmatpush2.msra.mxu0 0.0
        %1021 = vmatprep.subr.mxu0 0.0
        %1022 = vmatpush2.msra.mxu0 0.0
        %1023 = vmatprep.mubr.f32.mxu0 0.0
        %1024 = vmatmul.mubr.f32.gmra.mxu0 %v957
        %v1025 = vpop.f32.mrf.mxu0
        %v1026 = vadd.f32 0.0, %v1025
        %v1027 = vpop.f32.mrf.mxu0
        %1028 = vdwg.mxu0
        %v1030 = vsel %vm736, %v494, 0
        %1032 = vmatprep.subr.mxu0 0.0
        %1033 = vmatpush1.msra.mxu0 0.0
        %1034 = vmatprep.subr.mxu0 0.0
        %1035 = vmatpush1.msra.mxu0 0.0
        %1036 = vmatprep.subr.mxu0 0.0
        %1037 = vmatpush1.msra.mxu0 0.0
        %1038 = vmatprep.subr.mxu0 0.0
        %1039 = vmatpush1.msra.mxu0 0.0
        %1040 = vmatprep.subr.mxu0 0.0
        %1041 = vmatpush1.msra.mxu0 0.0
        %1042 = vmatprep.subr.mxu0 0.0
        %1043 = vmatpush1.msra.mxu0 0.0
        %1044 = vmatprep.subr.mxu0 0.0
        %1045 = vmatpush1.msra.mxu0 0.0
        %1046 = vmatprep.subr.mxu0 0.0
        %1047 = vmatpush1.msra.mxu0 0.0
        %1048 = vmatprep.subr.mxu0 0.0
        %1049 = vmatpush1.msra.mxu0 0.0
        %1050 = vmatprep.subr.mxu0 0.0
        %1051 = vmatpush1.msra.mxu0 0.0
        %1052 = vmatprep.subr.mxu0 0.0
        %1053 = vmatpush1.msra.mxu0 0.0
        %1054 = vmatprep.subr.mxu0 0.0
        %1055 = vmatpush1.msra.mxu0 0.0
        %1056 = vmatprep.subr.mxu0 0.0
        %1057 = vmatpush1.msra.mxu0 0.0
        %1058 = vmatprep.subr.mxu0 0.0
        %1059 = vmatpush1.msra.mxu0 0.0
        %1060 = vmatprep.subr.mxu0 0.0
        %1061 = vmatpush1.msra.mxu0 0.0
        %1062 = vmatprep.subr.mxu0 0.0
        %1063 = vmatpush1.msra.mxu0 %v718
        %1064 = vmatprep.subr.mxu0 0.0
        %1065 = vmatpush2.msra.mxu0 0.0
        %1066 = vmatprep.subr.mxu0 0.0
        %1067 = vmatpush2.msra.mxu0 0.0
        %1068 = vmatprep.subr.mxu0 0.0
        %1069 = vmatpush2.msra.mxu0 0.0
        %1070 = vmatprep.subr.mxu0 0.0
        %1071 = vmatpush2.msra.mxu0 0.0
        %1072 = vmatprep.subr.mxu0 0.0
        %1073 = vmatpush2.msra.mxu0 0.0
        %1074 = vmatprep.subr.mxu0 0.0
        %1075 = vmatpush2.msra.mxu0 0.0
        %1076 = vmatprep.subr.mxu0 0.0
        %1077 = vmatpush2.msra.mxu0 0.0
        %1078 = vmatprep.subr.mxu0 0.0
        %1079 = vmatpush2.msra.mxu0 0.0
        %1080 = vmatprep.subr.mxu0 0.0
        %1081 = vmatpush2.msra.mxu0 0.0
        %1082 = vmatprep.subr.mxu0 0.0
        %1083 = vmatpush2.msra.mxu0 0.0
        %1084 = vmatprep.subr.mxu0 0.0
        %1085 = vmatpush2.msra.mxu0 0.0
        %1086 = vmatprep.subr.mxu0 0.0
        %1087 = vmatpush2.msra.mxu0 0.0
        %1088 = vmatprep.subr.mxu0 0.0
        %1089 = vmatpush2.msra.mxu0 0.0
        %1090 = vmatprep.subr.mxu0 0.0
        %1091 = vmatpush2.msra.mxu0 0.0
        %1092 = vmatprep.subr.mxu0 0.0
        %1093 = vmatpush2.msra.mxu0 0.0
        %1094 = vmatprep.subr.mxu0 0.0
        %1095 = vmatpush2.msra.mxu0 0.0
        %1096 = vmatprep.mubr.f32.mxu0 0.0
        %1097 = vmatmul.mubr.f32.gmra.mxu0 %v1030
        %v1098 = vpop.f32.mrf.mxu0
        %v1099 = vadd.f32 0.0, %v1098
        %v1100 = vpop.f32.mrf.mxu0
        %1101 = vdwg.mxu0
        %v1103 = vsel %vm736, %v495, 0
        %1105 = vmatprep.subr.mxu0 0.0
        %1106 = vmatpush1.msra.mxu0 0.0
        %1107 = vmatprep.subr.mxu0 0.0
        %1108 = vmatpush1.msra.mxu0 0.0
        %1109 = vmatprep.subr.mxu0 0.0
        %1110 = vmatpush1.msra.mxu0 0.0
        %1111 = vmatprep.subr.mxu0 0.0
        %1112 = vmatpush1.msra.mxu0 0.0
        %1113 = vmatprep.subr.mxu0 0.0
        %1114 = vmatpush1.msra.mxu0 0.0
        %1115 = vmatprep.subr.mxu0 0.0
        %1116 = vmatpush1.msra.mxu0 0.0
        %1117 = vmatprep.subr.mxu0 0.0
        %1118 = vmatpush1.msra.mxu0 0.0
        %1119 = vmatprep.subr.mxu0 0.0
        %1120 = vmatpush1.msra.mxu0 0.0
        %1121 = vmatprep.subr.mxu0 0.0
        %1122 = vmatpush1.msra.mxu0 0.0
        %1123 = vmatprep.subr.mxu0 0.0
        %1124 = vmatpush1.msra.mxu0 0.0
        %1125 = vmatprep.subr.mxu0 0.0
        %1126 = vmatpush1.msra.mxu0 0.0
        %1127 = vmatprep.subr.mxu0 0.0
        %1128 = vmatpush1.msra.mxu0 0.0
        %1129 = vmatprep.subr.mxu0 0.0
        %1130 = vmatpush1.msra.mxu0 0.0
        %1131 = vmatprep.subr.mxu0 0.0
        %1132 = vmatpush1.msra.mxu0 0.0
        %1133 = vmatprep.subr.mxu0 0.0
        %1134 = vmatpush1.msra.mxu0 0.0
        %1135 = vmatprep.subr.mxu0 0.0
        %1136 = vmatpush1.msra.mxu0 %v723
        %1137 = vmatprep.subr.mxu0 0.0
        %1138 = vmatpush2.msra.mxu0 0.0
        %1139 = vmatprep.subr.mxu0 0.0
        %1140 = vmatpush2.msra.mxu0 0.0
        %1141 = vmatprep.subr.mxu0 0.0
        %1142 = vmatpush2.msra.mxu0 0.0
        %1143 = vmatprep.subr.mxu0 0.0
        %1144 = vmatpush2.msra.mxu0 0.0
        %1145 = vmatprep.subr.mxu0 0.0
        %1146 = vmatpush2.msra.mxu0 0.0
        %1147 = vmatprep.subr.mxu0 0.0
        %1148 = vmatpush2.msra.mxu0 0.0
        %1149 = vmatprep.subr.mxu0 0.0
        %1150 = vmatpush2.msra.mxu0 0.0
        %1151 = vmatprep.subr.mxu0 0.0
        %1152 = vmatpush2.msra.mxu0 0.0
        %1153 = vmatprep.subr.mxu0 0.0
        %1154 = vmatpush2.msra.mxu0 0.0
        %1155 = vmatprep.subr.mxu0 0.0
        %1156 = vmatpush2.msra.mxu0 0.0
        %1157 = vmatprep.subr.mxu0 0.0
        %1158 = vmatpush2.msra.mxu0 0.0
        %1159 = vmatprep.subr.mxu0 0.0
        %1160 = vmatpush2.msra.mxu0 0.0
        %1161 = vmatprep.subr.mxu0 0.0
        %1162 = vmatpush2.msra.mxu0 0.0
        %1163 = vmatprep.subr.mxu0 0.0
        %1164 = vmatpush2.msra.mxu0 0.0
        %1165 = vmatprep.subr.mxu0 0.0
        %1166 = vmatpush2.msra.mxu0 0.0
        %1167 = vmatprep.subr.mxu0 0.0
        %1168 = vmatpush2.msra.mxu0 0.0
        %1169 = vmatprep.mubr.f32.mxu0 0.0
        %1170 = vmatmul.mubr.f32.gmra.mxu0 %v1103
        %v1171 = vpop.f32.mrf.mxu0
        %v1172 = vadd.f32 0.0, %v1171
        %v1173 = vpop.f32.mrf.mxu0
        %1174 = vdwg.mxu0
        %v1176 = vsel %vm736, %v496, 0
        %1178 = vmatprep.subr.mxu0 0.0
        %1179 = vmatpush1.msra.mxu0 0.0
        %1180 = vmatprep.subr.mxu0 0.0
        %1181 = vmatpush1.msra.mxu0 0.0
        %1182 = vmatprep.subr.mxu0 0.0
        %1183 = vmatpush1.msra.mxu0 0.0
        %1184 = vmatprep.subr.mxu0 0.0
        %1185 = vmatpush1.msra.mxu0 0.0
        %1186 = vmatprep.subr.mxu0 0.0
        %1187 = vmatpush1.msra.mxu0 0.0
        %1188 = vmatprep.subr.mxu0 0.0
        %1189 = vmatpush1.msra.mxu0 0.0
        %1190 = vmatprep.subr.mxu0 0.0
        %1191 = vmatpush1.msra.mxu0 0.0
        %1192 = vmatprep.subr.mxu0 0.0
        %1193 = vmatpush1.msra.mxu0 0.0
        %1194 = vmatprep.subr.mxu0 0.0
        %1195 = vmatpush1.msra.mxu0 0.0
        %1196 = vmatprep.subr.mxu0 0.0
        %1197 = vmatpush1.msra.mxu0 0.0
        %1198 = vmatprep.subr.mxu0 0.0
        %1199 = vmatpush1.msra.mxu0 0.0
        %1200 = vmatprep.subr.mxu0 0.0
        %1201 = vmatpush1.msra.mxu0 0.0
        %1202 = vmatprep.subr.mxu0 0.0
        %1203 = vmatpush1.msra.mxu0 0.0
        %1204 = vmatprep.subr.mxu0 0.0
        %1205 = vmatpush1.msra.mxu0 0.0
        %1206 = vmatprep.subr.mxu0 0.0
        %1207 = vmatpush1.msra.mxu0 0.0
        %1208 = vmatprep.subr.mxu0 0.0
        %1209 = vmatpush1.msra.mxu0 %v728
        %1210 = vmatprep.subr.mxu0 0.0
        %1211 = vmatpush2.msra.mxu0 0.0
        %1212 = vmatprep.subr.mxu0 0.0
        %1213 = vmatpush2.msra.mxu0 0.0
        %1214 = vmatprep.subr.mxu0 0.0
        %1215 = vmatpush2.msra.mxu0 0.0
        %1216 = vmatprep.subr.mxu0 0.0
        %1217 = vmatpush2.msra.mxu0 0.0
        %1218 = vmatprep.subr.mxu0 0.0
        %1219 = vmatpush2.msra.mxu0 0.0
        %1220 = vmatprep.subr.mxu0 0.0
        %1221 = vmatpush2.msra.mxu0 0.0
        %1222 = vmatprep.subr.mxu0 0.0
        %1223 = vmatpush2.msra.mxu0 0.0
        %1224 = vmatprep.subr.mxu0 0.0
        %1225 = vmatpush2.msra.mxu0 0.0
        %1226 = vmatprep.subr.mxu0 0.0
        %1227 = vmatpush2.msra.mxu0 0.0
        %1228 = vmatprep.subr.mxu0 0.0
        %1229 = vmatpush2.msra.mxu0 0.0
        %1230 = vmatprep.subr.mxu0 0.0
        %1231 = vmatpush2.msra.mxu0 0.0
        %1232 = vmatprep.subr.mxu0 0.0
        %1233 = vmatpush2.msra.mxu0 0.0
        %1234 = vmatprep.subr.mxu0 0.0
        %1235 = vmatpush2.msra.mxu0 0.0
        %1236 = vmatprep.subr.mxu0 0.0
        %1237 = vmatpush2.msra.mxu0 0.0
        %1238 = vmatprep.subr.mxu0 0.0
        %1239 = vmatpush2.msra.mxu0 0.0
        %1240 = vmatprep.subr.mxu0 0.0
        %1241 = vmatpush2.msra.mxu0 0.0
        %1242 = vmatprep.mubr.f32.mxu0 0.0
        %1243 = vmatmul.mubr.f32.gmra.mxu0 %v1176
        %v1244 = vpop.f32.mrf.mxu0
        %v1245 = vadd.f32 0.0, %v1244
        %v1246 = vpop.f32.mrf.mxu0
        %1247 = vdwg.mxu0
        %v1249 = vsel %vm736, %v497, 0
        %1251 = vmatprep.subr.mxu0 0.0
        %1252 = vmatpush1.msra.mxu0 0.0
        %1253 = vmatprep.subr.mxu0 0.0
        %1254 = vmatpush1.msra.mxu0 0.0
        %1255 = vmatprep.subr.mxu0 0.0
        %1256 = vmatpush1.msra.mxu0 0.0
        %1257 = vmatprep.subr.mxu0 0.0
        %1258 = vmatpush1.msra.mxu0 0.0
        %1259 = vmatprep.subr.mxu0 0.0
        %1260 = vmatpush1.msra.mxu0 0.0
        %1261 = vmatprep.subr.mxu0 0.0
        %1262 = vmatpush1.msra.mxu0 0.0
        %1263 = vmatprep.subr.mxu0 0.0
        %1264 = vmatpush1.msra.mxu0 0.0
        %1265 = vmatprep.subr.mxu0 0.0
        %1266 = vmatpush1.msra.mxu0 0.0
        %1267 = vmatprep.subr.mxu0 0.0
        %1268 = vmatpush1.msra.mxu0 0.0
        %1269 = vmatprep.subr.mxu0 0.0
        %1270 = vmatpush1.msra.mxu0 0.0
        %1271 = vmatprep.subr.mxu0 0.0
        %1272 = vmatpush1.msra.mxu0 0.0
        %1273 = vmatprep.subr.mxu0 0.0
        %1274 = vmatpush1.msra.mxu0 0.0
        %1275 = vmatprep.subr.mxu0 0.0
        %1276 = vmatpush1.msra.mxu0 0.0
        %1277 = vmatprep.subr.mxu0 0.0
        %1278 = vmatpush1.msra.mxu0 0.0
        %1279 = vmatprep.subr.mxu0 0.0
        %1280 = vmatpush1.msra.mxu0 0.0
        %1281 = vmatprep.subr.mxu0 0.0
        %1282 = vmatpush1.msra.mxu0 %v733
        %1283 = vmatprep.subr.mxu0 0.0
        %1284 = vmatpush2.msra.mxu0 0.0
        %1285 = vmatprep.subr.mxu0 0.0
        %1286 = vmatpush2.msra.mxu0 0.0
        %1287 = vmatprep.subr.mxu0 0.0
        %1288 = vmatpush2.msra.mxu0 0.0
        %1289 = vmatprep.subr.mxu0 0.0
        %1290 = vmatpush2.msra.mxu0 0.0
        %1291 = vmatprep.subr.mxu0 0.0
        %1292 = vmatpush2.msra.mxu0 0.0
        %1293 = vmatprep.subr.mxu0 0.0
        %1294 = vmatpush2.msra.mxu0 0.0
        %1295 = vmatprep.subr.mxu0 0.0
        %1296 = vmatpush2.msra.mxu0 0.0
        %1297 = vmatprep.subr.mxu0 0.0
        %1298 = vmatpush2.msra.mxu0 0.0
        %1299 = vmatprep.subr.mxu0 0.0
        %1300 = vmatpush2.msra.mxu0 0.0
        %1301 = vmatprep.subr.mxu0 0.0
        %1302 = vmatpush2.msra.mxu0 0.0
        %1303 = vmatprep.subr.mxu0 0.0
        %1304 = vmatpush2.msra.mxu0 0.0
        %1305 = vmatprep.subr.mxu0 0.0
        %1306 = vmatpush2.msra.mxu0 0.0
        %1307 = vmatprep.subr.mxu0 0.0
        %1308 = vmatpush2.msra.mxu0 0.0
        %1309 = vmatprep.subr.mxu0 0.0
        %1310 = vmatpush2.msra.mxu0 0.0
        %1311 = vmatprep.subr.mxu0 0.0
        %1312 = vmatpush2.msra.mxu0 0.0
        %1313 = vmatprep.subr.mxu0 0.0
        %1314 = vmatpush2.msra.mxu0 0.0
        %1315 = vmatprep.mubr.f32.mxu0 0.0
        %1316 = vmatmul.mubr.f32.gmra.mxu0 %v1249
        %v1317 = vpop.f32.mrf.mxu0
        %v1318 = vadd.f32 0.0, %v1317
        %v1319 = vpop.f32.mrf.mxu0
        %1320 = vdwg.mxu0
        %v1322 = vsel %vm547, %v1099, 0
        %v1325 = vsel %vm547, %v1172, 0
        %v1328 = vsel %vm547, %v1245, 0
        %v1331 = vsel %vm547, %v1318, 0
        %1333 = vmatprep.subr.mxu0 0.0
        %1334 = vmatpush1.msra.mxu0 0.0
        %1335 = vmatprep.subr.mxu0 0.0
        %1336 = vmatpush1.msra.mxu0 0.0
        %1337 = vmatprep.subr.mxu0 0.0
        %1338 = vmatpush1.msra.mxu0 0.0
        %1339 = vmatprep.subr.mxu0 0.0
        %1340 = vmatpush1.msra.mxu0 0.0
        %1341 = vmatprep.subr.mxu0 0.0
        %1342 = vmatpush1.msra.mxu0 0.0
        %1343 = vmatprep.subr.mxu0 0.0
        %1344 = vmatpush1.msra.mxu0 0.0
        %1345 = vmatprep.subr.mxu0 0.0
        %1346 = vmatpush1.msra.mxu0 0.0
        %1347 = vmatprep.subr.mxu0 0.0
        %1348 = vmatpush1.msra.mxu0 0.0
        %1349 = vmatprep.subr.mxu0 0.0
        %1350 = vmatpush1.msra.mxu0 0.0
        %1351 = vmatprep.subr.mxu0 0.0
        %1352 = vmatpush1.msra.mxu0 0.0
        %1353 = vmatprep.subr.mxu0 0.0
        %1354 = vmatpush1.msra.mxu0 0.0
        %1355 = vmatprep.subr.mxu0 0.0
        %1356 = vmatpush1.msra.mxu0 0.0
        %1357 = vmatprep.subr.mxu0 0.0
        %1358 = vmatpush1.msra.mxu0 0.0
        %1359 = vmatprep.subr.mxu0 0.0
        %1360 = vmatpush1.msra.mxu0 0.0
        %1361 = vmatprep.subr.mxu0 0.0
        %1362 = vmatpush1.msra.mxu0 %v515
        %1363 = vmatprep.subr.mxu0 0.0
        %1364 = vmatpush1.msra.mxu0 %v514
        %1365 = vmatprep.subr.mxu0 0.0
        %1366 = vmatpush2.msra.mxu0 0.0
        %1367 = vmatprep.subr.mxu0 0.0
        %1368 = vmatpush2.msra.mxu0 0.0
        %1369 = vmatprep.subr.mxu0 0.0
        %1370 = vmatpush2.msra.mxu0 0.0
        %1371 = vmatprep.subr.mxu0 0.0
        %1372 = vmatpush2.msra.mxu0 0.0
        %1373 = vmatprep.subr.mxu0 0.0
        %1374 = vmatpush2.msra.mxu0 0.0
        %1375 = vmatprep.subr.mxu0 0.0
        %1376 = vmatpush2.msra.mxu0 0.0
        %1377 = vmatprep.subr.mxu0 0.0
        %1378 = vmatpush2.msra.mxu0 0.0
        %1379 = vmatprep.subr.mxu0 0.0
        %1380 = vmatpush2.msra.mxu0 0.0
        %1381 = vmatprep.subr.mxu0 0.0
        %1382 = vmatpush2.msra.mxu0 0.0
        %1383 = vmatprep.subr.mxu0 0.0
        %1384 = vmatpush2.msra.mxu0 0.0
        %1385 = vmatprep.subr.mxu0 0.0
        %1386 = vmatpush2.msra.mxu0 0.0
        %1387 = vmatprep.subr.mxu0 0.0
        %1388 = vmatpush2.msra.mxu0 0.0
        %1389 = vmatprep.subr.mxu0 0.0
        %1390 = vmatpush2.msra.mxu0 0.0
        %1391 = vmatprep.subr.mxu0 0.0
        %1392 = vmatpush2.msra.mxu0 0.0
        %1393 = vmatprep.subr.mxu0 0.0
        %1394 = vmatpush2.msra.mxu0 0.0
        %1395 = vmatprep.subr.mxu0 0.0
        %1396 = vmatpush2.msra.mxu0 0.0
        %1397 = vmatprep.mubr.f32.mxu0 0.0
        %1398 = vmatmul.mubr.f32.gmra.mxu0 %v1322
        %v1399 = vpop.f32.mrf.mxu0
        %v1400 = vadd.f32 0.0, %v1399
        %v1401 = vpop.f32.mrf.mxu0
        %1402 = vmatprep.mubr.f32.mxu0 0.0
        %1403 = vmatmul.mubr.f32.gmra.mxu0 %v1325
        %v1404 = vpop.f32.mrf.mxu0
        %v1405 = vadd.f32 0.0, %v1404
        %v1406 = vpop.f32.mrf.mxu0
        %1407 = vmatprep.mubr.f32.mxu0 0.0
        %1408 = vmatmul.mubr.f32.gmra.mxu0 %v1328
        %v1409 = vpop.f32.mrf.mxu0
        %v1410 = vadd.f32 0.0, %v1409
        %v1411 = vpop.f32.mrf.mxu0
        %1412 = vmatprep.mubr.f32.mxu0 0.0
        %1413 = vmatmul.mubr.f32.gmra.mxu0 %v1331
        %v1414 = vpop.f32.mrf.mxu0
        %v1415 = vadd.f32 0.0, %v1414
        %v1416 = vpop.f32.mrf.mxu0
        %1417 = vdwg.mxu0
        %v1419 = vsel %vm547, %v807, 0
        %v1422 = vsel %vm547, %v880, 0
        %v1425 = vsel %vm547, %v953, 0
        %v1428 = vsel %vm547, %v1026, 0
        %1430 = vmatprep.subr.mxu0 0.0
        %1431 = vmatpush1.msra.mxu0 0.0
        %1432 = vmatprep.subr.mxu0 0.0
        %1433 = vmatpush1.msra.mxu0 0.0
        %1434 = vmatprep.subr.mxu0 0.0
        %1435 = vmatpush1.msra.mxu0 0.0
        %1436 = vmatprep.subr.mxu0 0.0
        %1437 = vmatpush1.msra.mxu0 0.0
        %1438 = vmatprep.subr.mxu0 0.0
        %1439 = vmatpush1.msra.mxu0 0.0
        %1440 = vmatprep.subr.mxu0 0.0
        %1441 = vmatpush1.msra.mxu0 0.0
        %1442 = vmatprep.subr.mxu0 0.0
        %1443 = vmatpush1.msra.mxu0 0.0
        %1444 = vmatprep.subr.mxu0 0.0
        %1445 = vmatpush1.msra.mxu0 0.0
        %1446 = vmatprep.subr.mxu0 0.0
        %1447 = vmatpush1.msra.mxu0 0.0
        %1448 = vmatprep.subr.mxu0 0.0
        %1449 = vmatpush1.msra.mxu0 0.0
        %1450 = vmatprep.subr.mxu0 0.0
        %1451 = vmatpush1.msra.mxu0 0.0
        %1452 = vmatprep.subr.mxu0 0.0
        %1453 = vmatpush1.msra.mxu0 0.0
        %1454 = vmatprep.subr.mxu0 0.0
        %1455 = vmatpush1.msra.mxu0 0.0
        %1456 = vmatprep.subr.mxu0 0.0
        %1457 = vmatpush1.msra.mxu0 0.0
        %1458 = vmatprep.subr.mxu0 0.0
        %1459 = vmatpush1.msra.mxu0 %v507
        %1460 = vmatprep.subr.mxu0 0.0
        %1461 = vmatpush1.msra.mxu0 %v506
        %1462 = vmatprep.subr.mxu0 0.0
        %1463 = vmatpush2.msra.mxu0 0.0
        %1464 = vmatprep.subr.mxu0 0.0
        %1465 = vmatpush2.msra.mxu0 0.0
        %1466 = vmatprep.subr.mxu0 0.0
        %1467 = vmatpush2.msra.mxu0 0.0
        %1468 = vmatprep.subr.mxu0 0.0
        %1469 = vmatpush2.msra.mxu0 0.0
        %1470 = vmatprep.subr.mxu0 0.0
        %1471 = vmatpush2.msra.mxu0 0.0
        %1472 = vmatprep.subr.mxu0 0.0
        %1473 = vmatpush2.msra.mxu0 0.0
        %1474 = vmatprep.subr.mxu0 0.0
        %1475 = vmatpush2.msra.mxu0 0.0
        %1476 = vmatprep.subr.mxu0 0.0
        %1477 = vmatpush2.msra.mxu0 0.0
        %1478 = vmatprep.subr.mxu0 0.0
        %1479 = vmatpush2.msra.mxu0 0.0
        %1480 = vmatprep.subr.mxu0 0.0
        %1481 = vmatpush2.msra.mxu0 0.0
        %1482 = vmatprep.subr.mxu0 0.0
        %1483 = vmatpush2.msra.mxu0 0.0
        %1484 = vmatprep.subr.mxu0 0.0
        %1485 = vmatpush2.msra.mxu0 0.0
        %1486 = vmatprep.subr.mxu0 0.0
        %1487 = vmatpush2.msra.mxu0 0.0
        %1488 = vmatprep.subr.mxu0 0.0
        %1489 = vmatpush2.msra.mxu0 0.0
        %1490 = vmatprep.subr.mxu0 0.0
        %1491 = vmatpush2.msra.mxu0 0.0
        %1492 = vmatprep.subr.mxu0 0.0
        %1493 = vmatpush2.msra.mxu0 0.0
        %1494 = vmatprep.mubr.f32.mxu0 0.0
        %1495 = vmatmul.mubr.f32.gmra.mxu0 %v1419
        %v1496 = vpop.f32.mrf.mxu0
        %v1497 = vadd.f32 %v1400, %v1496
        %v1498 = vpop.f32.mrf.mxu0
        %1499 = vmatprep.mubr.f32.mxu0 0.0
        %1500 = vmatmul.mubr.f32.gmra.mxu0 %v1422
        %v1501 = vpop.f32.mrf.mxu0
        %v1502 = vadd.f32 %v1405, %v1501
        %v1503 = vpop.f32.mrf.mxu0
        %1504 = vmatprep.mubr.f32.mxu0 0.0
        %1505 = vmatmul.mubr.f32.gmra.mxu0 %v1425
        %v1506 = vpop.f32.mrf.mxu0
        %v1507 = vadd.f32 %v1410, %v1506
        %v1508 = vpop.f32.mrf.mxu0
        %1509 = vmatprep.mubr.f32.mxu0 0.0
        %1510 = vmatmul.mubr.f32.gmra.mxu0 %v1428
        %v1511 = vpop.f32.mrf.mxu0
        %v1512 = vadd.f32 %v1415, %v1511
        %v1513 = vpop.f32.mrf.mxu0
        %1514 = vdwg.mxu0
        %1515 = vmatprep.subr.mxu0 0.0
        %1516 = vmatpush1.msra.mxu0 0.0
        %1517 = vmatprep.subr.mxu0 0.0
        %1518 = vmatpush1.msra.mxu0 0.0
        %1519 = vmatprep.subr.mxu0 0.0
        %1520 = vmatpush1.msra.mxu0 0.0
        %1521 = vmatprep.subr.mxu0 0.0
        %1522 = vmatpush1.msra.mxu0 0.0
        %1523 = vmatprep.subr.mxu0 0.0
        %1524 = vmatpush1.msra.mxu0 0.0
        %1525 = vmatprep.subr.mxu0 0.0
        %1526 = vmatpush1.msra.mxu0 0.0
        %1527 = vmatprep.subr.mxu0 0.0
        %1528 = vmatpush1.msra.mxu0 0.0
        %1529 = vmatprep.subr.mxu0 0.0
        %1530 = vmatpush1.msra.mxu0 0.0
        %1531 = vmatprep.subr.mxu0 0.0
        %1532 = vmatpush1.msra.mxu0 0.0
        %1533 = vmatprep.subr.mxu0 0.0
        %1534 = vmatpush1.msra.mxu0 0.0
        %1535 = vmatprep.subr.mxu0 0.0
        %1536 = vmatpush1.msra.mxu0 0.0
        %1537 = vmatprep.subr.mxu0 0.0
        %1538 = vmatpush1.msra.mxu0 0.0
        %1539 = vmatprep.subr.mxu0 0.0
        %1540 = vmatpush1.msra.mxu0 0.0
        %1541 = vmatprep.subr.mxu0 0.0
        %1542 = vmatpush1.msra.mxu0 0.0
        %1543 = vmatprep.subr.mxu0 0.0
        %1544 = vmatpush1.msra.mxu0 %v523
        %1545 = vmatprep.subr.mxu0 0.0
        %1546 = vmatpush1.msra.mxu0 %v522
        %1547 = vmatprep.subr.mxu0 0.0
        %1548 = vmatpush2.msra.mxu0 0.0
        %1549 = vmatprep.subr.mxu0 0.0
        %1550 = vmatpush2.msra.mxu0 0.0
        %1551 = vmatprep.subr.mxu0 0.0
        %1552 = vmatpush2.msra.mxu0 0.0
        %1553 = vmatprep.subr.mxu0 0.0
        %1554 = vmatpush2.msra.mxu0 0.0
        %1555 = vmatprep.subr.mxu0 0.0
        %1556 = vmatpush2.msra.mxu0 0.0
        %1557 = vmatprep.subr.mxu0 0.0
        %1558 = vmatpush2.msra.mxu0 0.0
        %1559 = vmatprep.subr.mxu0 0.0
        %1560 = vmatpush2.msra.mxu0 0.0
        %1561 = vmatprep.subr.mxu0 0.0
        %1562 = vmatpush2.msra.mxu0 0.0
        %1563 = vmatprep.subr.mxu0 0.0
        %1564 = vmatpush2.msra.mxu0 0.0
        %1565 = vmatprep.subr.mxu0 0.0
        %1566 = vmatpush2.msra.mxu0 0.0
        %1567 = vmatprep.subr.mxu0 0.0
        %1568 = vmatpush2.msra.mxu0 0.0
        %1569 = vmatprep.subr.mxu0 0.0
        %1570 = vmatpush2.msra.mxu0 0.0
        %1571 = vmatprep.subr.mxu0 0.0
        %1572 = vmatpush2.msra.mxu0 0.0
        %1573 = vmatprep.subr.mxu0 0.0
        %1574 = vmatpush2.msra.mxu0 0.0
        %1575 = vmatprep.subr.mxu0 0.0
        %1576 = vmatpush2.msra.mxu0 0.0
        %1577 = vmatprep.subr.mxu0 0.0
        %1578 = vmatpush2.msra.mxu0 0.0
        %1579 = vmatprep.mubr.f32.mxu0 0.0
        %1580 = vmatmul.mubr.f32.gmra.mxu0 %v549
        %v1581 = vpop.f32.mrf.mxu0
        %v1582 = vadd.f32 0.0, %v1581
        %v1583 = vpop.f32.mrf.mxu0
        %1584 = vmatprep.mubr.f32.mxu0 0.0
        %1585 = vmatmul.mubr.f32.gmra.mxu0 %v552
        %v1586 = vpop.f32.mrf.mxu0
        %v1587 = vadd.f32 0.0, %v1586
        %v1588 = vpop.f32.mrf.mxu0
        %1589 = vmatprep.mubr.f32.mxu0 0.0
        %1590 = vmatmul.mubr.f32.gmra.mxu0 %v555
        %v1591 = vpop.f32.mrf.mxu0
        %v1592 = vadd.f32 0.0, %v1591
        %v1593 = vpop.f32.mrf.mxu0
        %1594 = vmatprep.mubr.f32.mxu0 0.0
        %1595 = vmatmul.mubr.f32.gmra.mxu0 %v558
        %v1596 = vpop.f32.mrf.mxu0
        %v1597 = vadd.f32 0.0, %v1596
        %v1598 = vpop.f32.mrf.mxu0
        %1599 = vdwg.mxu0
        %v1600 = vadd.f32 %v1497, %v1582
        %v1601 = vadd.f32 %v1502, %v1587
        %v1602 = vadd.f32 %v1507, %v1592
        %v1603 = vadd.f32 %v1512, %v1597
        %v1605 = vlaneseq
        %v1606 = vshrl.u32 %v1605, 7
        %v1607 = vsub.s32 0, %v1606
        %v1608 = vrot.slane %v530, %v1607
        %v1610 = vadd.f32 %v1600, %v1608
        %v1611 = vadd.f32 %v1601, %v1608
        %v1612 = vadd.f32 %v1602, %v1608
        %v1613 = vadd.f32 %v1603, %v1608
        %1614 = vmatprep.subr.mxu0 0.0
        %1615 = vmatpush1.msra.mxu0 0.0
        %1616 = vmatprep.subr.mxu0 0.0
        %1617 = vmatpush1.msra.mxu0 0.0
        %1618 = vmatprep.subr.mxu0 0.0
        %1619 = vmatpush1.msra.mxu0 0.0
        %1620 = vmatprep.subr.mxu0 0.0
        %1621 = vmatpush1.msra.mxu0 0.0
        %1622 = vmatprep.subr.mxu0 0.0
        %1623 = vmatpush1.msra.mxu0 0.0
        %1624 = vmatprep.subr.mxu0 0.0
        %1625 = vmatpush1.msra.mxu0 0.0
        %1626 = vmatprep.subr.mxu0 0.0
        %1627 = vmatpush1.msra.mxu0 0.0
        %1628 = vmatprep.subr.mxu0 0.0
        %1629 = vmatpush1.msra.mxu0 0.0
        %1630 = vmatprep.subr.mxu0 0.0
        %1631 = vmatpush1.msra.mxu0 0.0
        %1632 = vmatprep.subr.mxu0 0.0
        %1633 = vmatpush1.msra.mxu0 0.0
        %1634 = vmatprep.subr.mxu0 0.0
        %1635 = vmatpush1.msra.mxu0 0.0
        %1636 = vmatprep.subr.mxu0 0.0
        %1637 = vmatpush1.msra.mxu0 0.0
        %1638 = vmatprep.subr.mxu0 0.0
        %1639 = vmatpush1.msra.mxu0 0.0
        %1640 = vmatprep.subr.mxu0 0.0
        %1641 = vmatpush1.msra.mxu0 0.0
        %1642 = vmatprep.subr.mxu0 0.0
        %1643 = vmatpush1.msra.mxu0 %v518
        %1644 = vmatprep.subr.mxu0 0.0
        %1645 = vmatpush1.msra.mxu0 %v517
        %1646 = vmatprep.subr.mxu0 0.0
        %1647 = vmatpush2.msra.mxu0 0.0
        %1648 = vmatprep.subr.mxu0 0.0
        %1649 = vmatpush2.msra.mxu0 0.0
        %1650 = vmatprep.subr.mxu0 0.0
        %1651 = vmatpush2.msra.mxu0 0.0
        %1652 = vmatprep.subr.mxu0 0.0
        %1653 = vmatpush2.msra.mxu0 0.0
        %1654 = vmatprep.subr.mxu0 0.0
        %1655 = vmatpush2.msra.mxu0 0.0
        %1656 = vmatprep.subr.mxu0 0.0
        %1657 = vmatpush2.msra.mxu0 0.0
        %1658 = vmatprep.subr.mxu0 0.0
        %1659 = vmatpush2.msra.mxu0 0.0
        %1660 = vmatprep.subr.mxu0 0.0
        %1661 = vmatpush2.msra.mxu0 0.0
        %1662 = vmatprep.subr.mxu0 0.0
        %1663 = vmatpush2.msra.mxu0 0.0
        %1664 = vmatprep.subr.mxu0 0.0
        %1665 = vmatpush2.msra.mxu0 0.0
        %1666 = vmatprep.subr.mxu0 0.0
        %1667 = vmatpush2.msra.mxu0 0.0
        %1668 = vmatprep.subr.mxu0 0.0
        %1669 = vmatpush2.msra.mxu0 0.0
        %1670 = vmatprep.subr.mxu0 0.0
        %1671 = vmatpush2.msra.mxu0 0.0
        %1672 = vmatprep.subr.mxu0 0.0
        %1673 = vmatpush2.msra.mxu0 0.0
        %1674 = vmatprep.subr.mxu0 0.0
        %1675 = vmatpush2.msra.mxu0 0.0
        %1676 = vmatprep.subr.mxu0 0.0
        %1677 = vmatpush2.msra.mxu0 0.0
        %1678 = vmatprep.mubr.f32.mxu0 0.0
        %1679 = vmatmul.mubr.f32.gmra.mxu0 %v1322
        %v1680 = vpop.f32.mrf.mxu0
        %v1681 = vadd.f32 0.0, %v1680
        %v1682 = vpop.f32.mrf.mxu0
        %1683 = vmatprep.mubr.f32.mxu0 0.0
        %1684 = vmatmul.mubr.f32.gmra.mxu0 %v1325
        %v1685 = vpop.f32.mrf.mxu0
        %v1686 = vadd.f32 0.0, %v1685
        %v1687 = vpop.f32.mrf.mxu0
        %1688 = vmatprep.mubr.f32.mxu0 0.0
        %1689 = vmatmul.mubr.f32.gmra.mxu0 %v1328
        %v1690 = vpop.f32.mrf.mxu0
        %v1691 = vadd.f32 0.0, %v1690
        %v1692 = vpop.f32.mrf.mxu0
        %1693 = vmatprep.mubr.f32.mxu0 0.0
        %1694 = vmatmul.mubr.f32.gmra.mxu0 %v1331
        %v1695 = vpop.f32.mrf.mxu0
        %v1696 = vadd.f32 0.0, %v1695
        %v1697 = vpop.f32.mrf.mxu0
        %1698 = vdwg.mxu0
        %1699 = vmatprep.subr.mxu0 0.0
        %1700 = vmatpush1.msra.mxu0 0.0
        %1701 = vmatprep.subr.mxu0 0.0
        %1702 = vmatpush1.msra.mxu0 0.0
        %1703 = vmatprep.subr.mxu0 0.0
        %1704 = vmatpush1.msra.mxu0 0.0
        %1705 = vmatprep.subr.mxu0 0.0
        %1706 = vmatpush1.msra.mxu0 0.0
        %1707 = vmatprep.subr.mxu0 0.0
        %1708 = vmatpush1.msra.mxu0 0.0
        %1709 = vmatprep.subr.mxu0 0.0
        %1710 = vmatpush1.msra.mxu0 0.0
        %1711 = vmatprep.subr.mxu0 0.0
        %1712 = vmatpush1.msra.mxu0 0.0
        %1713 = vmatprep.subr.mxu0 0.0
        %1714 = vmatpush1.msra.mxu0 0.0
        %1715 = vmatprep.subr.mxu0 0.0
        %1716 = vmatpush1.msra.mxu0 0.0
        %1717 = vmatprep.subr.mxu0 0.0
        %1718 = vmatpush1.msra.mxu0 0.0
        %1719 = vmatprep.subr.mxu0 0.0
        %1720 = vmatpush1.msra.mxu0 0.0
        %1721 = vmatprep.subr.mxu0 0.0
        %1722 = vmatpush1.msra.mxu0 0.0
        %1723 = vmatprep.subr.mxu0 0.0
        %1724 = vmatpush1.msra.mxu0 0.0
        %1725 = vmatprep.subr.mxu0 0.0
        %1726 = vmatpush1.msra.mxu0 0.0
        %1727 = vmatprep.subr.mxu0 0.0
        %1728 = vmatpush1.msra.mxu0 %v510
        %1729 = vmatprep.subr.mxu0 0.0
        %1730 = vmatpush1.msra.mxu0 %v509
        %1731 = vmatprep.subr.mxu0 0.0
        %1732 = vmatpush2.msra.mxu0 0.0
        %1733 = vmatprep.subr.mxu0 0.0
        %1734 = vmatpush2.msra.mxu0 0.0
        %1735 = vmatprep.subr.mxu0 0.0
        %1736 = vmatpush2.msra.mxu0 0.0
        %1737 = vmatprep.subr.mxu0 0.0
        %1738 = vmatpush2.msra.mxu0 0.0
        %1739 = vmatprep.subr.mxu0 0.0
        %1740 = vmatpush2.msra.mxu0 0.0
        %1741 = vmatprep.subr.mxu0 0.0
        %1742 = vmatpush2.msra.mxu0 0.0
        %1743 = vmatprep.subr.mxu0 0.0
        %1744 = vmatpush2.msra.mxu0 0.0
        %1745 = vmatprep.subr.mxu0 0.0
        %1746 = vmatpush2.msra.mxu0 0.0
        %1747 = vmatprep.subr.mxu0 0.0
        %1748 = vmatpush2.msra.mxu0 0.0
        %1749 = vmatprep.subr.mxu0 0.0
        %1750 = vmatpush2.msra.mxu0 0.0
        %1751 = vmatprep.subr.mxu0 0.0
        %1752 = vmatpush2.msra.mxu0 0.0
        %1753 = vmatprep.subr.mxu0 0.0
        %1754 = vmatpush2.msra.mxu0 0.0
        %1755 = vmatprep.subr.mxu0 0.0
        %1756 = vmatpush2.msra.mxu0 0.0
        %1757 = vmatprep.subr.mxu0 0.0
        %1758 = vmatpush2.msra.mxu0 0.0
        %1759 = vmatprep.subr.mxu0 0.0
        %1760 = vmatpush2.msra.mxu0 0.0
        %1761 = vmatprep.subr.mxu0 0.0
        %1762 = vmatpush2.msra.mxu0 0.0
        %1763 = vmatprep.mubr.f32.mxu0 0.0
        %1764 = vmatmul.mubr.f32.gmra.mxu0 %v1419
        %v1765 = vpop.f32.mrf.mxu0
        %v1766 = vadd.f32 %v1681, %v1765
        %v1767 = vpop.f32.mrf.mxu0
        %1768 = vmatprep.mubr.f32.mxu0 0.0
        %1769 = vmatmul.mubr.f32.gmra.mxu0 %v1422
        %v1770 = vpop.f32.mrf.mxu0
        %v1771 = vadd.f32 %v1686, %v1770
        %v1772 = vpop.f32.mrf.mxu0
        %1773 = vmatprep.mubr.f32.mxu0 0.0
        %1774 = vmatmul.mubr.f32.gmra.mxu0 %v1425
        %v1775 = vpop.f32.mrf.mxu0
        %v1776 = vadd.f32 %v1691, %v1775
        %v1777 = vpop.f32.mrf.mxu0
        %1778 = vmatprep.mubr.f32.mxu0 0.0
        %1779 = vmatmul.mubr.f32.gmra.mxu0 %v1428
        %v1780 = vpop.f32.mrf.mxu0
        %v1781 = vadd.f32 %v1696, %v1780
        %v1782 = vpop.f32.mrf.mxu0
        %1783 = vdwg.mxu0
        %1784 = vmatprep.subr.mxu0 0.0
        %1785 = vmatpush1.msra.mxu0 0.0
        %1786 = vmatprep.subr.mxu0 0.0
        %1787 = vmatpush1.msra.mxu0 0.0
        %1788 = vmatprep.subr.mxu0 0.0
        %1789 = vmatpush1.msra.mxu0 0.0
        %1790 = vmatprep.subr.mxu0 0.0
        %1791 = vmatpush1.msra.mxu0 0.0
        %1792 = vmatprep.subr.mxu0 0.0
        %1793 = vmatpush1.msra.mxu0 0.0
        %1794 = vmatprep.subr.mxu0 0.0
        %1795 = vmatpush1.msra.mxu0 0.0
        %1796 = vmatprep.subr.mxu0 0.0
        %1797 = vmatpush1.msra.mxu0 0.0
        %1798 = vmatprep.subr.mxu0 0.0
        %1799 = vmatpush1.msra.mxu0 0.0
        %1800 = vmatprep.subr.mxu0 0.0
        %1801 = vmatpush1.msra.mxu0 0.0
        %1802 = vmatprep.subr.mxu0 0.0
        %1803 = vmatpush1.msra.mxu0 0.0
        %1804 = vmatprep.subr.mxu0 0.0
        %1805 = vmatpush1.msra.mxu0 0.0
        %1806 = vmatprep.subr.mxu0 0.0
        %1807 = vmatpush1.msra.mxu0 0.0
        %1808 = vmatprep.subr.mxu0 0.0
        %1809 = vmatpush1.msra.mxu0 0.0
        %1810 = vmatprep.subr.mxu0 0.0
        %1811 = vmatpush1.msra.mxu0 0.0
        %1812 = vmatprep.subr.mxu0 0.0
        %1813 = vmatpush1.msra.mxu0 %v526
        %1814 = vmatprep.subr.mxu0 0.0
        %1815 = vmatpush1.msra.mxu0 %v525
        %1816 = vmatprep.subr.mxu0 0.0
        %1817 = vmatpush2.msra.mxu0 0.0
        %1818 = vmatprep.subr.mxu0 0.0
        %1819 = vmatpush2.msra.mxu0 0.0
        %1820 = vmatprep.subr.mxu0 0.0
        %1821 = vmatpush2.msra.mxu0 0.0
        %1822 = vmatprep.subr.mxu0 0.0
        %1823 = vmatpush2.msra.mxu0 0.0
        %1824 = vmatprep.subr.mxu0 0.0
        %1825 = vmatpush2.msra.mxu0 0.0
        %1826 = vmatprep.subr.mxu0 0.0
        %1827 = vmatpush2.msra.mxu0 0.0
        %1828 = vmatprep.subr.mxu0 0.0
        %1829 = vmatpush2.msra.mxu0 0.0
        %1830 = vmatprep.subr.mxu0 0.0
        %1831 = vmatpush2.msra.mxu0 0.0
        %1832 = vmatprep.subr.mxu0 0.0
        %1833 = vmatpush2.msra.mxu0 0.0
        %1834 = vmatprep.subr.mxu0 0.0
        %1835 = vmatpush2.msra.mxu0 0.0
        %1836 = vmatprep.subr.mxu0 0.0
        %1837 = vmatpush2.msra.mxu0 0.0
        %1838 = vmatprep.subr.mxu0 0.0
        %1839 = vmatpush2.msra.mxu0 0.0
        %1840 = vmatprep.subr.mxu0 0.0
        %1841 = vmatpush2.msra.mxu0 0.0
        %1842 = vmatprep.subr.mxu0 0.0
        %1843 = vmatpush2.msra.mxu0 0.0
        %1844 = vmatprep.subr.mxu0 0.0
        %1845 = vmatpush2.msra.mxu0 0.0
        %1846 = vmatprep.subr.mxu0 0.0
        %1847 = vmatpush2.msra.mxu0 0.0
        %1848 = vmatprep.mubr.f32.mxu0 0.0
        %1849 = vmatmul.mubr.f32.gmra.mxu0 %v549
        %v1850 = vpop.f32.mrf.mxu0
        %v1851 = vadd.f32 0.0, %v1850
        %v1852 = vpop.f32.mrf.mxu0
        %1853 = vmatprep.mubr.f32.mxu0 0.0
        %1854 = vmatmul.mubr.f32.gmra.mxu0 %v552
        %v1855 = vpop.f32.mrf.mxu0
        %v1856 = vadd.f32 0.0, %v1855
        %v1857 = vpop.f32.mrf.mxu0
        %1858 = vmatprep.mubr.f32.mxu0 0.0
        %1859 = vmatmul.mubr.f32.gmra.mxu0 %v555
        %v1860 = vpop.f32.mrf.mxu0
        %v1861 = vadd.f32 0.0, %v1860
        %v1862 = vpop.f32.mrf.mxu0
        %1863 = vmatprep.mubr.f32.mxu0 0.0
        %1864 = vmatmul.mubr.f32.gmra.mxu0 %v558
        %v1865 = vpop.f32.mrf.mxu0
        %v1866 = vadd.f32 0.0, %v1865
        %v1867 = vpop.f32.mrf.mxu0
        %1868 = vdwg.mxu0
        %v1869 = vadd.f32 %v1766, %v1851
        %v1870 = vadd.f32 %v1771, %v1856
        %v1871 = vadd.f32 %v1776, %v1861
        %v1872 = vadd.f32 %v1781, %v1866
        %v1874 = vlaneseq
        %v1875 = vshrl.u32 %v1874, 7
        %v1876 = vsub.s32 0, %v1875
        %v1877 = vrot.slane %v532, %v1876
        %v1879 = vadd.f32 %v1869, %v1877
        %v1880 = vadd.f32 %v1870, %v1877
        %v1881 = vadd.f32 %v1871, %v1877
        %v1882 = vadd.f32 %v1872, %v1877
        %1883 = vmatprep.subr.mxu0 0.0
        %1884 = vmatpush1.msra.mxu0 0.0
        %1885 = vmatprep.subr.mxu0 0.0
        %1886 = vmatpush1.msra.mxu0 0.0
        %1887 = vmatprep.subr.mxu0 0.0
        %1888 = vmatpush1.msra.mxu0 0.0
        %1889 = vmatprep.subr.mxu0 0.0
        %1890 = vmatpush1.msra.mxu0 0.0
        %1891 = vmatprep.subr.mxu0 0.0
        %1892 = vmatpush1.msra.mxu0 0.0
        %1893 = vmatprep.subr.mxu0 0.0
        %1894 = vmatpush1.msra.mxu0 0.0
        %1895 = vmatprep.subr.mxu0 0.0
        %1896 = vmatpush1.msra.mxu0 0.0
        %1897 = vmatprep.subr.mxu0 0.0
        %1898 = vmatpush1.msra.mxu0 0.0
        %1899 = vmatprep.subr.mxu0 0.0
        %1900 = vmatpush1.msra.mxu0 0.0
        %1901 = vmatprep.subr.mxu0 0.0
        %1902 = vmatpush1.msra.mxu0 0.0
        %1903 = vmatprep.subr.mxu0 0.0
        %1904 = vmatpush1.msra.mxu0 0.0
        %1905 = vmatprep.subr.mxu0 0.0
        %1906 = vmatpush1.msra.mxu0 0.0
        %1907 = vmatprep.subr.mxu0 0.0
        %1908 = vmatpush1.msra.mxu0 0.0
        %1909 = vmatprep.subr.mxu0 0.0
        %1910 = vmatpush1.msra.mxu0 0.0
        %1911 = vmatprep.subr.mxu0 0.0
        %1912 = vmatpush1.msra.mxu0 %v521
        %1913 = vmatprep.subr.mxu0 0.0
        %1914 = vmatpush1.msra.mxu0 %v520
        %1915 = vmatprep.subr.mxu0 0.0
        %1916 = vmatpush2.msra.mxu0 0.0
        %1917 = vmatprep.subr.mxu0 0.0
        %1918 = vmatpush2.msra.mxu0 0.0
        %1919 = vmatprep.subr.mxu0 0.0
        %1920 = vmatpush2.msra.mxu0 0.0
        %1921 = vmatprep.subr.mxu0 0.0
        %1922 = vmatpush2.msra.mxu0 0.0
        %1923 = vmatprep.subr.mxu0 0.0
        %1924 = vmatpush2.msra.mxu0 0.0
        %1925 = vmatprep.subr.mxu0 0.0
        %1926 = vmatpush2.msra.mxu0 0.0
        %1927 = vmatprep.subr.mxu0 0.0
        %1928 = vmatpush2.msra.mxu0 0.0
        %1929 = vmatprep.subr.mxu0 0.0
        %1930 = vmatpush2.msra.mxu0 0.0
        %1931 = vmatprep.subr.mxu0 0.0
        %1932 = vmatpush2.msra.mxu0 0.0
        %1933 = vmatprep.subr.mxu0 0.0
        %1934 = vmatpush2.msra.mxu0 0.0
        %1935 = vmatprep.subr.mxu0 0.0
        %1936 = vmatpush2.msra.mxu0 0.0
        %1937 = vmatprep.subr.mxu0 0.0
        %1938 = vmatpush2.msra.mxu0 0.0
        %1939 = vmatprep.subr.mxu0 0.0
        %1940 = vmatpush2.msra.mxu0 0.0
        %1941 = vmatprep.subr.mxu0 0.0
        %1942 = vmatpush2.msra.mxu0 0.0
        %1943 = vmatprep.subr.mxu0 0.0
        %1944 = vmatpush2.msra.mxu0 0.0
        %1945 = vmatprep.subr.mxu0 0.0
        %1946 = vmatpush2.msra.mxu0 0.0
        %1947 = vmatprep.mubr.f32.mxu0 0.0
        %1948 = vmatmul.mubr.f32.gmra.mxu0 %v1322
        %v1949 = vpop.f32.mrf.mxu0
        %v1950 = vadd.f32 0.0, %v1949
        %v1951 = vpop.f32.mrf.mxu0
        %1952 = vmatprep.mubr.f32.mxu0 0.0
        %1953 = vmatmul.mubr.f32.gmra.mxu0 %v1325
        %v1954 = vpop.f32.mrf.mxu0
        %v1955 = vadd.f32 0.0, %v1954
        %v1956 = vpop.f32.mrf.mxu0
        %1957 = vmatprep.mubr.f32.mxu0 0.0
        %1958 = vmatmul.mubr.f32.gmra.mxu0 %v1328
        %v1959 = vpop.f32.mrf.mxu0
        %v1960 = vadd.f32 0.0, %v1959
        %v1961 = vpop.f32.mrf.mxu0
        %1962 = vmatprep.mubr.f32.mxu0 0.0
        %1963 = vmatmul.mubr.f32.gmra.mxu0 %v1331
        %v1964 = vpop.f32.mrf.mxu0
        %v1965 = vadd.f32 0.0, %v1964
        %v1966 = vpop.f32.mrf.mxu0
        %1967 = vdwg.mxu0
        %1968 = vmatprep.subr.mxu0 0.0
        %1969 = vmatpush1.msra.mxu0 0.0
        %1970 = vmatprep.subr.mxu0 0.0
        %1971 = vmatpush1.msra.mxu0 0.0
        %1972 = vmatprep.subr.mxu0 0.0
        %1973 = vmatpush1.msra.mxu0 0.0
        %1974 = vmatprep.subr.mxu0 0.0
        %1975 = vmatpush1.msra.mxu0 0.0
        %1976 = vmatprep.subr.mxu0 0.0
        %1977 = vmatpush1.msra.mxu0 0.0
        %1978 = vmatprep.subr.mxu0 0.0
        %1979 = vmatpush1.msra.mxu0 0.0
        %1980 = vmatprep.subr.mxu0 0.0
        %1981 = vmatpush1.msra.mxu0 0.0
        %1982 = vmatprep.subr.mxu0 0.0
        %1983 = vmatpush1.msra.mxu0 0.0
        %1984 = vmatprep.subr.mxu0 0.0
        %1985 = vmatpush1.msra.mxu0 0.0
        %1986 = vmatprep.subr.mxu0 0.0
        %1987 = vmatpush1.msra.mxu0 0.0
        %1988 = vmatprep.subr.mxu0 0.0
        %1989 = vmatpush1.msra.mxu0 0.0
        %1990 = vmatprep.subr.mxu0 0.0
        %1991 = vmatpush1.msra.mxu0 0.0
        %1992 = vmatprep.subr.mxu0 0.0
        %1993 = vmatpush1.msra.mxu0 0.0
        %1994 = vmatprep.subr.mxu0 0.0
        %1995 = vmatpush1.msra.mxu0 0.0
        %1996 = vmatprep.subr.mxu0 0.0
        %1997 = vmatpush1.msra.mxu0 %v513
        %1998 = vmatprep.subr.mxu0 0.0
        %1999 = vmatpush1.msra.mxu0 %v512
        %2000 = vmatprep.subr.mxu0 0.0
        %2001 = vmatpush2.msra.mxu0 0.0
        %2002 = vmatprep.subr.mxu0 0.0
        %2003 = vmatpush2.msra.mxu0 0.0
        %2004 = vmatprep.subr.mxu0 0.0
        %2005 = vmatpush2.msra.mxu0 0.0
        %2006 = vmatprep.subr.mxu0 0.0
        %2007 = vmatpush2.msra.mxu0 0.0
        %2008 = vmatprep.subr.mxu0 0.0
        %2009 = vmatpush2.msra.mxu0 0.0
        %2010 = vmatprep.subr.mxu0 0.0
        %2011 = vmatpush2.msra.mxu0 0.0
        %2012 = vmatprep.subr.mxu0 0.0
        %2013 = vmatpush2.msra.mxu0 0.0
        %2014 = vmatprep.subr.mxu0 0.0
        %2015 = vmatpush2.msra.mxu0 0.0
        %2016 = vmatprep.subr.mxu0 0.0
        %2017 = vmatpush2.msra.mxu0 0.0
        %2018 = vmatprep.subr.mxu0 0.0
        %2019 = vmatpush2.msra.mxu0 0.0
        %2020 = vmatprep.subr.mxu0 0.0
        %2021 = vmatpush2.msra.mxu0 0.0
        %2022 = vmatprep.subr.mxu0 0.0
        %2023 = vmatpush2.msra.mxu0 0.0
        %2024 = vmatprep.subr.mxu0 0.0
        %2025 = vmatpush2.msra.mxu0 0.0
        %2026 = vmatprep.subr.mxu0 0.0
        %2027 = vmatpush2.msra.mxu0 0.0
        %2028 = vmatprep.subr.mxu0 0.0
        %2029 = vmatpush2.msra.mxu0 0.0
        %2030 = vmatprep.subr.mxu0 0.0
        %2031 = vmatpush2.msra.mxu0 0.0
        %2032 = vmatprep.mubr.f32.mxu0 0.0
        %2033 = vmatmul.mubr.f32.gmra.mxu0 %v1419
        %v2034 = vpop.f32.mrf.mxu0
        %v2035 = vadd.f32 %v1950, %v2034
        %v2036 = vpop.f32.mrf.mxu0
        %2037 = vmatprep.mubr.f32.mxu0 0.0
        %2038 = vmatmul.mubr.f32.gmra.mxu0 %v1422
        %v2039 = vpop.f32.mrf.mxu0
        %v2040 = vadd.f32 %v1955, %v2039
        %v2041 = vpop.f32.mrf.mxu0
        %2042 = vmatprep.mubr.f32.mxu0 0.0
        %2043 = vmatmul.mubr.f32.gmra.mxu0 %v1425
        %v2044 = vpop.f32.mrf.mxu0
        %v2045 = vadd.f32 %v1960, %v2044
        %v2046 = vpop.f32.mrf.mxu0
        %2047 = vmatprep.mubr.f32.mxu0 0.0
        %2048 = vmatmul.mubr.f32.gmra.mxu0 %v1428
        %v2049 = vpop.f32.mrf.mxu0
        %v2050 = vadd.f32 %v1965, %v2049
        %v2051 = vpop.f32.mrf.mxu0
        %2052 = vdwg.mxu0
        %v2054 = vlaneseq
        %v2055 = vshrl.u32 %v2054, 7
        %v2056 = vsub.s32 0, %v2055
        %v2057 = vrot.slane %v534, %v2056
        %v2059 = vadd.f32 %v2035, %v2057
        %v2060 = vadd.f32 %v2040, %v2057
        %v2061 = vadd.f32 %v2045, %v2057
        %v2062 = vadd.f32 %v2050, %v2057
        %v2064 = vlaneseq
        %v2065 = vshrl.u32 %v2064, 7
        %v2066 = vsub.s32 0, %v2065
        %v2067 = vrot.slane %v536, %v2066
        %2069 = vmatprep.subr.mxu0 0.0
        %2070 = vmatpush1.msra.mxu0 0.0
        %2071 = vmatprep.subr.mxu0 0.0
        %2072 = vmatpush1.msra.mxu0 0.0
        %2073 = vmatprep.subr.mxu0 0.0
        %2074 = vmatpush1.msra.mxu0 0.0
        %2075 = vmatprep.subr.mxu0 0.0
        %2076 = vmatpush1.msra.mxu0 0.0
        %2077 = vmatprep.subr.mxu0 0.0
        %2078 = vmatpush1.msra.mxu0 0.0
        %2079 = vmatprep.subr.mxu0 0.0
        %2080 = vmatpush1.msra.mxu0 0.0
        %2081 = vmatprep.subr.mxu0 0.0
        %2082 = vmatpush1.msra.mxu0 0.0
        %2083 = vmatprep.subr.mxu0 0.0
        %2084 = vmatpush1.msra.mxu0 0.0
        %2085 = vmatprep.subr.mxu0 0.0
        %2086 = vmatpush1.msra.mxu0 0.0
        %2087 = vmatprep.subr.mxu0 0.0
        %2088 = vmatpush1.msra.mxu0 0.0
        %2089 = vmatprep.subr.mxu0 0.0
        %2090 = vmatpush1.msra.mxu0 0.0
        %2091 = vmatprep.subr.mxu0 0.0
        %2092 = vmatpush1.msra.mxu0 0.0
        %2093 = vmatprep.subr.mxu0 0.0
        %2094 = vmatpush1.msra.mxu0 0.0
        %2095 = vmatprep.subr.mxu0 0.0
        %2096 = vmatpush1.msra.mxu0 0.0
        %2097 = vmatprep.subr.mxu0 0.0
        %2098 = vmatpush1.msra.mxu0 %v529
        %2099 = vmatprep.subr.mxu0 0.0
        %2100 = vmatpush1.msra.mxu0 %v528
        %2101 = vmatprep.subr.mxu0 0.0
        %2102 = vmatpush2.msra.mxu0 0.0
        %2103 = vmatprep.subr.mxu0 0.0
        %2104 = vmatpush2.msra.mxu0 0.0
        %2105 = vmatprep.subr.mxu0 0.0
        %2106 = vmatpush2.msra.mxu0 0.0
        %2107 = vmatprep.subr.mxu0 0.0
        %2108 = vmatpush2.msra.mxu0 0.0
        %2109 = vmatprep.subr.mxu0 0.0
        %2110 = vmatpush2.msra.mxu0 0.0
        %2111 = vmatprep.subr.mxu0 0.0
        %2112 = vmatpush2.msra.mxu0 0.0
        %2113 = vmatprep.subr.mxu0 0.0
        %2114 = vmatpush2.msra.mxu0 0.0
        %2115 = vmatprep.subr.mxu0 0.0
        %2116 = vmatpush2.msra.mxu0 0.0
        %2117 = vmatprep.subr.mxu0 0.0
        %2118 = vmatpush2.msra.mxu0 0.0
        %2119 = vmatprep.subr.mxu0 0.0
        %2120 = vmatpush2.msra.mxu0 0.0
        %2121 = vmatprep.subr.mxu0 0.0
        %2122 = vmatpush2.msra.mxu0 0.0
        %2123 = vmatprep.subr.mxu0 0.0
        %2124 = vmatpush2.msra.mxu0 0.0
        %2125 = vmatprep.subr.mxu0 0.0
        %2126 = vmatpush2.msra.mxu0 0.0
        %2127 = vmatprep.subr.mxu0 0.0
        %2128 = vmatpush2.msra.mxu0 0.0
        %2129 = vmatprep.subr.mxu0 0.0
        %2130 = vmatpush2.msra.mxu0 0.0
        %2131 = vmatprep.subr.mxu0 0.0
        %2132 = vmatpush2.msra.mxu0 0.0
        %2133 = vmatprep.mubr.f32.mxu0 0.0
        %2134 = vmatmul.mubr.f32.gmra.mxu0 %v549
        %v2135 = vpop.f32.mrf.mxu0
        %v2136 = vadd.f32 %v2067, %v2135
        %v2137 = vpop.f32.mrf.mxu0
        %2138 = vmatprep.mubr.f32.mxu0 0.0
        %2139 = vmatmul.mubr.f32.gmra.mxu0 %v552
        %v2140 = vpop.f32.mrf.mxu0
        %v2141 = vadd.f32 %v2067, %v2140
        %v2142 = vpop.f32.mrf.mxu0
        %2143 = vmatprep.mubr.f32.mxu0 0.0
        %2144 = vmatmul.mubr.f32.gmra.mxu0 %v555
        %v2145 = vpop.f32.mrf.mxu0
        %v2146 = vadd.f32 %v2067, %v2145
        %v2147 = vpop.f32.mrf.mxu0
        %2148 = vmatprep.mubr.f32.mxu0 0.0
        %2149 = vmatmul.mubr.f32.gmra.mxu0 %v558
        %v2150 = vpop.f32.mrf.mxu0
        %v2151 = vadd.f32 %v2067, %v2150
        %v2152 = vpop.f32.mrf.mxu0
        %2153 = vdwg.mxu0
        %v2154 = vxor.u32 %v1610, 2147483648
        %v2155 = vxor.u32 %v1611, 2147483648
        %v2156 = vxor.u32 %v1612, 2147483648
        %v2157 = vxor.u32 %v1613, 2147483648
        %v2158 = vmul.f32 %v2154, 1.442695
        %v2159 = vpow.pop %v2158
        %v2160 = vmul.f32 %v2155, 1.442695
        %v2161 = vpow.pop %v2160
        %v2162 = vmul.f32 %v2156, 1.442695
        %v2163 = vpow.pop %v2162
        %v2164 = vmul.f32 %v2157, 1.442695
        %v2165 = vpow.pop %v2164
        %v2166 = vadd.f32 %v2159, 1.0
        %v2167 = vadd.f32 %v2161, 1.0
        %v2168 = vadd.f32 %v2163, 1.0
        %v2169 = vadd.f32 %v2165, 1.0
        %v2170 = vrcp.pop %v2166
        %v2171 = vmul.f32 1.0, %v2170
        %v2172 = vrcp.pop %v2167
        %v2173 = vmul.f32 1.0, %v2172
        %v2174 = vrcp.pop %v2168
        %v2175 = vmul.f32 1.0, %v2174
        %v2176 = vrcp.pop %v2169
        %v2177 = vmul.f32 1.0, %v2176
        %v2178 = vxor.u32 %v1879, 2147483648
        %v2179 = vxor.u32 %v1880, 2147483648
        %v2180 = vxor.u32 %v1881, 2147483648
        %v2181 = vxor.u32 %v1882, 2147483648
        %v2182 = vmul.f32 %v2178, 1.442695
        %v2183 = vpow.pop %v2182
        %v2184 = vmul.f32 %v2179, 1.442695
        %v2185 = vpow.pop %v2184
        %v2186 = vmul.f32 %v2180, 1.442695
        %v2187 = vpow.pop %v2186
        %v2188 = vmul.f32 %v2181, 1.442695
        %v2189 = vpow.pop %v2188
        %v2190 = vadd.f32 %v2183, 1.0
        %v2191 = vadd.f32 %v2185, 1.0
        %v2192 = vadd.f32 %v2187, 1.0
        %v2193 = vadd.f32 %v2189, 1.0
        %v2194 = vrcp.pop %v2190
        %v2195 = vmul.f32 1.0, %v2194
        %v2196 = vrcp.pop %v2191
        %v2197 = vmul.f32 1.0, %v2196
        %v2198 = vrcp.pop %v2192
        %v2199 = vmul.f32 1.0, %v2198
        %v2200 = vrcp.pop %v2193
        %v2201 = vmul.f32 1.0, %v2200
        %v2202 = vmul.f32 %v2171, %v2136
        %v2203 = vmul.f32 %v2173, %v2141
        %v2204 = vmul.f32 %v2175, %v2146
        %v2205 = vmul.f32 %v2177, %v2151
        %v2206 = vadd.f32 %v2059, %v2202
        %v2207 = vadd.f32 %v2060, %v2203
        %v2208 = vadd.f32 %v2061, %v2204
        %v2209 = vadd.f32 %v2062, %v2205
        %v2210 = vtanh.pop %v2206
        %v2211 = vtanh.pop %v2207
        %v2212 = vtanh.pop %v2208
        %v2213 = vtanh.pop %v2209
        %v2214 = vsub.f32 %v537, %v2210
        %v2215 = vsub.f32 %v538, %v2211
        %v2216 = vsub.f32 %v539, %v2212
        %v2217 = vsub.f32 %v540, %v2213
        %v2218 = vmul.f32 %v2195, %v2214
        %v2219 = vmul.f32 %v2197, %v2215
        %v2220 = vmul.f32 %v2199, %v2216
        %v2221 = vmul.f32 %v2201, %v2217
        %v2222 = vadd.f32 %v2210, %v2218
        %v2223 = vadd.f32 %v2211, %v2219
        %v2224 = vadd.f32 %v2212, %v2220
        %v2225 = vadd.f32 %v2213, %v2221
        %v2227 = vsel %vm547, %v2222, 0
        %v2230 = vsel %vm547, %v2223, 0
        %v2233 = vsel %vm547, %v2224, 0
        %v2236 = vsel %vm547, %v2225, 0
        %2238 = vmatprep.subr.mxu0 0.0
        %2239 = vmatpush1.msra.mxu0 0.0
        %2240 = vmatprep.subr.mxu0 0.0
        %2241 = vmatpush1.msra.mxu0 0.0
        %2242 = vmatprep.subr.mxu0 0.0
        %2243 = vmatpush1.msra.mxu0 0.0
        %2244 = vmatprep.subr.mxu0 0.0
        %2245 = vmatpush1.msra.mxu0 0.0
        %2246 = vmatprep.subr.mxu0 0.0
        %2247 = vmatpush1.msra.mxu0 0.0
        %2248 = vmatprep.subr.mxu0 0.0
        %2249 = vmatpush1.msra.mxu0 0.0
        %2250 = vmatprep.subr.mxu0 0.0
        %2251 = vmatpush1.msra.mxu0 0.0
        %2252 = vmatprep.subr.mxu0 0.0
        %2253 = vmatpush1.msra.mxu0 0.0
        %2254 = vmatprep.subr.mxu0 0.0
        %2255 = vmatpush1.msra.mxu0 0.0
        %2256 = vmatprep.subr.mxu0 0.0
        %2257 = vmatpush1.msra.mxu0 0.0
        %2258 = vmatprep.subr.mxu0 0.0
        %2259 = vmatpush1.msra.mxu0 0.0
        %2260 = vmatprep.subr.mxu0 0.0
        %2261 = vmatpush1.msra.mxu0 0.0
        %2262 = vmatprep.subr.mxu0 0.0
        %2263 = vmatpush1.msra.mxu0 0.0
        %2264 = vmatprep.subr.mxu0 0.0
        %2265 = vmatpush1.msra.mxu0 0.0
        %2266 = vmatprep.subr.mxu0 0.0
        %2267 = vmatpush1.msra.mxu0 %v499
        %2268 = vmatprep.subr.mxu0 0.0
        %2269 = vmatpush1.msra.mxu0 %v498
        %2270 = vmatprep.subr.mxu0 0.0
        %2271 = vmatpush2.msra.mxu0 0.0
        %2272 = vmatprep.subr.mxu0 0.0
        %2273 = vmatpush2.msra.mxu0 0.0
        %2274 = vmatprep.subr.mxu0 0.0
        %2275 = vmatpush2.msra.mxu0 0.0
        %2276 = vmatprep.subr.mxu0 0.0
        %2277 = vmatpush2.msra.mxu0 0.0
        %2278 = vmatprep.subr.mxu0 0.0
        %2279 = vmatpush2.msra.mxu0 0.0
        %2280 = vmatprep.subr.mxu0 0.0
        %2281 = vmatpush2.msra.mxu0 0.0
        %2282 = vmatprep.subr.mxu0 0.0
        %2283 = vmatpush2.msra.mxu0 0.0
        %2284 = vmatprep.subr.mxu0 0.0
        %2285 = vmatpush2.msra.mxu0 0.0
        %2286 = vmatprep.subr.mxu0 0.0
        %2287 = vmatpush2.msra.mxu0 0.0
        %2288 = vmatprep.subr.mxu0 0.0
        %2289 = vmatpush2.msra.mxu0 0.0
        %2290 = vmatprep.subr.mxu0 0.0
        %2291 = vmatpush2.msra.mxu0 0.0
        %2292 = vmatprep.subr.mxu0 0.0
        %2293 = vmatpush2.msra.mxu0 0.0
        %2294 = vmatprep.subr.mxu0 0.0
        %2295 = vmatpush2.msra.mxu0 0.0
        %2296 = vmatprep.subr.mxu0 0.0
        %2297 = vmatpush2.msra.mxu0 0.0
        %2298 = vmatprep.subr.mxu0 0.0
        %2299 = vmatpush2.msra.mxu0 0.0
        %2300 = vmatprep.subr.mxu0 0.0
        %2301 = vmatpush2.msra.mxu0 0.0
        %2302 = vmatprep.mubr.f32.mxu0 0.0
        %2303 = vmatmul.mubr.f32.gmra.mxu0 %v2227
        %v2304 = vpop.f32.mrf.mxu0
        %v2305 = vadd.f32 %v545, %v2304
        %v2306 = vpop.f32.mrf.mxu0
        %2307 = vmatprep.mubr.f32.mxu0 0.0
        %2308 = vmatmul.mubr.f32.gmra.mxu0 %v2230
        %v2309 = vpop.f32.mrf.mxu0
        %v2310 = vadd.f32 %v545, %v2309
        %v2311 = vpop.f32.mrf.mxu0
        %2312 = vmatprep.mubr.f32.mxu0 0.0
        %2313 = vmatmul.mubr.f32.gmra.mxu0 %v2233
        %v2314 = vpop.f32.mrf.mxu0
        %v2315 = vadd.f32 %v545, %v2314
        %v2316 = vpop.f32.mrf.mxu0
        %2317 = vmatprep.mubr.f32.mxu0 0.0
        %2318 = vmatmul.mubr.f32.gmra.mxu0 %v2236
        %v2319 = vpop.f32.mrf.mxu0
        %v2320 = vadd.f32 %v545, %v2319
        %v2321 = vpop.f32.mrf.mxu0
        %2322 = vdwg.mxu0
        %2323 = vmatprep.subr.mxu0 0.0
        %2324 = vmatpush1.msra.mxu0 0.0
        %2325 = vmatprep.subr.mxu0 0.0
        %2326 = vmatpush1.msra.mxu0 0.0
        %2327 = vmatprep.subr.mxu0 0.0
        %2328 = vmatpush1.msra.mxu0 0.0
        %2329 = vmatprep.subr.mxu0 0.0
        %2330 = vmatpush1.msra.mxu0 0.0
        %2331 = vmatprep.subr.mxu0 0.0
        %2332 = vmatpush1.msra.mxu0 0.0
        %2333 = vmatprep.subr.mxu0 0.0
        %2334 = vmatpush1.msra.mxu0 0.0
        %2335 = vmatprep.subr.mxu0 0.0
        %2336 = vmatpush1.msra.mxu0 0.0
        %2337 = vmatprep.subr.mxu0 0.0
        %2338 = vmatpush1.msra.mxu0 0.0
        %2339 = vmatprep.subr.mxu0 0.0
        %2340 = vmatpush1.msra.mxu0 0.0
        %2341 = vmatprep.subr.mxu0 0.0
        %2342 = vmatpush1.msra.mxu0 0.0
        %2343 = vmatprep.subr.mxu0 0.0
        %2344 = vmatpush1.msra.mxu0 0.0
        %2345 = vmatprep.subr.mxu0 0.0
        %2346 = vmatpush1.msra.mxu0 0.0
        %2347 = vmatprep.subr.mxu0 0.0
        %2348 = vmatpush1.msra.mxu0 0.0
        %2349 = vmatprep.subr.mxu0 0.0
        %2350 = vmatpush1.msra.mxu0 0.0
        %2351 = vmatprep.subr.mxu0 0.0
        %2352 = vmatpush1.msra.mxu0 %v502
        %2353 = vmatprep.subr.mxu0 0.0
        %2354 = vmatpush1.msra.mxu0 %v501
        %2355 = vmatprep.subr.mxu0 0.0
        %2356 = vmatpush2.msra.mxu0 0.0
        %2357 = vmatprep.subr.mxu0 0.0
        %2358 = vmatpush2.msra.mxu0 0.0
        %2359 = vmatprep.subr.mxu0 0.0
        %2360 = vmatpush2.msra.mxu0 0.0
        %2361 = vmatprep.subr.mxu0 0.0
        %2362 = vmatpush2.msra.mxu0 0.0
        %2363 = vmatprep.subr.mxu0 0.0
        %2364 = vmatpush2.msra.mxu0 0.0
        %2365 = vmatprep.subr.mxu0 0.0
        %2366 = vmatpush2.msra.mxu0 0.0
        %2367 = vmatprep.subr.mxu0 0.0
        %2368 = vmatpush2.msra.mxu0 0.0
        %2369 = vmatprep.subr.mxu0 0.0
        %2370 = vmatpush2.msra.mxu0 0.0
        %2371 = vmatprep.subr.mxu0 0.0
        %2372 = vmatpush2.msra.mxu0 0.0
        %2373 = vmatprep.subr.mxu0 0.0
        %2374 = vmatpush2.msra.mxu0 0.0
        %2375 = vmatprep.subr.mxu0 0.0
        %2376 = vmatpush2.msra.mxu0 0.0
        %2377 = vmatprep.subr.mxu0 0.0
        %2378 = vmatpush2.msra.mxu0 0.0
        %2379 = vmatprep.subr.mxu0 0.0
        %2380 = vmatpush2.msra.mxu0 0.0
        %2381 = vmatprep.subr.mxu0 0.0
        %2382 = vmatpush2.msra.mxu0 0.0
        %2383 = vmatprep.subr.mxu0 0.0
        %2384 = vmatpush2.msra.mxu0 0.0
        %2385 = vmatprep.subr.mxu0 0.0
        %2386 = vmatpush2.msra.mxu0 0.0
        %2387 = vmatprep.mubr.f32.mxu0 0.0
        %2388 = vmatmul.mubr.f32.gmra.mxu0 %v2227
        %v2389 = vpop.f32.mrf.mxu0
        %v2390 = vadd.f32 %v649, %v2389
        %v2391 = vpop.f32.mrf.mxu0
        %2392 = vmatprep.mubr.f32.mxu0 0.0
        %2393 = vmatmul.mubr.f32.gmra.mxu0 %v2230
        %v2394 = vpop.f32.mrf.mxu0
        %v2395 = vadd.f32 %v649, %v2394
        %v2396 = vpop.f32.mrf.mxu0
        %2397 = vmatprep.mubr.f32.mxu0 0.0
        %2398 = vmatmul.mubr.f32.gmra.mxu0 %v2233
        %v2399 = vpop.f32.mrf.mxu0
        %v2400 = vadd.f32 %v649, %v2399
        %v2401 = vpop.f32.mrf.mxu0
        %2402 = vmatprep.mubr.f32.mxu0 0.0
        %2403 = vmatmul.mubr.f32.gmra.mxu0 %v2236
        %v2404 = vpop.f32.mrf.mxu0
        %v2405 = vadd.f32 %v649, %v2404
        %v2406 = vpop.f32.mrf.mxu0
        %2407 = vdwg.mxu0
        %2408 = vmatprep.subr.mxu0 0.0
        %2409 = vmatpush1.msra.mxu0 0.0
        %2410 = vmatprep.subr.mxu0 0.0
        %2411 = vmatpush1.msra.mxu0 0.0
        %2412 = vmatprep.subr.mxu0 0.0
        %2413 = vmatpush1.msra.mxu0 0.0
        %2414 = vmatprep.subr.mxu0 0.0
        %2415 = vmatpush1.msra.mxu0 0.0
        %2416 = vmatprep.subr.mxu0 0.0
        %2417 = vmatpush1.msra.mxu0 0.0
        %2418 = vmatprep.subr.mxu0 0.0
        %2419 = vmatpush1.msra.mxu0 0.0
        %2420 = vmatprep.subr.mxu0 0.0
        %2421 = vmatpush1.msra.mxu0 0.0
        %2422 = vmatprep.subr.mxu0 0.0
        %2423 = vmatpush1.msra.mxu0 0.0
        %2424 = vmatprep.subr.mxu0 0.0
        %2425 = vmatpush1.msra.mxu0 0.0
        %2426 = vmatprep.subr.mxu0 0.0
        %2427 = vmatpush1.msra.mxu0 0.0
        %2428 = vmatprep.subr.mxu0 0.0
        %2429 = vmatpush1.msra.mxu0 0.0
        %2430 = vmatprep.subr.mxu0 0.0
        %2431 = vmatpush1.msra.mxu0 0.0
        %2432 = vmatprep.subr.mxu0 0.0
        %2433 = vmatpush1.msra.mxu0 0.0
        %2434 = vmatprep.subr.mxu0 0.0
        %2435 = vmatpush1.msra.mxu0 0.0
        %2436 = vmatprep.subr.mxu0 0.0
        %2437 = vmatpush1.msra.mxu0 0.0
        %2438 = vmatprep.subr.mxu0 0.0
        %2439 = vmatpush1.msra.mxu0 %v2305
        %2440 = vmatprep.subr.mxu0 0.0
        %2441 = vmatpush2.msra.mxu0 0.0
        %2442 = vmatprep.subr.mxu0 0.0
        %2443 = vmatpush2.msra.mxu0 0.0
        %2444 = vmatprep.subr.mxu0 0.0
        %2445 = vmatpush2.msra.mxu0 0.0
        %2446 = vmatprep.subr.mxu0 0.0
        %2447 = vmatpush2.msra.mxu0 0.0
        %2448 = vmatprep.subr.mxu0 0.0
        %2449 = vmatpush2.msra.mxu0 0.0
        %2450 = vmatprep.subr.mxu0 0.0
        %2451 = vmatpush2.msra.mxu0 0.0
        %2452 = vmatprep.subr.mxu0 0.0
        %2453 = vmatpush2.msra.mxu0 0.0
        %2454 = vmatprep.subr.mxu0 0.0
        %2455 = vmatpush2.msra.mxu0 0.0
        %2456 = vmatprep.subr.mxu0 0.0
        %2457 = vmatpush2.msra.mxu0 0.0
        %2458 = vmatprep.subr.mxu0 0.0
        %2459 = vmatpush2.msra.mxu0 0.0
        %2460 = vmatprep.subr.mxu0 0.0
        %2461 = vmatpush2.msra.mxu0 0.0
        %2462 = vmatprep.subr.mxu0 0.0
        %2463 = vmatpush2.msra.mxu0 0.0
        %2464 = vmatprep.subr.mxu0 0.0
        %2465 = vmatpush2.msra.mxu0 0.0
        %2466 = vmatprep.subr.mxu0 0.0
        %2467 = vmatpush2.msra.mxu0 0.0
        %2468 = vmatprep.subr.mxu0 0.0
        %2469 = vmatpush2.msra.mxu0 0.0
        %2470 = vmatprep.subr.mxu0 0.0
        %2471 = vmatpush2.msra.mxu0 0.0
        %2472 = vmatprep.mubr.f32.mxu0 0.0
        %2473 = vmatmul.mubr.f32.gmra.mxu0 %v738
        %v2474 = vpop.f32.mrf.mxu0
        %v2475 = vadd.f32 0.0, %v2474
        %v2476 = vpop.f32.mrf.mxu0
        %2477 = vdwg.mxu0
        %2478 = vmatprep.subr.mxu0 0.0
        %2479 = vmatpush1.msra.mxu0 0.0
        %2480 = vmatprep.subr.mxu0 0.0
        %2481 = vmatpush1.msra.mxu0 0.0
        %2482 = vmatprep.subr.mxu0 0.0
        %2483 = vmatpush1.msra.mxu0 0.0
        %2484 = vmatprep.subr.mxu0 0.0
        %2485 = vmatpush1.msra.mxu0 0.0
        %2486 = vmatprep.subr.mxu0 0.0
        %2487 = vmatpush1.msra.mxu0 0.0
        %2488 = vmatprep.subr.mxu0 0.0
        %2489 = vmatpush1.msra.mxu0 0.0
        %2490 = vmatprep.subr.mxu0 0.0
        %2491 = vmatpush1.msra.mxu0 0.0
        %2492 = vmatprep.subr.mxu0 0.0
        %2493 = vmatpush1.msra.mxu0 0.0
        %2494 = vmatprep.subr.mxu0 0.0
        %2495 = vmatpush1.msra.mxu0 0.0
        %2496 = vmatprep.subr.mxu0 0.0
        %2497 = vmatpush1.msra.mxu0 0.0
        %2498 = vmatprep.subr.mxu0 0.0
        %2499 = vmatpush1.msra.mxu0 0.0
        %2500 = vmatprep.subr.mxu0 0.0
        %2501 = vmatpush1.msra.mxu0 0.0
        %2502 = vmatprep.subr.mxu0 0.0
        %2503 = vmatpush1.msra.mxu0 0.0
        %2504 = vmatprep.subr.mxu0 0.0
        %2505 = vmatpush1.msra.mxu0 0.0
        %2506 = vmatprep.subr.mxu0 0.0
        %2507 = vmatpush1.msra.mxu0 0.0
        %2508 = vmatprep.subr.mxu0 0.0
        %2509 = vmatpush1.msra.mxu0 %v2310
        %2510 = vmatprep.subr.mxu0 0.0
        %2511 = vmatpush2.msra.mxu0 0.0
        %2512 = vmatprep.subr.mxu0 0.0
        %2513 = vmatpush2.msra.mxu0 0.0
        %2514 = vmatprep.subr.mxu0 0.0
        %2515 = vmatpush2.msra.mxu0 0.0
        %2516 = vmatprep.subr.mxu0 0.0
        %2517 = vmatpush2.msra.mxu0 0.0
        %2518 = vmatprep.subr.mxu0 0.0
        %2519 = vmatpush2.msra.mxu0 0.0
        %2520 = vmatprep.subr.mxu0 0.0
        %2521 = vmatpush2.msra.mxu0 0.0
        %2522 = vmatprep.subr.mxu0 0.0
        %2523 = vmatpush2.msra.mxu0 0.0
        %2524 = vmatprep.subr.mxu0 0.0
        %2525 = vmatpush2.msra.mxu0 0.0
        %2526 = vmatprep.subr.mxu0 0.0
        %2527 = vmatpush2.msra.mxu0 0.0
        %2528 = vmatprep.subr.mxu0 0.0
        %2529 = vmatpush2.msra.mxu0 0.0
        %2530 = vmatprep.subr.mxu0 0.0
        %2531 = vmatpush2.msra.mxu0 0.0
        %2532 = vmatprep.subr.mxu0 0.0
        %2533 = vmatpush2.msra.mxu0 0.0
        %2534 = vmatprep.subr.mxu0 0.0
        %2535 = vmatpush2.msra.mxu0 0.0
        %2536 = vmatprep.subr.mxu0 0.0
        %2537 = vmatpush2.msra.mxu0 0.0
        %2538 = vmatprep.subr.mxu0 0.0
        %2539 = vmatpush2.msra.mxu0 0.0
        %2540 = vmatprep.subr.mxu0 0.0
        %2541 = vmatpush2.msra.mxu0 0.0
        %2542 = vmatprep.mubr.f32.mxu0 0.0
        %2543 = vmatmul.mubr.f32.gmra.mxu0 %v811
        %v2544 = vpop.f32.mrf.mxu0
        %v2545 = vadd.f32 0.0, %v2544
        %v2546 = vpop.f32.mrf.mxu0
        %2547 = vdwg.mxu0
        %2548 = vmatprep.subr.mxu0 0.0
        %2549 = vmatpush1.msra.mxu0 0.0
        %2550 = vmatprep.subr.mxu0 0.0
        %2551 = vmatpush1.msra.mxu0 0.0
        %2552 = vmatprep.subr.mxu0 0.0
        %2553 = vmatpush1.msra.mxu0 0.0
        %2554 = vmatprep.subr.mxu0 0.0
        %2555 = vmatpush1.msra.mxu0 0.0
        %2556 = vmatprep.subr.mxu0 0.0
        %2557 = vmatpush1.msra.mxu0 0.0
        %2558 = vmatprep.subr.mxu0 0.0
        %2559 = vmatpush1.msra.mxu0 0.0
        %2560 = vmatprep.subr.mxu0 0.0
        %2561 = vmatpush1.msra.mxu0 0.0
        %2562 = vmatprep.subr.mxu0 0.0
        %2563 = vmatpush1.msra.mxu0 0.0
        %2564 = vmatprep.subr.mxu0 0.0
        %2565 = vmatpush1.msra.mxu0 0.0
        %2566 = vmatprep.subr.mxu0 0.0
        %2567 = vmatpush1.msra.mxu0 0.0
        %2568 = vmatprep.subr.mxu0 0.0
        %2569 = vmatpush1.msra.mxu0 0.0
        %2570 = vmatprep.subr.mxu0 0.0
        %2571 = vmatpush1.msra.mxu0 0.0
        %2572 = vmatprep.subr.mxu0 0.0
        %2573 = vmatpush1.msra.mxu0 0.0
        %2574 = vmatprep.subr.mxu0 0.0
        %2575 = vmatpush1.msra.mxu0 0.0
        %2576 = vmatprep.subr.mxu0 0.0
        %2577 = vmatpush1.msra.mxu0 0.0
        %2578 = vmatprep.subr.mxu0 0.0
        %2579 = vmatpush1.msra.mxu0 %v2315
        %2580 = vmatprep.subr.mxu0 0.0
        %2581 = vmatpush2.msra.mxu0 0.0
        %2582 = vmatprep.subr.mxu0 0.0
        %2583 = vmatpush2.msra.mxu0 0.0
        %2584 = vmatprep.subr.mxu0 0.0
        %2585 = vmatpush2.msra.mxu0 0.0
        %2586 = vmatprep.subr.mxu0 0.0
        %2587 = vmatpush2.msra.mxu0 0.0
        %2588 = vmatprep.subr.mxu0 0.0
        %2589 = vmatpush2.msra.mxu0 0.0
        %2590 = vmatprep.subr.mxu0 0.0
        %2591 = vmatpush2.msra.mxu0 0.0
        %2592 = vmatprep.subr.mxu0 0.0
        %2593 = vmatpush2.msra.mxu0 0.0
        %2594 = vmatprep.subr.mxu0 0.0
        %2595 = vmatpush2.msra.mxu0 0.0
        %2596 = vmatprep.subr.mxu0 0.0
        %2597 = vmatpush2.msra.mxu0 0.0
        %2598 = vmatprep.subr.mxu0 0.0
        %2599 = vmatpush2.msra.mxu0 0.0
        %2600 = vmatprep.subr.mxu0 0.0
        %2601 = vmatpush2.msra.mxu0 0.0
        %2602 = vmatprep.subr.mxu0 0.0
        %2603 = vmatpush2.msra.mxu0 0.0
        %2604 = vmatprep.subr.mxu0 0.0
        %2605 = vmatpush2.msra.mxu0 0.0
        %2606 = vmatprep.subr.mxu0 0.0
        %2607 = vmatpush2.msra.mxu0 0.0
        %2608 = vmatprep.subr.mxu0 0.0
        %2609 = vmatpush2.msra.mxu0 0.0
        %2610 = vmatprep.subr.mxu0 0.0
        %2611 = vmatpush2.msra.mxu0 0.0
        %2612 = vmatprep.mubr.f32.mxu0 0.0
        %2613 = vmatmul.mubr.f32.gmra.mxu0 %v884
        %v2614 = vpop.f32.mrf.mxu0
        %v2615 = vadd.f32 0.0, %v2614
        %v2616 = vpop.f32.mrf.mxu0
        %2617 = vdwg.mxu0
        %2618 = vmatprep.subr.mxu0 0.0
        %2619 = vmatpush1.msra.mxu0 0.0
        %2620 = vmatprep.subr.mxu0 0.0
        %2621 = vmatpush1.msra.mxu0 0.0
        %2622 = vmatprep.subr.mxu0 0.0
        %2623 = vmatpush1.msra.mxu0 0.0
        %2624 = vmatprep.subr.mxu0 0.0
        %2625 = vmatpush1.msra.mxu0 0.0
        %2626 = vmatprep.subr.mxu0 0.0
        %2627 = vmatpush1.msra.mxu0 0.0
        %2628 = vmatprep.subr.mxu0 0.0
        %2629 = vmatpush1.msra.mxu0 0.0
        %2630 = vmatprep.subr.mxu0 0.0
        %2631 = vmatpush1.msra.mxu0 0.0
        %2632 = vmatprep.subr.mxu0 0.0
        %2633 = vmatpush1.msra.mxu0 0.0
        %2634 = vmatprep.subr.mxu0 0.0
        %2635 = vmatpush1.msra.mxu0 0.0
        %2636 = vmatprep.subr.mxu0 0.0
        %2637 = vmatpush1.msra.mxu0 0.0
        %2638 = vmatprep.subr.mxu0 0.0
        %2639 = vmatpush1.msra.mxu0 0.0
        %2640 = vmatprep.subr.mxu0 0.0
        %2641 = vmatpush1.msra.mxu0 0.0
        %2642 = vmatprep.subr.mxu0 0.0
        %2643 = vmatpush1.msra.mxu0 0.0
        %2644 = vmatprep.subr.mxu0 0.0
        %2645 = vmatpush1.msra.mxu0 0.0
        %2646 = vmatprep.subr.mxu0 0.0
        %2647 = vmatpush1.msra.mxu0 0.0
        %2648 = vmatprep.subr.mxu0 0.0
        %2649 = vmatpush1.msra.mxu0 %v2320
        %2650 = vmatprep.subr.mxu0 0.0
        %2651 = vmatpush2.msra.mxu0 0.0
        %2652 = vmatprep.subr.mxu0 0.0
        %2653 = vmatpush2.msra.mxu0 0.0
        %2654 = vmatprep.subr.mxu0 0.0
        %2655 = vmatpush2.msra.mxu0 0.0
        %2656 = vmatprep.subr.mxu0 0.0
        %2657 = vmatpush2.msra.mxu0 0.0
        %2658 = vmatprep.subr.mxu0 0.0
        %2659 = vmatpush2.msra.mxu0 0.0
        %2660 = vmatprep.subr.mxu0 0.0
        %2661 = vmatpush2.msra.mxu0 0.0
        %2662 = vmatprep.subr.mxu0 0.0
        %2663 = vmatpush2.msra.mxu0 0.0
        %2664 = vmatprep.subr.mxu0 0.0
        %2665 = vmatpush2.msra.mxu0 0.0
        %2666 = vmatprep.subr.mxu0 0.0
        %2667 = vmatpush2.msra.mxu0 0.0
        %2668 = vmatprep.subr.mxu0 0.0
        %2669 = vmatpush2.msra.mxu0 0.0
        %2670 = vmatprep.subr.mxu0 0.0
        %2671 = vmatpush2.msra.mxu0 0.0
        %2672 = vmatprep.subr.mxu0 0.0
        %2673 = vmatpush2.msra.mxu0 0.0
        %2674 = vmatprep.subr.mxu0 0.0
        %2675 = vmatpush2.msra.mxu0 0.0
        %2676 = vmatprep.subr.mxu0 0.0
        %2677 = vmatpush2.msra.mxu0 0.0
        %2678 = vmatprep.subr.mxu0 0.0
        %2679 = vmatpush2.msra.mxu0 0.0
        %2680 = vmatprep.subr.mxu0 0.0
        %2681 = vmatpush2.msra.mxu0 0.0
        %2682 = vmatprep.mubr.f32.mxu0 0.0
        %2683 = vmatmul.mubr.f32.gmra.mxu0 %v957
        %v2684 = vpop.f32.mrf.mxu0
        %v2685 = vadd.f32 0.0, %v2684
        %v2686 = vpop.f32.mrf.mxu0
        %2687 = vdwg.mxu0
        %2688 = vmatprep.subr.mxu0 0.0
        %2689 = vmatpush1.msra.mxu0 0.0
        %2690 = vmatprep.subr.mxu0 0.0
        %2691 = vmatpush1.msra.mxu0 0.0
        %2692 = vmatprep.subr.mxu0 0.0
        %2693 = vmatpush1.msra.mxu0 0.0
        %2694 = vmatprep.subr.mxu0 0.0
        %2695 = vmatpush1.msra.mxu0 0.0
        %2696 = vmatprep.subr.mxu0 0.0
        %2697 = vmatpush1.msra.mxu0 0.0
        %2698 = vmatprep.subr.mxu0 0.0
        %2699 = vmatpush1.msra.mxu0 0.0
        %2700 = vmatprep.subr.mxu0 0.0
        %2701 = vmatpush1.msra.mxu0 0.0
        %2702 = vmatprep.subr.mxu0 0.0
        %2703 = vmatpush1.msra.mxu0 0.0
        %2704 = vmatprep.subr.mxu0 0.0
        %2705 = vmatpush1.msra.mxu0 0.0
        %2706 = vmatprep.subr.mxu0 0.0
        %2707 = vmatpush1.msra.mxu0 0.0
        %2708 = vmatprep.subr.mxu0 0.0
        %2709 = vmatpush1.msra.mxu0 0.0
        %2710 = vmatprep.subr.mxu0 0.0
        %2711 = vmatpush1.msra.mxu0 0.0
        %2712 = vmatprep.subr.mxu0 0.0
        %2713 = vmatpush1.msra.mxu0 0.0
        %2714 = vmatprep.subr.mxu0 0.0
        %2715 = vmatpush1.msra.mxu0 0.0
        %2716 = vmatprep.subr.mxu0 0.0
        %2717 = vmatpush1.msra.mxu0 0.0
        %2718 = vmatprep.subr.mxu0 0.0
        %2719 = vmatpush1.msra.mxu0 %v2390
        %2720 = vmatprep.subr.mxu0 0.0
        %2721 = vmatpush2.msra.mxu0 0.0
        %2722 = vmatprep.subr.mxu0 0.0
        %2723 = vmatpush2.msra.mxu0 0.0
        %2724 = vmatprep.subr.mxu0 0.0
        %2725 = vmatpush2.msra.mxu0 0.0
        %2726 = vmatprep.subr.mxu0 0.0
        %2727 = vmatpush2.msra.mxu0 0.0
        %2728 = vmatprep.subr.mxu0 0.0
        %2729 = vmatpush2.msra.mxu0 0.0
        %2730 = vmatprep.subr.mxu0 0.0
        %2731 = vmatpush2.msra.mxu0 0.0
        %2732 = vmatprep.subr.mxu0 0.0
        %2733 = vmatpush2.msra.mxu0 0.0
        %2734 = vmatprep.subr.mxu0 0.0
        %2735 = vmatpush2.msra.mxu0 0.0
        %2736 = vmatprep.subr.mxu0 0.0
        %2737 = vmatpush2.msra.mxu0 0.0
        %2738 = vmatprep.subr.mxu0 0.0
        %2739 = vmatpush2.msra.mxu0 0.0
        %2740 = vmatprep.subr.mxu0 0.0
        %2741 = vmatpush2.msra.mxu0 0.0
        %2742 = vmatprep.subr.mxu0 0.0
        %2743 = vmatpush2.msra.mxu0 0.0
        %2744 = vmatprep.subr.mxu0 0.0
        %2745 = vmatpush2.msra.mxu0 0.0
        %2746 = vmatprep.subr.mxu0 0.0
        %2747 = vmatpush2.msra.mxu0 0.0
        %2748 = vmatprep.subr.mxu0 0.0
        %2749 = vmatpush2.msra.mxu0 0.0
        %2750 = vmatprep.subr.mxu0 0.0
        %2751 = vmatpush2.msra.mxu0 0.0
        %2752 = vmatprep.mubr.f32.mxu0 0.0
        %2753 = vmatmul.mubr.f32.gmra.mxu0 %v1030
        %v2754 = vpop.f32.mrf.mxu0
        %v2755 = vadd.f32 0.0, %v2754
        %v2756 = vpop.f32.mrf.mxu0
        %2757 = vdwg.mxu0
        %2758 = vmatprep.subr.mxu0 0.0
        %2759 = vmatpush1.msra.mxu0 0.0
        %2760 = vmatprep.subr.mxu0 0.0
        %2761 = vmatpush1.msra.mxu0 0.0
        %2762 = vmatprep.subr.mxu0 0.0
        %2763 = vmatpush1.msra.mxu0 0.0
        %2764 = vmatprep.subr.mxu0 0.0
        %2765 = vmatpush1.msra.mxu0 0.0
        %2766 = vmatprep.subr.mxu0 0.0
        %2767 = vmatpush1.msra.mxu0 0.0
        %2768 = vmatprep.subr.mxu0 0.0
        %2769 = vmatpush1.msra.mxu0 0.0
        %2770 = vmatprep.subr.mxu0 0.0
        %2771 = vmatpush1.msra.mxu0 0.0
        %2772 = vmatprep.subr.mxu0 0.0
        %2773 = vmatpush1.msra.mxu0 0.0
        %2774 = vmatprep.subr.mxu0 0.0
        %2775 = vmatpush1.msra.mxu0 0.0
        %2776 = vmatprep.subr.mxu0 0.0
        %2777 = vmatpush1.msra.mxu0 0.0
        %2778 = vmatprep.subr.mxu0 0.0
        %2779 = vmatpush1.msra.mxu0 0.0
        %2780 = vmatprep.subr.mxu0 0.0
        %2781 = vmatpush1.msra.mxu0 0.0
        %2782 = vmatprep.subr.mxu0 0.0
        %2783 = vmatpush1.msra.mxu0 0.0
        %2784 = vmatprep.subr.mxu0 0.0
        %2785 = vmatpush1.msra.mxu0 0.0
        %2786 = vmatprep.subr.mxu0 0.0
        %2787 = vmatpush1.msra.mxu0 0.0
        %2788 = vmatprep.subr.mxu0 0.0
        %2789 = vmatpush1.msra.mxu0 %v2395
        %2790 = vmatprep.subr.mxu0 0.0
        %2791 = vmatpush2.msra.mxu0 0.0
        %2792 = vmatprep.subr.mxu0 0.0
        %2793 = vmatpush2.msra.mxu0 0.0
        %2794 = vmatprep.subr.mxu0 0.0
        %2795 = vmatpush2.msra.mxu0 0.0
        %2796 = vmatprep.subr.mxu0 0.0
        %2797 = vmatpush2.msra.mxu0 0.0
        %2798 = vmatprep.subr.mxu0 0.0
        %2799 = vmatpush2.msra.mxu0 0.0
        %2800 = vmatprep.subr.mxu0 0.0
        %2801 = vmatpush2.msra.mxu0 0.0
        %2802 = vmatprep.subr.mxu0 0.0
        %2803 = vmatpush2.msra.mxu0 0.0
        %2804 = vmatprep.subr.mxu0 0.0
        %2805 = vmatpush2.msra.mxu0 0.0
        %2806 = vmatprep.subr.mxu0 0.0
        %2807 = vmatpush2.msra.mxu0 0.0
        %2808 = vmatprep.subr.mxu0 0.0
        %2809 = vmatpush2.msra.mxu0 0.0
        %2810 = vmatprep.subr.mxu0 0.0
        %2811 = vmatpush2.msra.mxu0 0.0
        %2812 = vmatprep.subr.mxu0 0.0
        %2813 = vmatpush2.msra.mxu0 0.0
        %2814 = vmatprep.subr.mxu0 0.0
        %2815 = vmatpush2.msra.mxu0 0.0
        %2816 = vmatprep.subr.mxu0 0.0
        %2817 = vmatpush2.msra.mxu0 0.0
        %2818 = vmatprep.subr.mxu0 0.0
        %2819 = vmatpush2.msra.mxu0 0.0
        %2820 = vmatprep.subr.mxu0 0.0
        %2821 = vmatpush2.msra.mxu0 0.0
        %2822 = vmatprep.mubr.f32.mxu0 0.0
        %2823 = vmatmul.mubr.f32.gmra.mxu0 %v1103
        %v2824 = vpop.f32.mrf.mxu0
        %v2825 = vadd.f32 0.0, %v2824
        %v2826 = vpop.f32.mrf.mxu0
        %2827 = vdwg.mxu0
        %2828 = vmatprep.subr.mxu0 0.0
        %2829 = vmatpush1.msra.mxu0 0.0
        %2830 = vmatprep.subr.mxu0 0.0
        %2831 = vmatpush1.msra.mxu0 0.0
        %2832 = vmatprep.subr.mxu0 0.0
        %2833 = vmatpush1.msra.mxu0 0.0
        %2834 = vmatprep.subr.mxu0 0.0
        %2835 = vmatpush1.msra.mxu0 0.0
        %2836 = vmatprep.subr.mxu0 0.0
        %2837 = vmatpush1.msra.mxu0 0.0
        %2838 = vmatprep.subr.mxu0 0.0
        %2839 = vmatpush1.msra.mxu0 0.0
        %2840 = vmatprep.subr.mxu0 0.0
        %2841 = vmatpush1.msra.mxu0 0.0
        %2842 = vmatprep.subr.mxu0 0.0
        %2843 = vmatpush1.msra.mxu0 0.0
        %2844 = vmatprep.subr.mxu0 0.0
        %2845 = vmatpush1.msra.mxu0 0.0
        %2846 = vmatprep.subr.mxu0 0.0
        %2847 = vmatpush1.msra.mxu0 0.0
        %2848 = vmatprep.subr.mxu0 0.0
        %2849 = vmatpush1.msra.mxu0 0.0
        %2850 = vmatprep.subr.mxu0 0.0
        %2851 = vmatpush1.msra.mxu0 0.0
        %2852 = vmatprep.subr.mxu0 0.0
        %2853 = vmatpush1.msra.mxu0 0.0
        %2854 = vmatprep.subr.mxu0 0.0
        %2855 = vmatpush1.msra.mxu0 0.0
        %2856 = vmatprep.subr.mxu0 0.0
        %2857 = vmatpush1.msra.mxu0 0.0
        %2858 = vmatprep.subr.mxu0 0.0
        %2859 = vmatpush1.msra.mxu0 %v2400
        %2860 = vmatprep.subr.mxu0 0.0
        %2861 = vmatpush2.msra.mxu0 0.0
        %2862 = vmatprep.subr.mxu0 0.0
        %2863 = vmatpush2.msra.mxu0 0.0
        %2864 = vmatprep.subr.mxu0 0.0
        %2865 = vmatpush2.msra.mxu0 0.0
        %2866 = vmatprep.subr.mxu0 0.0
        %2867 = vmatpush2.msra.mxu0 0.0
        %2868 = vmatprep.subr.mxu0 0.0
        %2869 = vmatpush2.msra.mxu0 0.0
        %2870 = vmatprep.subr.mxu0 0.0
        %2871 = vmatpush2.msra.mxu0 0.0
        %2872 = vmatprep.subr.mxu0 0.0
        %2873 = vmatpush2.msra.mxu0 0.0
        %2874 = vmatprep.subr.mxu0 0.0
        %2875 = vmatpush2.msra.mxu0 0.0
        %2876 = vmatprep.subr.mxu0 0.0
        %2877 = vmatpush2.msra.mxu0 0.0
        %2878 = vmatprep.subr.mxu0 0.0
        %2879 = vmatpush2.msra.mxu0 0.0
        %2880 = vmatprep.subr.mxu0 0.0
        %2881 = vmatpush2.msra.mxu0 0.0
        %2882 = vmatprep.subr.mxu0 0.0
        %2883 = vmatpush2.msra.mxu0 0.0
        %2884 = vmatprep.subr.mxu0 0.0
        %2885 = vmatpush2.msra.mxu0 0.0
        %2886 = vmatprep.subr.mxu0 0.0
        %2887 = vmatpush2.msra.mxu0 0.0
        %2888 = vmatprep.subr.mxu0 0.0
        %2889 = vmatpush2.msra.mxu0 0.0
        %2890 = vmatprep.subr.mxu0 0.0
        %2891 = vmatpush2.msra.mxu0 0.0
        %2892 = vmatprep.mubr.f32.mxu0 0.0
        %2893 = vmatmul.mubr.f32.gmra.mxu0 %v1176
        %v2894 = vpop.f32.mrf.mxu0
        %v2895 = vadd.f32 0.0, %v2894
        %v2896 = vpop.f32.mrf.mxu0
        %2897 = vdwg.mxu0
        %2898 = vmatprep.subr.mxu0 0.0
        %2899 = vmatpush1.msra.mxu0 0.0
        %2900 = vmatprep.subr.mxu0 0.0
        %2901 = vmatpush1.msra.mxu0 0.0
        %2902 = vmatprep.subr.mxu0 0.0
        %2903 = vmatpush1.msra.mxu0 0.0
        %2904 = vmatprep.subr.mxu0 0.0
        %2905 = vmatpush1.msra.mxu0 0.0
        %2906 = vmatprep.subr.mxu0 0.0
        %2907 = vmatpush1.msra.mxu0 0.0
        %2908 = vmatprep.subr.mxu0 0.0
        %2909 = vmatpush1.msra.mxu0 0.0
        %2910 = vmatprep.subr.mxu0 0.0
        %2911 = vmatpush1.msra.mxu0 0.0
        %2912 = vmatprep.subr.mxu0 0.0
        %2913 = vmatpush1.msra.mxu0 0.0
        %2914 = vmatprep.subr.mxu0 0.0
        %2915 = vmatpush1.msra.mxu0 0.0
        %2916 = vmatprep.subr.mxu0 0.0
        %2917 = vmatpush1.msra.mxu0 0.0
        %2918 = vmatprep.subr.mxu0 0.0
        %2919 = vmatpush1.msra.mxu0 0.0
        %2920 = vmatprep.subr.mxu0 0.0
        %2921 = vmatpush1.msra.mxu0 0.0
        %2922 = vmatprep.subr.mxu0 0.0
        %2923 = vmatpush1.msra.mxu0 0.0
        %2924 = vmatprep.subr.mxu0 0.0
        %2925 = vmatpush1.msra.mxu0 0.0
        %2926 = vmatprep.subr.mxu0 0.0
        %2927 = vmatpush1.msra.mxu0 0.0
        %2928 = vmatprep.subr.mxu0 0.0
        %2929 = vmatpush1.msra.mxu0 %v2405
        %2930 = vmatprep.subr.mxu0 0.0
        %2931 = vmatpush2.msra.mxu0 0.0
        %2932 = vmatprep.subr.mxu0 0.0
        %2933 = vmatpush2.msra.mxu0 0.0
        %2934 = vmatprep.subr.mxu0 0.0
        %2935 = vmatpush2.msra.mxu0 0.0
        %2936 = vmatprep.subr.mxu0 0.0
        %2937 = vmatpush2.msra.mxu0 0.0
        %2938 = vmatprep.subr.mxu0 0.0
        %2939 = vmatpush2.msra.mxu0 0.0
        %2940 = vmatprep.subr.mxu0 0.0
        %2941 = vmatpush2.msra.mxu0 0.0
        %2942 = vmatprep.subr.mxu0 0.0
        %2943 = vmatpush2.msra.mxu0 0.0
        %2944 = vmatprep.subr.mxu0 0.0
        %2945 = vmatpush2.msra.mxu0 0.0
        %2946 = vmatprep.subr.mxu0 0.0
        %2947 = vmatpush2.msra.mxu0 0.0
        %2948 = vmatprep.subr.mxu0 0.0
        %2949 = vmatpush2.msra.mxu0 0.0
        %2950 = vmatprep.subr.mxu0 0.0
        %2951 = vmatpush2.msra.mxu0 0.0
        %2952 = vmatprep.subr.mxu0 0.0
        %2953 = vmatpush2.msra.mxu0 0.0
        %2954 = vmatprep.subr.mxu0 0.0
        %2955 = vmatpush2.msra.mxu0 0.0
        %2956 = vmatprep.subr.mxu0 0.0
        %2957 = vmatpush2.msra.mxu0 0.0
        %2958 = vmatprep.subr.mxu0 0.0
        %2959 = vmatpush2.msra.mxu0 0.0
        %2960 = vmatprep.subr.mxu0 0.0
        %2961 = vmatpush2.msra.mxu0 0.0
        %2962 = vmatprep.mubr.f32.mxu0 0.0
        %2963 = vmatmul.mubr.f32.gmra.mxu0 %v1249
        %v2964 = vpop.f32.mrf.mxu0
        %v2965 = vadd.f32 0.0, %v2964
        %v2966 = vpop.f32.mrf.mxu0
        %2967 = vdwg.mxu0
        %v2969 = vsel %vm547, %v2755, 0
        %v2972 = vsel %vm547, %v2825, 0
        %v2975 = vsel %vm547, %v2895, 0
        %v2978 = vsel %vm547, %v2965, 0
        %2980 = vmatprep.subr.mxu0 0.0
        %2981 = vmatpush1.msra.mxu0 0.0
        %2982 = vmatprep.subr.mxu0 0.0
        %2983 = vmatpush1.msra.mxu0 0.0
        %2984 = vmatprep.subr.mxu0 0.0
        %2985 = vmatpush1.msra.mxu0 0.0
        %2986 = vmatprep.subr.mxu0 0.0
        %2987 = vmatpush1.msra.mxu0 0.0
        %2988 = vmatprep.subr.mxu0 0.0
        %2989 = vmatpush1.msra.mxu0 0.0
        %2990 = vmatprep.subr.mxu0 0.0
        %2991 = vmatpush1.msra.mxu0 0.0
        %2992 = vmatprep.subr.mxu0 0.0
        %2993 = vmatpush1.msra.mxu0 0.0
        %2994 = vmatprep.subr.mxu0 0.0
        %2995 = vmatpush1.msra.mxu0 0.0
        %2996 = vmatprep.subr.mxu0 0.0
        %2997 = vmatpush1.msra.mxu0 0.0
        %2998 = vmatprep.subr.mxu0 0.0
        %2999 = vmatpush1.msra.mxu0 0.0
        %3000 = vmatprep.subr.mxu0 0.0
        %3001 = vmatpush1.msra.mxu0 0.0
        %3002 = vmatprep.subr.mxu0 0.0
        %3003 = vmatpush1.msra.mxu0 0.0
        %3004 = vmatprep.subr.mxu0 0.0
        %3005 = vmatpush1.msra.mxu0 0.0
        %3006 = vmatprep.subr.mxu0 0.0
        %3007 = vmatpush1.msra.mxu0 0.0
        %3008 = vmatprep.subr.mxu0 0.0
        %3009 = vmatpush1.msra.mxu0 %v515
        %3010 = vmatprep.subr.mxu0 0.0
        %3011 = vmatpush1.msra.mxu0 %v514
        %3012 = vmatprep.subr.mxu0 0.0
        %3013 = vmatpush2.msra.mxu0 0.0
        %3014 = vmatprep.subr.mxu0 0.0
        %3015 = vmatpush2.msra.mxu0 0.0
        %3016 = vmatprep.subr.mxu0 0.0
        %3017 = vmatpush2.msra.mxu0 0.0
        %3018 = vmatprep.subr.mxu0 0.0
        %3019 = vmatpush2.msra.mxu0 0.0
        %3020 = vmatprep.subr.mxu0 0.0
        %3021 = vmatpush2.msra.mxu0 0.0
        %3022 = vmatprep.subr.mxu0 0.0
        %3023 = vmatpush2.msra.mxu0 0.0
        %3024 = vmatprep.subr.mxu0 0.0
        %3025 = vmatpush2.msra.mxu0 0.0
        %3026 = vmatprep.subr.mxu0 0.0
        %3027 = vmatpush2.msra.mxu0 0.0
        %3028 = vmatprep.subr.mxu0 0.0
        %3029 = vmatpush2.msra.mxu0 0.0
        %3030 = vmatprep.subr.mxu0 0.0
        %3031 = vmatpush2.msra.mxu0 0.0
        %3032 = vmatprep.subr.mxu0 0.0
        %3033 = vmatpush2.msra.mxu0 0.0
        %3034 = vmatprep.subr.mxu0 0.0
        %3035 = vmatpush2.msra.mxu0 0.0
        %3036 = vmatprep.subr.mxu0 0.0
        %3037 = vmatpush2.msra.mxu0 0.0
        %3038 = vmatprep.subr.mxu0 0.0
        %3039 = vmatpush2.msra.mxu0 0.0
        %3040 = vmatprep.subr.mxu0 0.0
        %3041 = vmatpush2.msra.mxu0 0.0
        %3042 = vmatprep.subr.mxu0 0.0
        %3043 = vmatpush2.msra.mxu0 0.0
        %3044 = vmatprep.mubr.f32.mxu0 0.0
        %3045 = vmatmul.mubr.f32.gmra.mxu0 %v2969
        %v3046 = vpop.f32.mrf.mxu0
        %v3047 = vadd.f32 0.0, %v3046
        %v3048 = vpop.f32.mrf.mxu0
        %3049 = vmatprep.mubr.f32.mxu0 0.0
        %3050 = vmatmul.mubr.f32.gmra.mxu0 %v2972
        %v3051 = vpop.f32.mrf.mxu0
        %v3052 = vadd.f32 0.0, %v3051
        %v3053 = vpop.f32.mrf.mxu0
        %3054 = vmatprep.mubr.f32.mxu0 0.0
        %3055 = vmatmul.mubr.f32.gmra.mxu0 %v2975
        %v3056 = vpop.f32.mrf.mxu0
        %v3057 = vadd.f32 0.0, %v3056
        %v3058 = vpop.f32.mrf.mxu0
        %3059 = vmatprep.mubr.f32.mxu0 0.0
        %3060 = vmatmul.mubr.f32.gmra.mxu0 %v2978
        %v3061 = vpop.f32.mrf.mxu0
        %v3062 = vadd.f32 0.0, %v3061
        %v3063 = vpop.f32.mrf.mxu0
        %3064 = vdwg.mxu0
        %v3066 = vsel %vm547, %v2475, 0
        %v3069 = vsel %vm547, %v2545, 0
        %v3072 = vsel %vm547, %v2615, 0
        %v3075 = vsel %vm547, %v2685, 0
        %3077 = vmatprep.subr.mxu0 0.0
        %3078 = vmatpush1.msra.mxu0 0.0
        %3079 = vmatprep.subr.mxu0 0.0
        %3080 = vmatpush1.msra.mxu0 0.0
        %3081 = vmatprep.subr.mxu0 0.0
        %3082 = vmatpush1.msra.mxu0 0.0
        %3083 = vmatprep.subr.mxu0 0.0
        %3084 = vmatpush1.msra.mxu0 0.0
        %3085 = vmatprep.subr.mxu0 0.0
        %3086 = vmatpush1.msra.mxu0 0.0
        %3087 = vmatprep.subr.mxu0 0.0
        %3088 = vmatpush1.msra.mxu0 0.0
        %3089 = vmatprep.subr.mxu0 0.0
        %3090 = vmatpush1.msra.mxu0 0.0
        %3091 = vmatprep.subr.mxu0 0.0
        %3092 = vmatpush1.msra.mxu0 0.0
        %3093 = vmatprep.subr.mxu0 0.0
        %3094 = vmatpush1.msra.mxu0 0.0
        %3095 = vmatprep.subr.mxu0 0.0
        %3096 = vmatpush1.msra.mxu0 0.0
        %3097 = vmatprep.subr.mxu0 0.0
        %3098 = vmatpush1.msra.mxu0 0.0
        %3099 = vmatprep.subr.mxu0 0.0
        %3100 = vmatpush1.msra.mxu0 0.0
        %3101 = vmatprep.subr.mxu0 0.0
        %3102 = vmatpush1.msra.mxu0 0.0
        %3103 = vmatprep.subr.mxu0 0.0
        %3104 = vmatpush1.msra.mxu0 0.0
        %3105 = vmatprep.subr.mxu0 0.0
        %3106 = vmatpush1.msra.mxu0 %v507
        %3107 = vmatprep.subr.mxu0 0.0
        %3108 = vmatpush1.msra.mxu0 %v506
        %3109 = vmatprep.subr.mxu0 0.0
        %3110 = vmatpush2.msra.mxu0 0.0
        %3111 = vmatprep.subr.mxu0 0.0
        %3112 = vmatpush2.msra.mxu0 0.0
        %3113 = vmatprep.subr.mxu0 0.0
        %3114 = vmatpush2.msra.mxu0 0.0
        %3115 = vmatprep.subr.mxu0 0.0
        %3116 = vmatpush2.msra.mxu0 0.0
        %3117 = vmatprep.subr.mxu0 0.0
        %3118 = vmatpush2.msra.mxu0 0.0
        %3119 = vmatprep.subr.mxu0 0.0
        %3120 = vmatpush2.msra.mxu0 0.0
        %3121 = vmatprep.subr.mxu0 0.0
        %3122 = vmatpush2.msra.mxu0 0.0
        %3123 = vmatprep.subr.mxu0 0.0
        %3124 = vmatpush2.msra.mxu0 0.0
        %3125 = vmatprep.subr.mxu0 0.0
        %3126 = vmatpush2.msra.mxu0 0.0
        %3127 = vmatprep.subr.mxu0 0.0
        %3128 = vmatpush2.msra.mxu0 0.0
        %3129 = vmatprep.subr.mxu0 0.0
        %3130 = vmatpush2.msra.mxu0 0.0
        %3131 = vmatprep.subr.mxu0 0.0
        %3132 = vmatpush2.msra.mxu0 0.0
        %3133 = vmatprep.subr.mxu0 0.0
        %3134 = vmatpush2.msra.mxu0 0.0
        %3135 = vmatprep.subr.mxu0 0.0
        %3136 = vmatpush2.msra.mxu0 0.0
        %3137 = vmatprep.subr.mxu0 0.0
        %3138 = vmatpush2.msra.mxu0 0.0
        %3139 = vmatprep.subr.mxu0 0.0
        %3140 = vmatpush2.msra.mxu0 0.0
        %3141 = vmatprep.mubr.f32.mxu0 0.0
        %3142 = vmatmul.mubr.f32.gmra.mxu0 %v3066
        %v3143 = vpop.f32.mrf.mxu0
        %v3144 = vadd.f32 %v3047, %v3143
        %v3145 = vpop.f32.mrf.mxu0
        %3146 = vmatprep.mubr.f32.mxu0 0.0
        %3147 = vmatmul.mubr.f32.gmra.mxu0 %v3069
        %v3148 = vpop.f32.mrf.mxu0
        %v3149 = vadd.f32 %v3052, %v3148
        %v3150 = vpop.f32.mrf.mxu0
        %3151 = vmatprep.mubr.f32.mxu0 0.0
        %3152 = vmatmul.mubr.f32.gmra.mxu0 %v3072
        %v3153 = vpop.f32.mrf.mxu0
        %v3154 = vadd.f32 %v3057, %v3153
        %v3155 = vpop.f32.mrf.mxu0
        %3156 = vmatprep.mubr.f32.mxu0 0.0
        %3157 = vmatmul.mubr.f32.gmra.mxu0 %v3075
        %v3158 = vpop.f32.mrf.mxu0
        %v3159 = vadd.f32 %v3062, %v3158
        %v3160 = vpop.f32.mrf.mxu0
        %3161 = vdwg.mxu0
        %3162 = vmatprep.subr.mxu0 0.0
        %3163 = vmatpush1.msra.mxu0 0.0
        %3164 = vmatprep.subr.mxu0 0.0
        %3165 = vmatpush1.msra.mxu0 0.0
        %3166 = vmatprep.subr.mxu0 0.0
        %3167 = vmatpush1.msra.mxu0 0.0
        %3168 = vmatprep.subr.mxu0 0.0
        %3169 = vmatpush1.msra.mxu0 0.0
        %3170 = vmatprep.subr.mxu0 0.0
        %3171 = vmatpush1.msra.mxu0 0.0
        %3172 = vmatprep.subr.mxu0 0.0
        %3173 = vmatpush1.msra.mxu0 0.0
        %3174 = vmatprep.subr.mxu0 0.0
        %3175 = vmatpush1.msra.mxu0 0.0
        %3176 = vmatprep.subr.mxu0 0.0
        %3177 = vmatpush1.msra.mxu0 0.0
        %3178 = vmatprep.subr.mxu0 0.0
        %3179 = vmatpush1.msra.mxu0 0.0
        %3180 = vmatprep.subr.mxu0 0.0
        %3181 = vmatpush1.msra.mxu0 0.0
        %3182 = vmatprep.subr.mxu0 0.0
        %3183 = vmatpush1.msra.mxu0 0.0
        %3184 = vmatprep.subr.mxu0 0.0
        %3185 = vmatpush1.msra.mxu0 0.0
        %3186 = vmatprep.subr.mxu0 0.0
        %3187 = vmatpush1.msra.mxu0 0.0
        %3188 = vmatprep.subr.mxu0 0.0
        %3189 = vmatpush1.msra.mxu0 0.0
        %3190 = vmatprep.subr.mxu0 0.0
        %3191 = vmatpush1.msra.mxu0 %v523
        %3192 = vmatprep.subr.mxu0 0.0
        %3193 = vmatpush1.msra.mxu0 %v522
        %3194 = vmatprep.subr.mxu0 0.0
        %3195 = vmatpush2.msra.mxu0 0.0
        %3196 = vmatprep.subr.mxu0 0.0
        %3197 = vmatpush2.msra.mxu0 0.0
        %3198 = vmatprep.subr.mxu0 0.0
        %3199 = vmatpush2.msra.mxu0 0.0
        %3200 = vmatprep.subr.mxu0 0.0
        %3201 = vmatpush2.msra.mxu0 0.0
        %3202 = vmatprep.subr.mxu0 0.0
        %3203 = vmatpush2.msra.mxu0 0.0
        %3204 = vmatprep.subr.mxu0 0.0
        %3205 = vmatpush2.msra.mxu0 0.0
        %3206 = vmatprep.subr.mxu0 0.0
        %3207 = vmatpush2.msra.mxu0 0.0
        %3208 = vmatprep.subr.mxu0 0.0
        %3209 = vmatpush2.msra.mxu0 0.0
        %3210 = vmatprep.subr.mxu0 0.0
        %3211 = vmatpush2.msra.mxu0 0.0
        %3212 = vmatprep.subr.mxu0 0.0
        %3213 = vmatpush2.msra.mxu0 0.0
        %3214 = vmatprep.subr.mxu0 0.0
        %3215 = vmatpush2.msra.mxu0 0.0
        %3216 = vmatprep.subr.mxu0 0.0
        %3217 = vmatpush2.msra.mxu0 0.0
        %3218 = vmatprep.subr.mxu0 0.0
        %3219 = vmatpush2.msra.mxu0 0.0
        %3220 = vmatprep.subr.mxu0 0.0
        %3221 = vmatpush2.msra.mxu0 0.0
        %3222 = vmatprep.subr.mxu0 0.0
        %3223 = vmatpush2.msra.mxu0 0.0
        %3224 = vmatprep.subr.mxu0 0.0
        %3225 = vmatpush2.msra.mxu0 0.0
        %3226 = vmatprep.mubr.f32.mxu0 0.0
        %3227 = vmatmul.mubr.f32.gmra.mxu0 %v2227
        %v3228 = vpop.f32.mrf.mxu0
        %v3229 = vadd.f32 0.0, %v3228
        %v3230 = vpop.f32.mrf.mxu0
        %3231 = vmatprep.mubr.f32.mxu0 0.0
        %3232 = vmatmul.mubr.f32.gmra.mxu0 %v2230
        %v3233 = vpop.f32.mrf.mxu0
        %v3234 = vadd.f32 0.0, %v3233
        %v3235 = vpop.f32.mrf.mxu0
        %3236 = vmatprep.mubr.f32.mxu0 0.0
        %3237 = vmatmul.mubr.f32.gmra.mxu0 %v2233
        %v3238 = vpop.f32.mrf.mxu0
        %v3239 = vadd.f32 0.0, %v3238
        %v3240 = vpop.f32.mrf.mxu0
        %3241 = vmatprep.mubr.f32.mxu0 0.0
        %3242 = vmatmul.mubr.f32.gmra.mxu0 %v2236
        %v3243 = vpop.f32.mrf.mxu0
        %v3244 = vadd.f32 0.0, %v3243
        %v3245 = vpop.f32.mrf.mxu0
        %3246 = vdwg.mxu0
        %v3247 = vadd.f32 %v3144, %v3229
        %v3248 = vadd.f32 %v3149, %v3234
        %v3249 = vadd.f32 %v3154, %v3239
        %v3250 = vadd.f32 %v3159, %v3244
        %v3251 = vadd.f32 %v3247, %v1608
        %v3252 = vadd.f32 %v3248, %v1608
        %v3253 = vadd.f32 %v3249, %v1608
        %v3254 = vadd.f32 %v3250, %v1608
        %3255 = vmatprep.subr.mxu0 0.0
        %3256 = vmatpush1.msra.mxu0 0.0
        %3257 = vmatprep.subr.mxu0 0.0
        %3258 = vmatpush1.msra.mxu0 0.0
        %3259 = vmatprep.subr.mxu0 0.0
        %3260 = vmatpush1.msra.mxu0 0.0
        %3261 = vmatprep.subr.mxu0 0.0
        %3262 = vmatpush1.msra.mxu0 0.0
        %3263 = vmatprep.subr.mxu0 0.0
        %3264 = vmatpush1.msra.mxu0 0.0
        %3265 = vmatprep.subr.mxu0 0.0
        %3266 = vmatpush1.msra.mxu0 0.0
        %3267 = vmatprep.subr.mxu0 0.0
        %3268 = vmatpush1.msra.mxu0 0.0
        %3269 = vmatprep.subr.mxu0 0.0
        %3270 = vmatpush1.msra.mxu0 0.0
        %3271 = vmatprep.subr.mxu0 0.0
        %3272 = vmatpush1.msra.mxu0 0.0
        %3273 = vmatprep.subr.mxu0 0.0
        %3274 = vmatpush1.msra.mxu0 0.0
        %3275 = vmatprep.subr.mxu0 0.0
        %3276 = vmatpush1.msra.mxu0 0.0
        %3277 = vmatprep.subr.mxu0 0.0
        %3278 = vmatpush1.msra.mxu0 0.0
        %3279 = vmatprep.subr.mxu0 0.0
        %3280 = vmatpush1.msra.mxu0 0.0
        %3281 = vmatprep.subr.mxu0 0.0
        %3282 = vmatpush1.msra.mxu0 0.0
        %3283 = vmatprep.subr.mxu0 0.0
        %3284 = vmatpush1.msra.mxu0 %v518
        %3285 = vmatprep.subr.mxu0 0.0
        %3286 = vmatpush1.msra.mxu0 %v517
        %3287 = vmatprep.subr.mxu0 0.0
        %3288 = vmatpush2.msra.mxu0 0.0
        %3289 = vmatprep.subr.mxu0 0.0
        %3290 = vmatpush2.msra.mxu0 0.0
        %3291 = vmatprep.subr.mxu0 0.0
        %3292 = vmatpush2.msra.mxu0 0.0
        %3293 = vmatprep.subr.mxu0 0.0
        %3294 = vmatpush2.msra.mxu0 0.0
        %3295 = vmatprep.subr.mxu0 0.0
        %3296 = vmatpush2.msra.mxu0 0.0
        %3297 = vmatprep.subr.mxu0 0.0
        %3298 = vmatpush2.msra.mxu0 0.0
        %3299 = vmatprep.subr.mxu0 0.0
        %3300 = vmatpush2.msra.mxu0 0.0
        %3301 = vmatprep.subr.mxu0 0.0
        %3302 = vmatpush2.msra.mxu0 0.0
        %3303 = vmatprep.subr.mxu0 0.0
        %3304 = vmatpush2.msra.mxu0 0.0
        %3305 = vmatprep.subr.mxu0 0.0
        %3306 = vmatpush2.msra.mxu0 0.0
        %3307 = vmatprep.subr.mxu0 0.0
        %3308 = vmatpush2.msra.mxu0 0.0
        %3309 = vmatprep.subr.mxu0 0.0
        %3310 = vmatpush2.msra.mxu0 0.0
        %3311 = vmatprep.subr.mxu0 0.0
        %3312 = vmatpush2.msra.mxu0 0.0
        %3313 = vmatprep.subr.mxu0 0.0
        %3314 = vmatpush2.msra.mxu0 0.0
        %3315 = vmatprep.subr.mxu0 0.0
        %3316 = vmatpush2.msra.mxu0 0.0
        %3317 = vmatprep.subr.mxu0 0.0
        %3318 = vmatpush2.msra.mxu0 0.0
        %3319 = vmatprep.mubr.f32.mxu0 0.0
        %3320 = vmatmul.mubr.f32.gmra.mxu0 %v2969
        %v3321 = vpop.f32.mrf.mxu0
        %v3322 = vadd.f32 0.0, %v3321
        %v3323 = vpop.f32.mrf.mxu0
        %3324 = vmatprep.mubr.f32.mxu0 0.0
        %3325 = vmatmul.mubr.f32.gmra.mxu0 %v2972
        %v3326 = vpop.f32.mrf.mxu0
        %v3327 = vadd.f32 0.0, %v3326
        %v3328 = vpop.f32.mrf.mxu0
        %3329 = vmatprep.mubr.f32.mxu0 0.0
        %3330 = vmatmul.mubr.f32.gmra.mxu0 %v2975
        %v3331 = vpop.f32.mrf.mxu0
        %v3332 = vadd.f32 0.0, %v3331
        %v3333 = vpop.f32.mrf.mxu0
        %3334 = vmatprep.mubr.f32.mxu0 0.0
        %3335 = vmatmul.mubr.f32.gmra.mxu0 %v2978
        %v3336 = vpop.f32.mrf.mxu0
        %v3337 = vadd.f32 0.0, %v3336
        %v3338 = vpop.f32.mrf.mxu0
        %3339 = vdwg.mxu0
        %3340 = vmatprep.subr.mxu0 0.0
        %3341 = vmatpush1.msra.mxu0 0.0
        %3342 = vmatprep.subr.mxu0 0.0
        %3343 = vmatpush1.msra.mxu0 0.0
        %3344 = vmatprep.subr.mxu0 0.0
        %3345 = vmatpush1.msra.mxu0 0.0
        %3346 = vmatprep.subr.mxu0 0.0
        %3347 = vmatpush1.msra.mxu0 0.0
        %3348 = vmatprep.subr.mxu0 0.0
        %3349 = vmatpush1.msra.mxu0 0.0
        %3350 = vmatprep.subr.mxu0 0.0
        %3351 = vmatpush1.msra.mxu0 0.0
        %3352 = vmatprep.subr.mxu0 0.0
        %3353 = vmatpush1.msra.mxu0 0.0
        %3354 = vmatprep.subr.mxu0 0.0
        %3355 = vmatpush1.msra.mxu0 0.0
        %3356 = vmatprep.subr.mxu0 0.0
        %3357 = vmatpush1.msra.mxu0 0.0
        %3358 = vmatprep.subr.mxu0 0.0
        %3359 = vmatpush1.msra.mxu0 0.0
        %3360 = vmatprep.subr.mxu0 0.0
        %3361 = vmatpush1.msra.mxu0 0.0
        %3362 = vmatprep.subr.mxu0 0.0
        %3363 = vmatpush1.msra.mxu0 0.0
        %3364 = vmatprep.subr.mxu0 0.0
        %3365 = vmatpush1.msra.mxu0 0.0
        %3366 = vmatprep.subr.mxu0 0.0
        %3367 = vmatpush1.msra.mxu0 0.0
        %3368 = vmatprep.subr.mxu0 0.0
        %3369 = vmatpush1.msra.mxu0 %v510
        %3370 = vmatprep.subr.mxu0 0.0
        %3371 = vmatpush1.msra.mxu0 %v509
        %3372 = vmatprep.subr.mxu0 0.0
        %3373 = vmatpush2.msra.mxu0 0.0
        %3374 = vmatprep.subr.mxu0 0.0
        %3375 = vmatpush2.msra.mxu0 0.0
        %3376 = vmatprep.subr.mxu0 0.0
        %3377 = vmatpush2.msra.mxu0 0.0
        %3378 = vmatprep.subr.mxu0 0.0
        %3379 = vmatpush2.msra.mxu0 0.0
        %3380 = vmatprep.subr.mxu0 0.0
        %3381 = vmatpush2.msra.mxu0 0.0
        %3382 = vmatprep.subr.mxu0 0.0
        %3383 = vmatpush2.msra.mxu0 0.0
        %3384 = vmatprep.subr.mxu0 0.0
        %3385 = vmatpush2.msra.mxu0 0.0
        %3386 = vmatprep.subr.mxu0 0.0
        %3387 = vmatpush2.msra.mxu0 0.0
        %3388 = vmatprep.subr.mxu0 0.0
        %3389 = vmatpush2.msra.mxu0 0.0
        %3390 = vmatprep.subr.mxu0 0.0
        %3391 = vmatpush2.msra.mxu0 0.0
        %3392 = vmatprep.subr.mxu0 0.0
        %3393 = vmatpush2.msra.mxu0 0.0
        %3394 = vmatprep.subr.mxu0 0.0
        %3395 = vmatpush2.msra.mxu0 0.0
        %3396 = vmatprep.subr.mxu0 0.0
        %3397 = vmatpush2.msra.mxu0 0.0
        %3398 = vmatprep.subr.mxu0 0.0
        %3399 = vmatpush2.msra.mxu0 0.0
        %3400 = vmatprep.subr.mxu0 0.0
        %3401 = vmatpush2.msra.mxu0 0.0
        %3402 = vmatprep.subr.mxu0 0.0
        %3403 = vmatpush2.msra.mxu0 0.0
        %3404 = vmatprep.mubr.f32.mxu0 0.0
        %3405 = vmatmul.mubr.f32.gmra.mxu0 %v3066
        %v3406 = vpop.f32.mrf.mxu0
        %v3407 = vadd.f32 %v3322, %v3406
        %v3408 = vpop.f32.mrf.mxu0
        %3409 = vmatprep.mubr.f32.mxu0 0.0
        %3410 = vmatmul.mubr.f32.gmra.mxu0 %v3069
        %v3411 = vpop.f32.mrf.mxu0
        %v3412 = vadd.f32 %v3327, %v3411
        %v3413 = vpop.f32.mrf.mxu0
        %3414 = vmatprep.mubr.f32.mxu0 0.0
        %3415 = vmatmul.mubr.f32.gmra.mxu0 %v3072
        %v3416 = vpop.f32.mrf.mxu0
        %v3417 = vadd.f32 %v3332, %v3416
        %v3418 = vpop.f32.mrf.mxu0
        %3419 = vmatprep.mubr.f32.mxu0 0.0
        %3420 = vmatmul.mubr.f32.gmra.mxu0 %v3075
        %v3421 = vpop.f32.mrf.mxu0
        %v3422 = vadd.f32 %v3337, %v3421
        %v3423 = vpop.f32.mrf.mxu0
        %3424 = vdwg.mxu0
        %3425 = vmatprep.subr.mxu0 0.0
        %3426 = vmatpush1.msra.mxu0 0.0
        %3427 = vmatprep.subr.mxu0 0.0
        %3428 = vmatpush1.msra.mxu0 0.0
        %3429 = vmatprep.subr.mxu0 0.0
        %3430 = vmatpush1.msra.mxu0 0.0
        %3431 = vmatprep.subr.mxu0 0.0
        %3432 = vmatpush1.msra.mxu0 0.0
        %3433 = vmatprep.subr.mxu0 0.0
        %3434 = vmatpush1.msra.mxu0 0.0
        %3435 = vmatprep.subr.mxu0 0.0
        %3436 = vmatpush1.msra.mxu0 0.0
        %3437 = vmatprep.subr.mxu0 0.0
        %3438 = vmatpush1.msra.mxu0 0.0
        %3439 = vmatprep.subr.mxu0 0.0
        %3440 = vmatpush1.msra.mxu0 0.0
        %3441 = vmatprep.subr.mxu0 0.0
        %3442 = vmatpush1.msra.mxu0 0.0
        %3443 = vmatprep.subr.mxu0 0.0
        %3444 = vmatpush1.msra.mxu0 0.0
        %3445 = vmatprep.subr.mxu0 0.0
        %3446 = vmatpush1.msra.mxu0 0.0
        %3447 = vmatprep.subr.mxu0 0.0
        %3448 = vmatpush1.msra.mxu0 0.0
        %3449 = vmatprep.subr.mxu0 0.0
        %3450 = vmatpush1.msra.mxu0 0.0
        %3451 = vmatprep.subr.mxu0 0.0
        %3452 = vmatpush1.msra.mxu0 0.0
        %3453 = vmatprep.subr.mxu0 0.0
        %3454 = vmatpush1.msra.mxu0 %v526
        %3455 = vmatprep.subr.mxu0 0.0
        %3456 = vmatpush1.msra.mxu0 %v525
        %3457 = vmatprep.subr.mxu0 0.0
        %3458 = vmatpush2.msra.mxu0 0.0
        %3459 = vmatprep.subr.mxu0 0.0
        %3460 = vmatpush2.msra.mxu0 0.0
        %3461 = vmatprep.subr.mxu0 0.0
        %3462 = vmatpush2.msra.mxu0 0.0
        %3463 = vmatprep.subr.mxu0 0.0
        %3464 = vmatpush2.msra.mxu0 0.0
        %3465 = vmatprep.subr.mxu0 0.0
        %3466 = vmatpush2.msra.mxu0 0.0
        %3467 = vmatprep.subr.mxu0 0.0
        %3468 = vmatpush2.msra.mxu0 0.0
        %3469 = vmatprep.subr.mxu0 0.0
        %3470 = vmatpush2.msra.mxu0 0.0
        %3471 = vmatprep.subr.mxu0 0.0
        %3472 = vmatpush2.msra.mxu0 0.0
        %3473 = vmatprep.subr.mxu0 0.0
        %3474 = vmatpush2.msra.mxu0 0.0
        %3475 = vmatprep.subr.mxu0 0.0
        %3476 = vmatpush2.msra.mxu0 0.0
        %3477 = vmatprep.subr.mxu0 0.0
        %3478 = vmatpush2.msra.mxu0 0.0
        %3479 = vmatprep.subr.mxu0 0.0
        %3480 = vmatpush2.msra.mxu0 0.0
        %3481 = vmatprep.subr.mxu0 0.0
        %3482 = vmatpush2.msra.mxu0 0.0
        %3483 = vmatprep.subr.mxu0 0.0
        %3484 = vmatpush2.msra.mxu0 0.0
        %3485 = vmatprep.subr.mxu0 0.0
        %3486 = vmatpush2.msra.mxu0 0.0
        %3487 = vmatprep.subr.mxu0 0.0
        %3488 = vmatpush2.msra.mxu0 0.0
        %3489 = vmatprep.mubr.f32.mxu0 0.0
        %3490 = vmatmul.mubr.f32.gmra.mxu0 %v2227
        %v3491 = vpop.f32.mrf.mxu0
        %v3492 = vadd.f32 0.0, %v3491
        %v3493 = vpop.f32.mrf.mxu0
        %3494 = vmatprep.mubr.f32.mxu0 0.0
        %3495 = vmatmul.mubr.f32.gmra.mxu0 %v2230
        %v3496 = vpop.f32.mrf.mxu0
        %v3497 = vadd.f32 0.0, %v3496
        %v3498 = vpop.f32.mrf.mxu0
        %3499 = vmatprep.mubr.f32.mxu0 0.0
        %3500 = vmatmul.mubr.f32.gmra.mxu0 %v2233
        %v3501 = vpop.f32.mrf.mxu0
        %v3502 = vadd.f32 0.0, %v3501
        %v3503 = vpop.f32.mrf.mxu0
        %3504 = vmatprep.mubr.f32.mxu0 0.0
        %3505 = vmatmul.mubr.f32.gmra.mxu0 %v2236
        %v3506 = vpop.f32.mrf.mxu0
        %v3507 = vadd.f32 0.0, %v3506
        %v3508 = vpop.f32.mrf.mxu0
        %3509 = vdwg.mxu0
        %v3510 = vadd.f32 %v3407, %v3492
        %v3511 = vadd.f32 %v3412, %v3497
        %v3512 = vadd.f32 %v3417, %v3502
        %v3513 = vadd.f32 %v3422, %v3507
        %v3514 = vadd.f32 %v3510, %v1877
        %v3515 = vadd.f32 %v3511, %v1877
        %v3516 = vadd.f32 %v3512, %v1877
        %v3517 = vadd.f32 %v3513, %v1877
        %3518 = vmatprep.subr.mxu0 0.0
        %3519 = vmatpush1.msra.mxu0 0.0
        %3520 = vmatprep.subr.mxu0 0.0
        %3521 = vmatpush1.msra.mxu0 0.0
        %3522 = vmatprep.subr.mxu0 0.0
        %3523 = vmatpush1.msra.mxu0 0.0
        %3524 = vmatprep.subr.mxu0 0.0
        %3525 = vmatpush1.msra.mxu0 0.0
        %3526 = vmatprep.subr.mxu0 0.0
        %3527 = vmatpush1.msra.mxu0 0.0
        %3528 = vmatprep.subr.mxu0 0.0
        %3529 = vmatpush1.msra.mxu0 0.0
        %3530 = vmatprep.subr.mxu0 0.0
        %3531 = vmatpush1.msra.mxu0 0.0
        %3532 = vmatprep.subr.mxu0 0.0
        %3533 = vmatpush1.msra.mxu0 0.0
        %3534 = vmatprep.subr.mxu0 0.0
        %3535 = vmatpush1.msra.mxu0 0.0
        %3536 = vmatprep.subr.mxu0 0.0
        %3537 = vmatpush1.msra.mxu0 0.0
        %3538 = vmatprep.subr.mxu0 0.0
        %3539 = vmatpush1.msra.mxu0 0.0
        %3540 = vmatprep.subr.mxu0 0.0
        %3541 = vmatpush1.msra.mxu0 0.0
        %3542 = vmatprep.subr.mxu0 0.0
        %3543 = vmatpush1.msra.mxu0 0.0
        %3544 = vmatprep.subr.mxu0 0.0
        %3545 = vmatpush1.msra.mxu0 0.0
        %3546 = vmatprep.subr.mxu0 0.0
        %3547 = vmatpush1.msra.mxu0 %v521
        %3548 = vmatprep.subr.mxu0 0.0
        %3549 = vmatpush1.msra.mxu0 %v520
        %3550 = vmatprep.subr.mxu0 0.0
        %3551 = vmatpush2.msra.mxu0 0.0
        %3552 = vmatprep.subr.mxu0 0.0
        %3553 = vmatpush2.msra.mxu0 0.0
        %3554 = vmatprep.subr.mxu0 0.0
        %3555 = vmatpush2.msra.mxu0 0.0
        %3556 = vmatprep.subr.mxu0 0.0
        %3557 = vmatpush2.msra.mxu0 0.0
        %3558 = vmatprep.subr.mxu0 0.0
        %3559 = vmatpush2.msra.mxu0 0.0
        %3560 = vmatprep.subr.mxu0 0.0
        %3561 = vmatpush2.msra.mxu0 0.0
        %3562 = vmatprep.subr.mxu0 0.0
        %3563 = vmatpush2.msra.mxu0 0.0
        %3564 = vmatprep.subr.mxu0 0.0
        %3565 = vmatpush2.msra.mxu0 0.0
        %3566 = vmatprep.subr.mxu0 0.0
        %3567 = vmatpush2.msra.mxu0 0.0
        %3568 = vmatprep.subr.mxu0 0.0
        %3569 = vmatpush2.msra.mxu0 0.0
        %3570 = vmatprep.subr.mxu0 0.0
        %3571 = vmatpush2.msra.mxu0 0.0
        %3572 = vmatprep.subr.mxu0 0.0
        %3573 = vmatpush2.msra.mxu0 0.0
        %3574 = vmatprep.subr.mxu0 0.0
        %3575 = vmatpush2.msra.mxu0 0.0
        %3576 = vmatprep.subr.mxu0 0.0
        %3577 = vmatpush2.msra.mxu0 0.0
        %3578 = vmatprep.subr.mxu0 0.0
        %3579 = vmatpush2.msra.mxu0 0.0
        %3580 = vmatprep.subr.mxu0 0.0
        %3581 = vmatpush2.msra.mxu0 0.0
        %3582 = vmatprep.mubr.f32.mxu0 0.0
        %3583 = vmatmul.mubr.f32.gmra.mxu0 %v2969
        %v3584 = vpop.f32.mrf.mxu0
        %v3585 = vadd.f32 0.0, %v3584
        %v3586 = vpop.f32.mrf.mxu0
        %3587 = vmatprep.mubr.f32.mxu0 0.0
        %3588 = vmatmul.mubr.f32.gmra.mxu0 %v2972
        %v3589 = vpop.f32.mrf.mxu0
        %v3590 = vadd.f32 0.0, %v3589
        %v3591 = vpop.f32.mrf.mxu0
        %3592 = vmatprep.mubr.f32.mxu0 0.0
        %3593 = vmatmul.mubr.f32.gmra.mxu0 %v2975
        %v3594 = vpop.f32.mrf.mxu0
        %v3595 = vadd.f32 0.0, %v3594
        %v3596 = vpop.f32.mrf.mxu0
        %3597 = vmatprep.mubr.f32.mxu0 0.0
        %3598 = vmatmul.mubr.f32.gmra.mxu0 %v2978
        %v3599 = vpop.f32.mrf.mxu0
        %v3600 = vadd.f32 0.0, %v3599
        %v3601 = vpop.f32.mrf.mxu0
        %3602 = vdwg.mxu0
        %3603 = vmatprep.subr.mxu0 0.0
        %3604 = vmatpush1.msra.mxu0 0.0
        %3605 = vmatprep.subr.mxu0 0.0
        %3606 = vmatpush1.msra.mxu0 0.0
        %3607 = vmatprep.subr.mxu0 0.0
        %3608 = vmatpush1.msra.mxu0 0.0
        %3609 = vmatprep.subr.mxu0 0.0
        %3610 = vmatpush1.msra.mxu0 0.0
        %3611 = vmatprep.subr.mxu0 0.0
        %3612 = vmatpush1.msra.mxu0 0.0
        %3613 = vmatprep.subr.mxu0 0.0
        %3614 = vmatpush1.msra.mxu0 0.0
        %3615 = vmatprep.subr.mxu0 0.0
        %3616 = vmatpush1.msra.mxu0 0.0
        %3617 = vmatprep.subr.mxu0 0.0
        %3618 = vmatpush1.msra.mxu0 0.0
        %3619 = vmatprep.subr.mxu0 0.0
        %3620 = vmatpush1.msra.mxu0 0.0
        %3621 = vmatprep.subr.mxu0 0.0
        %3622 = vmatpush1.msra.mxu0 0.0
        %3623 = vmatprep.subr.mxu0 0.0
        %3624 = vmatpush1.msra.mxu0 0.0
        %3625 = vmatprep.subr.mxu0 0.0
        %3626 = vmatpush1.msra.mxu0 0.0
        %3627 = vmatprep.subr.mxu0 0.0
        %3628 = vmatpush1.msra.mxu0 0.0
        %3629 = vmatprep.subr.mxu0 0.0
        %3630 = vmatpush1.msra.mxu0 0.0
        %3631 = vmatprep.subr.mxu0 0.0
        %3632 = vmatpush1.msra.mxu0 %v513
        %3633 = vmatprep.subr.mxu0 0.0
        %3634 = vmatpush1.msra.mxu0 %v512
        %3635 = vmatprep.subr.mxu0 0.0
        %3636 = vmatpush2.msra.mxu0 0.0
        %3637 = vmatprep.subr.mxu0 0.0
        %3638 = vmatpush2.msra.mxu0 0.0
        %3639 = vmatprep.subr.mxu0 0.0
        %3640 = vmatpush2.msra.mxu0 0.0
        %3641 = vmatprep.subr.mxu0 0.0
        %3642 = vmatpush2.msra.mxu0 0.0
        %3643 = vmatprep.subr.mxu0 0.0
        %3644 = vmatpush2.msra.mxu0 0.0
        %3645 = vmatprep.subr.mxu0 0.0
        %3646 = vmatpush2.msra.mxu0 0.0
        %3647 = vmatprep.subr.mxu0 0.0
        %3648 = vmatpush2.msra.mxu0 0.0
        %3649 = vmatprep.subr.mxu0 0.0
        %3650 = vmatpush2.msra.mxu0 0.0
        %3651 = vmatprep.subr.mxu0 0.0
        %3652 = vmatpush2.msra.mxu0 0.0
        %3653 = vmatprep.subr.mxu0 0.0
        %3654 = vmatpush2.msra.mxu0 0.0
        %3655 = vmatprep.subr.mxu0 0.0
        %3656 = vmatpush2.msra.mxu0 0.0
        %3657 = vmatprep.subr.mxu0 0.0
        %3658 = vmatpush2.msra.mxu0 0.0
        %3659 = vmatprep.subr.mxu0 0.0
        %3660 = vmatpush2.msra.mxu0 0.0
        %3661 = vmatprep.subr.mxu0 0.0
        %3662 = vmatpush2.msra.mxu0 0.0
        %3663 = vmatprep.subr.mxu0 0.0
        %3664 = vmatpush2.msra.mxu0 0.0
        %3665 = vmatprep.subr.mxu0 0.0
        %3666 = vmatpush2.msra.mxu0 0.0
        %3667 = vmatprep.mubr.f32.mxu0 0.0
        %3668 = vmatmul.mubr.f32.gmra.mxu0 %v3066
        %v3669 = vpop.f32.mrf.mxu0
        %v3670 = vadd.f32 %v3585, %v3669
        %v3671 = vpop.f32.mrf.mxu0
        %3672 = vmatprep.mubr.f32.mxu0 0.0
        %3673 = vmatmul.mubr.f32.gmra.mxu0 %v3069
        %v3674 = vpop.f32.mrf.mxu0
        %v3675 = vadd.f32 %v3590, %v3674
        %v3676 = vpop.f32.mrf.mxu0
        %3677 = vmatprep.mubr.f32.mxu0 0.0
        %3678 = vmatmul.mubr.f32.gmra.mxu0 %v3072
        %v3679 = vpop.f32.mrf.mxu0
        %v3680 = vadd.f32 %v3595, %v3679
        %v3681 = vpop.f32.mrf.mxu0
        %3682 = vmatprep.mubr.f32.mxu0 0.0
        %3683 = vmatmul.mubr.f32.gmra.mxu0 %v3075
        %v3684 = vpop.f32.mrf.mxu0
        %v3685 = vadd.f32 %v3600, %v3684
        %v3686 = vpop.f32.mrf.mxu0
        %3687 = vdwg.mxu0
        %v3688 = vadd.f32 %v3670, %v2057
        %v3689 = vadd.f32 %v3675, %v2057
        %v3690 = vadd.f32 %v3680, %v2057
        %v3691 = vadd.f32 %v3685, %v2057
        %3692 = vmatprep.subr.mxu0 0.0
        %3693 = vmatpush1.msra.mxu0 0.0
        %3694 = vmatprep.subr.mxu0 0.0
        %3695 = vmatpush1.msra.mxu0 0.0
        %3696 = vmatprep.subr.mxu0 0.0
        %3697 = vmatpush1.msra.mxu0 0.0
        %3698 = vmatprep.subr.mxu0 0.0
        %3699 = vmatpush1.msra.mxu0 0.0
        %3700 = vmatprep.subr.mxu0 0.0
        %3701 = vmatpush1.msra.mxu0 0.0
        %3702 = vmatprep.subr.mxu0 0.0
        %3703 = vmatpush1.msra.mxu0 0.0
        %3704 = vmatprep.subr.mxu0 0.0
        %3705 = vmatpush1.msra.mxu0 0.0
        %3706 = vmatprep.subr.mxu0 0.0
        %3707 = vmatpush1.msra.mxu0 0.0
        %3708 = vmatprep.subr.mxu0 0.0
        %3709 = vmatpush1.msra.mxu0 0.0
        %3710 = vmatprep.subr.mxu0 0.0
        %3711 = vmatpush1.msra.mxu0 0.0
        %3712 = vmatprep.subr.mxu0 0.0
        %3713 = vmatpush1.msra.mxu0 0.0
        %3714 = vmatprep.subr.mxu0 0.0
        %3715 = vmatpush1.msra.mxu0 0.0
        %3716 = vmatprep.subr.mxu0 0.0
        %3717 = vmatpush1.msra.mxu0 0.0
        %3718 = vmatprep.subr.mxu0 0.0
        %3719 = vmatpush1.msra.mxu0 0.0
        %3720 = vmatprep.subr.mxu0 0.0
        %3721 = vmatpush1.msra.mxu0 %v529
        %3722 = vmatprep.subr.mxu0 0.0
        %3723 = vmatpush1.msra.mxu0 %v528
        %3724 = vmatprep.subr.mxu0 0.0
        %3725 = vmatpush2.msra.mxu0 0.0
        %3726 = vmatprep.subr.mxu0 0.0
        %3727 = vmatpush2.msra.mxu0 0.0
        %3728 = vmatprep.subr.mxu0 0.0
        %3729 = vmatpush2.msra.mxu0 0.0
        %3730 = vmatprep.subr.mxu0 0.0
        %3731 = vmatpush2.msra.mxu0 0.0
        %3732 = vmatprep.subr.mxu0 0.0
        %3733 = vmatpush2.msra.mxu0 0.0
        %3734 = vmatprep.subr.mxu0 0.0
        %3735 = vmatpush2.msra.mxu0 0.0
        %3736 = vmatprep.subr.mxu0 0.0
        %3737 = vmatpush2.msra.mxu0 0.0
        %3738 = vmatprep.subr.mxu0 0.0
        %3739 = vmatpush2.msra.mxu0 0.0
        %3740 = vmatprep.subr.mxu0 0.0
        %3741 = vmatpush2.msra.mxu0 0.0
        %3742 = vmatprep.subr.mxu0 0.0
        %3743 = vmatpush2.msra.mxu0 0.0
        %3744 = vmatprep.subr.mxu0 0.0
        %3745 = vmatpush2.msra.mxu0 0.0
        %3746 = vmatprep.subr.mxu0 0.0
        %3747 = vmatpush2.msra.mxu0 0.0
        %3748 = vmatprep.subr.mxu0 0.0
        %3749 = vmatpush2.msra.mxu0 0.0
        %3750 = vmatprep.subr.mxu0 0.0
        %3751 = vmatpush2.msra.mxu0 0.0
        %3752 = vmatprep.subr.mxu0 0.0
        %3753 = vmatpush2.msra.mxu0 0.0
        %3754 = vmatprep.subr.mxu0 0.0
        %3755 = vmatpush2.msra.mxu0 0.0
        %3756 = vmatprep.mubr.f32.mxu0 0.0
        %3757 = vmatmul.mubr.f32.gmra.mxu0 %v2227
        %v3758 = vpop.f32.mrf.mxu0
        %v3759 = vadd.f32 %v2067, %v3758
        %v3760 = vpop.f32.mrf.mxu0
        %3761 = vmatprep.mubr.f32.mxu0 0.0
        %3762 = vmatmul.mubr.f32.gmra.mxu0 %v2230
        %v3763 = vpop.f32.mrf.mxu0
        %v3764 = vadd.f32 %v2067, %v3763
        %v3765 = vpop.f32.mrf.mxu0
        %3766 = vmatprep.mubr.f32.mxu0 0.0
        %3767 = vmatmul.mubr.f32.gmra.mxu0 %v2233
        %v3768 = vpop.f32.mrf.mxu0
        %v3769 = vadd.f32 %v2067, %v3768
        %v3770 = vpop.f32.mrf.mxu0
        %3771 = vmatprep.mubr.f32.mxu0 0.0
        %3772 = vmatmul.mubr.f32.gmra.mxu0 %v2236
        %v3773 = vpop.f32.mrf.mxu0
        %v3774 = vadd.f32 %v2067, %v3773
        %v3775 = vpop.f32.mrf.mxu0
        %3776 = vdwg.mxu0
        %v3777 = vxor.u32 %v3251, 2147483648
        %v3778 = vxor.u32 %v3252, 2147483648
        %v3779 = vxor.u32 %v3253, 2147483648
        %v3780 = vxor.u32 %v3254, 2147483648
        %v3781 = vmul.f32 %v3777, 1.442695
        %v3782 = vpow.pop %v3781
        %v3783 = vmul.f32 %v3778, 1.442695
        %v3784 = vpow.pop %v3783
        %v3785 = vmul.f32 %v3779, 1.442695
        %v3786 = vpow.pop %v3785
        %v3787 = vmul.f32 %v3780, 1.442695
        %v3788 = vpow.pop %v3787
        %v3789 = vadd.f32 %v3782, 1.0
        %v3790 = vadd.f32 %v3784, 1.0
        %v3791 = vadd.f32 %v3786, 1.0
        %v3792 = vadd.f32 %v3788, 1.0
        %v3793 = vrcp.pop %v3789
        %v3794 = vmul.f32 1.0, %v3793
        %v3795 = vrcp.pop %v3790
        %v3796 = vmul.f32 1.0, %v3795
        %v3797 = vrcp.pop %v3791
        %v3798 = vmul.f32 1.0, %v3797
        %v3799 = vrcp.pop %v3792
        %v3800 = vmul.f32 1.0, %v3799
        %v3801 = vxor.u32 %v3514, 2147483648
        %v3802 = vxor.u32 %v3515, 2147483648
        %v3803 = vxor.u32 %v3516, 2147483648
        %v3804 = vxor.u32 %v3517, 2147483648
        %v3805 = vmul.f32 %v3801, 1.442695
        %v3806 = vpow.pop %v3805
        %v3807 = vmul.f32 %v3802, 1.442695
        %v3808 = vpow.pop %v3807
        %v3809 = vmul.f32 %v3803, 1.442695
        %v3810 = vpow.pop %v3809
        %v3811 = vmul.f32 %v3804, 1.442695
        %v3812 = vpow.pop %v3811
        %v3813 = vadd.f32 %v3806, 1.0
        %v3814 = vadd.f32 %v3808, 1.0
        %v3815 = vadd.f32 %v3810, 1.0
        %v3816 = vadd.f32 %v3812, 1.0
        %v3817 = vrcp.pop %v3813
        %v3818 = vmul.f32 1.0, %v3817
        %v3819 = vrcp.pop %v3814
        %v3820 = vmul.f32 1.0, %v3819
        %v3821 = vrcp.pop %v3815
        %v3822 = vmul.f32 1.0, %v3821
        %v3823 = vrcp.pop %v3816
        %v3824 = vmul.f32 1.0, %v3823
        %v3825 = vmul.f32 %v3794, %v3759
        %v3826 = vmul.f32 %v3796, %v3764
        %v3827 = vmul.f32 %v3798, %v3769
        %v3828 = vmul.f32 %v3800, %v3774
        %v3829 = vadd.f32 %v3688, %v3825
        %v3830 = vadd.f32 %v3689, %v3826
        %v3831 = vadd.f32 %v3690, %v3827
        %v3832 = vadd.f32 %v3691, %v3828
        %v3833 = vtanh.pop %v3829
        %v3834 = vtanh.pop %v3830
        %v3835 = vtanh.pop %v3831
        %v3836 = vtanh.pop %v3832
        %v3837 = vsub.f32 %v2222, %v3833
        %v3838 = vsub.f32 %v2223, %v3834
        %v3839 = vsub.f32 %v2224, %v3835
        %v3840 = vsub.f32 %v2225, %v3836
        %v3841 = vmul.f32 %v3818, %v3837
        %v3842 = vmul.f32 %v3820, %v3838
        %v3843 = vmul.f32 %v3822, %v3839
        %v3844 = vmul.f32 %v3824, %v3840
        %v3845 = vadd.f32 %v3833, %v3841
        %v3846 = vadd.f32 %v3834, %v3842
        %v3847 = vadd.f32 %v3835, %v3843
        %v3848 = vadd.f32 %v3836, %v3844
        %3849 = vst.msk [vmem:[%s485] sm:$0xff] %vm547, %v3845
        %3850 = vst.msk [vmem:[%s485 + $0x8] sm:$0xff] %vm547, %v3846
        %3851 = vst.msk [vmem:[%s485 + $0x10] sm:$0xff] %vm547, %v3847
        %3852 = vst.msk [vmem:[%s485 + $0x18] sm:$0xff] %vm547, %v3848
        %s3853 = sand.u32 %s243, 1
        %s3854 = scalar_lea.sflag [#allocation4], %s3853
        %s3855 = sand.u32 %s243, 1
        %s3856 = smul.addr %s3855, 32
        %s3857 = scalar_lea.vmem [#allocation14], %s3856
        // Predicated region
        $region85: #{tpu_custom_call.1} parent=55 // pred_check
          %p3858 = pneg %p253
        $region86: #{tpu_custom_call.1} parent=55 // pred_check_branch
          %3860 = sbr.rel (%p3858) target = $region88
        $region87: #{tpu_custom_call.1} parent=55 // pred_region
          %s3861 = smul.u32 4, %s31
          %s3863 = ssub.s32 512, 512
          %3864 = vsyncadd %s3854, %s3863
          %s3865 = smul.addr %s3861, 128
          %s3866 = scalar_lea.hbm %s9, %s3865
          %s3867 = sshll.u32 %s3857, 4
          %s3868 = int_to_ptr.vmem [resolvable:$true] %s3867
          %3873 = dma.vmem_to_hbm [thread:$0]  %s3868, 512, %s3866, %s3854, 128, 128, 8
        $region88: #{tpu_custom_call.1} parent=55 // pred_fallthru
          _
      $region56: #{tpu_custom_call.1} parent=5 // pred_fallthru
        _
      %p3874 = scmp.le.s32.totalorder 2, %s26
      // Predicated region
      $region89: #{tpu_custom_call.1} parent=5 // pred_check
        %p3875 = pneg %p3874
      $region90: #{tpu_custom_call.1} parent=5 // pred_check_branch
        %3877 = sbr.rel (%p3875) target = $region92
      $region91: #{tpu_custom_call.1} parent=5 // pred_region
        %s3878 = ssub.s32 %s26, 2
        // Predicated region
        $region93: #{tpu_custom_call.1} parent=91 // pred_check
          %p3879 = pneg %p259
        $region94: #{tpu_custom_call.1} parent=91 // pred_check_branch
          %3881 = sbr.rel (%p3879) target = $region96
        $region95: #{tpu_custom_call.1} parent=91 // pred_region
          %s3882 = sand.u32 %s244, 1
          %s3883 = scalar_lea.sflag [#allocation4], %s3882
          %s3884 = sand.u32 %s244, 1
          %s3885 = smul.addr %s3884, 32
          %s3886 = scalar_lea.vmem [#allocation14], %s3885
          %3887 = dma.done %s3883, 512
        $region96: #{tpu_custom_call.1} parent=91 // pred_fallthru
          _
      $region92: #{tpu_custom_call.1} parent=5 // pred_fallthru
        _
    $region6: #{tpu_custom_call.1} parent=1 // loop_footer
      %s30 = sadd.s32 1, %s26
    $region7: #{tpu_custom_call.1} parent=1 // loop_footer_branch
      %25 = sbr.rel target = $region3
    $region8: #{tpu_custom_call.1} parent=1 // loop_exit
      _
    %3888 = vsyncpa [#allocation3], 1
    %s3889 = scalar_lea.sflag [#allocation3], 1
    %3890 = vsyncpa %s3889, 1
    %3891 = vsyncpa [#allocation6], 1
    %s3892 = scalar_lea.sflag [#allocation6], 1
    %3893 = vsyncpa %s3892, 1
    %3894 = vsyncpa [#allocation9], 1
    %3895 = vsyncpa [#allocation12], 1
    %3896 = vsyncpa [#allocation4], 1
    %s3897 = scalar_lea.sflag [#allocation4], 1
    %3898 = vsyncpa %s3897, 1

</llo_original>
